<compile_context>
chip_gen: v7x
topology: tpu7x:2x2x1
jax: 0.10.0
libtpu: 0.0.40
codegen_flags: <defaults>
</compile_context>

<pallas_src>
import numpy as np
import jax
import jax.numpy as jnp
from jax.experimental import pallas as pl
from jax.experimental.pallas import tpu as pltpu

# ----------------------------- configuration (SMALL) -----------------------------
NBR_CLASSES = 20                      # len(class list) in DSC.__init__
SIZES = (16, 16, 8)                   # (X, Y, Z) small stand-in for (256, 256, 32)
N_HEIGHT = SIZES[-1]
LIMS = [[0.0, 51.2], [-25.6, 25.6], [-2.0, 4.4]]
GRID_METERS = [(LIMS[0][1] - LIMS[0][0]) / SIZES[0],
               (LIMS[1][1] - LIMS[1][0]) / SIZES[1],
               (LIMS[2][1] - LIMS[2][0]) / SIZES[2]]
C_VW = 16                             # voxel-wise feature channels (stand-in for 64)
C_SS = 16                             # semantic-branch mss_bev_dense channels
C_SC = 16                             # completion-branch mss_bev_dense channels
C_IMG = 8                             # image_voxel BEV channels

CLASS_WEIGHTS = np.array(
    [0.446, 0.603, 0.852, 0.856, 0.747, 0.734, 0.801, 0.796, 0.818, 0.557,
     0.653, 0.568, 0.683, 0.56, 0.603, 0.53, 0.688, 0.574, 0.716, 0.786],
    dtype=np.float32)

IGNORE_INDEX = 255
VMEM_LIMIT_BYTES = 32 * 1024 * 1024   # safe on v5e (raises 16 MiB default) and v7x (<64 MiB)


def _round_up(x, m):
    return ((x + m - 1) // m) * m


# ----------------- Pallas kernel: fused (ss conv + sc conv + BEV head) -----------------
def fused_bev_head(occ_nhwc, bev_nhwc, img_nhwc, params, *, tile_m=2048):
    """Fused channels-last pass over BEV rows.

    Per row tile (tile_m, .): loads occupancy / bev_dense / image_voxel once,
    computes the semantic-head and completion-head 1x1 convs in registers,
    accumulates their aux-loss |.| sums, and writes only the lane-dense BEV-head
    output (Cout = nbr_classes * n_height) to HBM.  bf16 MXU operands, f32 acc.
    """
    B, H, W, Z = occ_nhwc.shape
    Cvw = bev_nhwc.shape[-1]
    Cimg = img_nhwc.shape[-1]
    Css = params['ss_w'].shape[1]
    Csc = params['sc_w'].shape[1]
    Cout = params['head_w'].shape[1]
    M = B * H * W

    occ = occ_nhwc.reshape(M, Z).astype(jnp.float32)
    bev = bev_nhwc.reshape(M, Cvw).astype(jnp.float32)
    img = img_nhwc.reshape(M, Cimg).astype(jnp.float32)

    tm = min(tile_m, _round_up(M, 8))
    num_tiles = pl.cdiv(M, tm)

    # bf16 weights for the MXU (f32 accumulation via preferred_element_type).
    ss_w = params['ss_w'].astype(jnp.bfloat16)
    sc_w = params['sc_w'].astype(jnp.bfloat16)
    hw = params['head_w'].astype(jnp.bfloat16)
    o0, o1, o2, o3 = Z, Z + Cvw, Z + Cvw + Css, Z + Cvw + Css + Csc
    w_occ, w_bev, w_ss, w_sc, w_img = hw[:o0], hw[o0:o1], hw[o1:o2], hw[o2:o3], hw[o3:]
    ss_b = params['ss_b'].reshape(1, Css).astype(jnp.float32)
    sc_b = params['sc_b'].reshape(1, Csc).astype(jnp.float32)
    head_b = params['head_b'].reshape(1, Cout).astype(jnp.float32)

    def kernel(occ_ref, bev_ref, img_ref,
               ssw_ref, ssb_ref, scw_ref, scb_ref,
               wocc_ref, wbev_ref, wss_ref, wsc_ref, wimg_ref, hb_ref,
               out_ref, ss_sum_ref, sc_sum_ref):
        i = pl.program_id(0)

        @pl.when(i == 0)
        def _():
            ss_sum_ref[...] = jnp.zeros_like(ss_sum_ref)
            sc_sum_ref[...] = jnp.zeros_like(sc_sum_ref)

        occ_t = occ_ref[...].astype(jnp.bfloat16)
        bev_t = bev_ref[...].astype(jnp.bfloat16)
        img_t = img_ref[...].astype(jnp.bfloat16)

        # semantic / completion 1x1 conv heads (never written to HBM)
        ss = jnp.dot(bev_t, ssw_ref[...], preferred_element_type=jnp.float32) + ssb_ref[...]
        sc = jnp.dot(occ_t, scw_ref[...], preferred_element_type=jnp.float32) + scb_ref[...]

        # BEV head: concat([occ, bev, ss, sc, img]) @ head_w  expressed as sum of dots
        head = (jnp.dot(occ_t, wocc_ref[...], preferred_element_type=jnp.float32)
                + jnp.dot(bev_t, wbev_ref[...], preferred_element_type=jnp.float32)
                + jnp.dot(ss.astype(jnp.bfloat16), wss_ref[...], preferred_element_type=jnp.float32)
                + jnp.dot(sc.astype(jnp.bfloat16), wsc_ref[...], preferred_element_type=jnp.float32)
                + jnp.dot(img_t, wimg_ref[...], preferred_element_type=jnp.float32)
                + hb_ref[...])
        out_ref[...] = head.astype(out_ref.dtype)

        # aux-loss accumulators; mask rows past M (the tail tile reads undefined data)
        rows = i * tm + jax.lax.broadcasted_iota(jnp.int32, (tm, 1), 0)
        row_ok = rows < M
        ss_sum_ref[...] += jnp.sum(
            jnp.where(row_ok, jnp.sum(jnp.abs(ss), axis=-1, keepdims=True), 0.0))
        sc_sum_ref[...] += jnp.sum(
            jnp.where(row_ok, jnp.sum(jnp.abs(sc), axis=-1, keepdims=True), 0.0))

    head_flat, ss_abs, sc_abs = pl.pallas_call(
        kernel,
        out_shape=(jax.ShapeDtypeStruct((M, Cout), jnp.float32),
                   jax.ShapeDtypeStruct((1, 1), jnp.float32),
                   jax.ShapeDtypeStruct((1, 1), jnp.float32)),
        grid_spec=pltpu.PrefetchScalarGridSpec(
            num_scalar_prefetch=0,
            grid=(num_tiles,),
            in_specs=[pl.BlockSpec((tm, Z), lambda i: (i, 0)),
                      pl.BlockSpec((tm, Cvw), lambda i: (i, 0)),
                      pl.BlockSpec((tm, Cimg), lambda i: (i, 0)),
                      pl.BlockSpec((Cvw, Css), lambda i: (0, 0)),
                      pl.BlockSpec((1, Css), lambda i: (0, 0)),
                      pl.BlockSpec((Z, Csc), lambda i: (0, 0)),
                      pl.BlockSpec((1, Csc), lambda i: (0, 0)),
                      pl.BlockSpec((Z, Cout), lambda i: (0, 0)),
                      pl.BlockSpec((Cvw, Cout), lambda i: (0, 0)),
                      pl.BlockSpec((Css, Cout), lambda i: (0, 0)),
                      pl.BlockSpec((Csc, Cout), lambda i: (0, 0)),
                      pl.BlockSpec((Cimg, Cout), lambda i: (0, 0)),
                      pl.BlockSpec((1, Cout), lambda i: (0, 0))],
            out_specs=(pl.BlockSpec((tm, Cout), lambda i: (i, 0)),
                       pl.BlockSpec((1, 1), lambda i: (0, 0)),
                       pl.BlockSpec((1, 1), lambda i: (0, 0)))),
        compiler_params=pltpu.CompilerParams(
            dimension_semantics=("arbitrary",),      # accumulators force sequential grid
            vmem_limit_bytes=VMEM_LIMIT_BYTES),
    )(occ, bev, img, ss_w, ss_b, sc_w, sc_b, w_occ, w_bev, w_ss, w_sc, w_img, head_b)

    return head_flat.reshape(B, H, W, Cout), ss_abs[0, 0], sc_abs[0, 0]


# --------------------- Pallas kernel: weighted cross-entropy ---------------------
def weighted_cross_entropy(logits, labels, class_weights, *, tile_n=8192):
    """F.cross_entropy(scores, labels, weight=cw, ignore_index=255) semantics.

    logits: (N, C) f32 rows (classes on the lane axis); labels: (N,) int32.
    No host-side padding: tail rows are masked in-kernel.
    """
    N, C = logits.shape
    labels2 = labels.reshape(N, 1).astype(jnp.int32)
    logits = logits.astype(jnp.float32)
    tn = min(tile_n, _round_up(N, 8))
    num_tiles = pl.cdiv(N, tn)

    def kernel(lg_ref, lb_ref, cw_ref, loss_ref, wsum_ref):
        i = pl.program_id(0)

        @pl.when(i == 0)
        def _():
            loss_ref[...] = jnp.zeros_like(loss_ref)
            wsum_ref[...] = jnp.zeros_like(wsum_ref)

        rows = i * tn + jax.lax.broadcasted_iota(jnp.int32, (tn, 1), 0)
        row_ok = rows < N                                     # (tn, 1) tail mask

        labels_t = lb_ref[...]                                # (tn, 1) int32
        # zero-out undefined tail rows BEFORE the exp so no NaN/Inf can leak in
        logits_t = jnp.where(row_ok, lg_ref[...].astype(jnp.float32), 0.0)

        m = jnp.max(logits_t, axis=-1, keepdims=True)
        lse = m + jnp.log(jnp.sum(jnp.exp(logits_t - m), axis=-1, keepdims=True))

        cls = jax.lax.broadcasted_iota(jnp.int32, (tn, C), 1)
        onehot = (labels_t == cls).astype(jnp.float32)        # (tn, C)
        logit_y = jnp.sum(logits_t * onehot, axis=-1, keepdims=True)
        w_y = jnp.sum(cw_ref[...] * onehot, axis=-1, keepdims=True)
        valid = jnp.logical_and(row_ok, labels_t != IGNORE_INDEX).astype(jnp.float32)

        loss_ref[...] += jnp.sum((lse - logit_y) * w_y * valid)
        wsum_ref[...] += jnp.sum(w_y * valid)

    loss_sum, w_sum = pl.pallas_call(
        kernel,
        out_shape=(jax.ShapeDtypeStruct((1, 1), jnp.float32),
                   jax.ShapeDtypeStruct((1, 1), jnp.float32)),
        grid_spec=pltpu.PrefetchScalarGridSpec(
            num_scalar_prefetch=0,
            grid=(num_tiles,),
            in_specs=[pl.BlockSpec((tn, C), lambda i: (i, 0)),
                      pl.BlockSpec((tn, 1), lambda i: (i, 0)),
                      pl.BlockSpec((1, C), lambda i: (0, 0))],
            out_specs=(pl.BlockSpec((1, 1), lambda i: (0, 0)),
                       pl.BlockSpec((1, 1), lambda i: (0, 0)))),
        compiler_params=pltpu.CompilerParams(
            dimension_semantics=("arbitrary",),
            vmem_limit_bytes=VMEM_LIMIT_BYTES),
    )(logits, labels2, class_weights.reshape(1, C).astype(jnp.float32))

    # TODO(synk): on v7x a leading parallel grid axis with per-TC partial sums would
    # split this sequential reduction across the 2 TensorCores.
    return loss_sum[0, 0] / jnp.maximum(w_sum[0, 0], 1e-12)


# ------------------------------- parameter init -----------------------------------
def init_params(key):
    def dense(key, cin, cout):
        kw, kb = jax.random.split(key)
        w = jax.random.normal(kw, (cin, cout), jnp.float32) / np.sqrt(cin)
        b = jax.random.normal(kb, (cout,), jnp.float32) * 0.01
        return w, b

    keys = jax.random.split(key, 5)
    params = {}
    params['pre_w'], params['pre_b'] = dense(keys[0], 4, C_VW)              # point -> voxel feat
    params['ss_w'], params['ss_b'] = dense(keys[1], C_VW, C_SS)             # semantic branch head
    params['sc_w'], params['sc_b'] = dense(keys[2], N_HEIGHT, C_SC)         # completion branch head
    cin_head = N_HEIGHT + C_VW + C_SS + C_SC + C_IMG
    params['head_w'], params['head_b'] = dense(keys[3], cin_head,
                                               NBR_CLASSES * N_HEIGHT)      # BEVUNet head
    return params


# ------------------------------- stand-in branches --------------------------------
def pc_preprocess(pc, indicator, params):
    # TODO(synk): PcPreprocessor is an external learned voxel encoder; stand-in here
    # is floor-voxelization + fixed linear point embedding (plain JAX glue).
    mins = jnp.array([LIMS[0][0], LIMS[1][0], LIMS[2][0]], jnp.float32)
    res = jnp.array(GRID_METERS, jnp.float32)
    idx = jnp.floor((pc[:, :3] - mins) / res).astype(jnp.int32)
    idx = jnp.clip(idx, 0, jnp.array(SIZES, jnp.int32) - 1)                 # (N, 3) = (x, y, z)

    batch_id = np.zeros((pc.shape[0],), np.int32)
    for b in range(len(indicator) - 1):
        batch_id[indicator[b]:indicator[b + 1]] = b
    batch_id = jnp.asarray(batch_id)[:, None]

    coord_ind = jnp.concatenate([batch_id, idx], axis=1)                    # (b, x, y, z)
    vw_feature = jax.nn.relu(pc @ params['pre_w'] + params['pre_b'])        # (N, C_VW)
    full_coord = coord_ind
    info = {}
    return vw_feature, coord_ind, full_coord, info


def bev_projection(vw_feature, coord, batch_size):
    """Scatter-max of voxel features onto a channels-last BEV map (B, Y, X, C_VW)."""
    # TODO(synk): at production point counts (>100k) this XLA scatter-max dominates;
    # next step is a Pallas kernel with coords prefetched to SMEM and per-tile VMEM max.
    Yd, Xd = SIZES[1], SIZES[0]
    dense = jnp.zeros((batch_size, Yd, Xd, C_VW), jnp.float32)
    b, y, x = coord[:, 0], coord[:, 2], coord[:, 3]          # coord = (b, z, y, x)
    dense = dense.at[b, y, x].max(vw_feature)
    return dense


# ---------------------------------- DSC forward ------------------------------------
def dsc_forward(example, image_voxel, params, phase='trainval'):
    batch_size = len(example['points'])

    # stop-gradient block (torch.no_grad equivalent)
    indicator = [0]
    pc_ibatch = []
    for i in range(batch_size):
        pc_i = example['points'][i]
        pc_ibatch.append(pc_i)
        indicator.append(pc_i.shape[0] + indicator[-1])
    pc = jax.lax.stop_gradient(jnp.concatenate(pc_ibatch, axis=0))

    vw_feature, coord_ind, full_coord, info = pc_preprocess(pc, indicator, params)
    coord = jnp.concatenate(
        [coord_ind[:, 0].reshape(-1, 1), jnp.flip(coord_ind, axis=1)[:, :3]], axis=1)
    bev_dense = bev_projection(vw_feature, coord, batch_size)              # (B, Y, X, C_VW)

    # channels-last equivalents of occupancy.permute(0,3,2,1) and NCHW image_voxel
    occ_nhwc = jnp.transpose(example['occupancy'], (0, 2, 1, 3))           # (B, Y, X, Z)
    img_nhwc = jnp.transpose(image_voxel, (0, 2, 3, 1))                    # (B, Y, X, C_IMG)

    # TODO(synk): SemanticBranch / CompletionBranch / BEVUNetv1 internals are external;
    # their dense heads + channel concat are fused into one Pallas pass here.
    head, ss_abs_sum, sc_abs_sum = fused_bev_head(occ_nhwc, bev_dense, img_nhwc, params)

    B, Yd, Xd = head.shape[0], head.shape[1], head.shape[2]
    M = B * Yd * Xd
    ss_loss_dict = {'sem_scal': 1e-3 * ss_abs_sum / (M * C_SS)}            # mean(|mss_ss|)
    sc_loss_dict = {'com_scal': 1e-3 * sc_abs_sum / (M * C_SC)}            # mean(|mss_sc|)

    head_5d = head.reshape(B, Yd, Xd, NBR_CLASSES, N_HEIGHT)               # (B, Y, X, C, Z)
    out_scale_1_1 = jnp.transpose(head_5d, (0, 3, 2, 1, 4))                # (B, C, X, Y, Z)

    if phase == 'trainval':
        target = get_target(example)['1_1']                                # (B, X, Y, Z)
        # stream logits / labels in matching (b, y, x, z) row order, classes on lanes
        logits_rows = jnp.transpose(head_5d, (0, 1, 2, 4, 3)).reshape(-1, NBR_CLASSES)
        labels_rows = jnp.transpose(target, (0, 2, 1, 3)).reshape(-1)
        loss_dict = compute_loss(logits_rows, labels_rows, ss_loss_dict, sc_loss_dict)
        return {'output_voxels': out_scale_1_1}, loss_dict
    return {'output_voxels': out_scale_1_1}


def get_target(example):
    label_copy = jnp.where(example['invalid_1_1'] == 1,
                           jnp.int32(IGNORE_INDEX),
                           example['label_1_1'].astype(jnp.int32))
    return {'1_1': label_copy}


def compute_loss(logits_rows, labels_rows, ss_loss_dict, sc_loss_dict):
    class_weights = jnp.asarray(CLASS_WEIGHTS, jnp.float32)
    loss_1_1 = weighted_cross_entropy(logits_rows, labels_rows, class_weights)
    # TODO(synk): lovasz_softmax (sorted-error Lovász extension) has no clean Pallas
    # equivalent (data-dependent per-pixel sort); omitted from the synthetic loss.
    loss_1_1 = loss_1_1 * 3.0
    loss_seg = sum(ss_loss_dict.values())
    loss_com = sum(sc_loss_dict.values())
    loss_total = loss_1_1 + loss_seg + loss_com
    return {'loss_total': loss_total, 'semantic_1_1': loss_1_1,
            'semantic_seg': loss_seg, 'scene_completion': loss_com}


# -------------------------------------- main ---------------------------------------
if __name__ == "__main__":
    key = jax.random.PRNGKey(0)
    k_params, k_pts0, k_pts1, k_occ, k_lbl, k_inv, k_img = jax.random.split(key, 7)

    params = init_params(k_params)

    B = 2
    N_PTS = 200
    X, Y, Z = SIZES

    def sample_points(k):
        kx, ky, kz, ki = jax.random.split(k, 4)
        xs = jax.random.uniform(kx, (N_PTS, 1), minval=LIMS[0][0], maxval=LIMS[0][1])
        ys = jax.random.uniform(ky, (N_PTS, 1), minval=LIMS[1][0], maxval=LIMS[1][1])
        zs = jax.random.uniform(kz, (N_PTS, 1), minval=LIMS[2][0], maxval=LIMS[2][1])
        inten = jax.random.uniform(ki, (N_PTS, 1))
        return jnp.concatenate([xs, ys, zs, inten], axis=1).astype(jnp.float32)

    example = {
        'points': [sample_points(k_pts0), sample_points(k_pts1)],
        'occupancy': jax.random.bernoulli(k_occ, 0.3, (B, X, Y, Z)).astype(jnp.float32),
        'label_1_1': jax.random.randint(k_lbl, (B, X, Y, Z), 0, NBR_CLASSES, jnp.int32),
        'invalid_1_1': jax.random.bernoulli(k_inv, 0.1, (B, X, Y, Z)).astype(jnp.int32),
    }
    image_voxel = jax.random.normal(k_img, (B, C_IMG, Y, X), jnp.float32)

    out_dict, loss_dict = dsc_forward(example, image_voxel, params, phase='trainval')
    jax.block_until_ready(out_dict['output_voxels'])
    jax.block_until_ready(loss_dict['loss_total'])

    assert out_dict['output_voxels'].shape == (B, NBR_CLASSES, X, Y, Z)
    assert np.isfinite(float(loss_dict['loss_total']))
    print("KERNEL_OK")
</pallas_src>

<mosaic_0001>
module attributes {stable_mosaic.version = 11 : i64} {
  func.func @kernel(%arg0: i32, %arg1: memref<512x8xf32, #tpu.memory_space<vmem>>, %arg2: memref<512x16xf32, #tpu.memory_space<vmem>>, %arg3: memref<512x8xf32, #tpu.memory_space<vmem>>, %arg4: memref<16x16xbf16, #tpu.memory_space<vmem>>, %arg5: memref<1x16xf32, #tpu.memory_space<vmem>>, %arg6: memref<8x16xbf16, #tpu.memory_space<vmem>>, %arg7: memref<1x16xf32, #tpu.memory_space<vmem>>, %arg8: memref<8x160xbf16, #tpu.memory_space<vmem>>, %arg9: memref<16x160xbf16, #tpu.memory_space<vmem>>, %arg10: memref<16x160xbf16, #tpu.memory_space<vmem>>, %arg11: memref<16x160xbf16, #tpu.memory_space<vmem>>, %arg12: memref<8x160xbf16, #tpu.memory_space<vmem>>, %arg13: memref<1x160xf32, #tpu.memory_space<vmem>>, %arg14: memref<512x160xf32, #tpu.memory_space<vmem>>, %arg15: memref<1x1xf32, #tpu.memory_space<vmem>>, %arg16: memref<1x1xf32, #tpu.memory_space<vmem>>) attributes {dimension_semantics = [#tpu.dimension_semantics<arbitrary>], iteration_bounds = array<i64: 1>, scalar_prefetch = 0 : i64, scratch_operands = 0 : i64, tpu.core_type = #tpu.core_type<tc>, window_params = [{transform_indices = @transform_0, window_bounds = array<i64: 512, 8>}, {transform_indices = @transform_1, window_bounds = array<i64: 512, 16>}, {transform_indices = @transform_2, window_bounds = array<i64: 512, 8>}, {pipeline_mode = #tpu.pipeline_mode<synchronous>, transform_indices = @transform_3, window_bounds = array<i64: 16, 16>}, {pipeline_mode = #tpu.pipeline_mode<synchronous>, transform_indices = @transform_4, window_bounds = array<i64: 1, 16>}, {pipeline_mode = #tpu.pipeline_mode<synchronous>, transform_indices = @transform_5, window_bounds = array<i64: 8, 16>}, {pipeline_mode = #tpu.pipeline_mode<synchronous>, transform_indices = @transform_6, window_bounds = array<i64: 1, 16>}, {pipeline_mode = #tpu.pipeline_mode<synchronous>, transform_indices = @transform_7, window_bounds = array<i64: 8, 160>}, {pipeline_mode = #tpu.pipeline_mode<synchronous>, transform_indices = @transform_8, window_bounds = array<i64: 16, 160>}, {pipeline_mode = #tpu.pipeline_mode<synchronous>, transform_indices = @transform_9, window_bounds = array<i64: 16, 160>}, {pipeline_mode = #tpu.pipeline_mode<synchronous>, transform_indices = @transform_10, window_bounds = array<i64: 16, 160>}, {pipeline_mode = #tpu.pipeline_mode<synchronous>, transform_indices = @transform_11, window_bounds = array<i64: 8, 160>}, {pipeline_mode = #tpu.pipeline_mode<synchronous>, transform_indices = @transform_12, window_bounds = array<i64: 1, 160>}, {transform_indices = @transform_13, window_bounds = array<i64: 512, 160>}, {pipeline_mode = #tpu.pipeline_mode<synchronous>, transform_indices = @transform_14, window_bounds = array<i64: 1, 1>}, {pipeline_mode = #tpu.pipeline_mode<synchronous>, transform_indices = @transform_15, window_bounds = array<i64: 1, 1>}]} {
    %c0_i32 = arith.constant 0 : i32
    %0 = arith.cmpi eq, %arg0, %c0_i32 : i32
    %1 = arith.extui %0 : i1 to i32
    %c0_i32_0 = arith.constant 0 : i32
    %2 = arith.cmpi ne, %1, %c0_i32_0 : i32
    scf.if %2 {
      %cst_49 = arith.constant 0.000000e+00 : f32
      %71 = vector.broadcast %cst_49 : f32 to vector<1x1xf32>
      %c0_50 = arith.constant 0 : index
      %c0_51 = arith.constant 0 : index
      %72 = vector.load %arg15[%c0_50, %c0_51] : memref<1x1xf32, #tpu.memory_space<vmem>>, vector<1x1xf32>
      tpu.vector_store %arg15[%c0_50, %c0_51], %71 {strides = array<i32>} : memref<1x1xf32, #tpu.memory_space<vmem>>, vector<1x1xf32>,
      %cst_52 = arith.constant 0.000000e+00 : f32
      %73 = vector.broadcast %cst_52 : f32 to vector<1x1xf32>
      %c0_53 = arith.constant 0 : index
      %c0_54 = arith.constant 0 : index
      %74 = vector.load %arg16[%c0_53, %c0_54] : memref<1x1xf32, #tpu.memory_space<vmem>>, vector<1x1xf32>
      tpu.vector_store %arg16[%c0_53, %c0_54], %73 {strides = array<i32>} : memref<1x1xf32, #tpu.memory_space<vmem>>, vector<1x1xf32>,
    } else {
    }
    %c0 = arith.constant 0 : index
    %c0_1 = arith.constant 0 : index
    %3 = vector.load %arg1[%c0, %c0_1] : memref<512x8xf32, #tpu.memory_space<vmem>>, vector<512x8xf32>
    %4 = arith.truncf %3 : vector<512x8xf32> to vector<512x8xbf16>
    %c0_2 = arith.constant 0 : index
    %c0_3 = arith.constant 0 : index
    %5 = vector.load %arg2[%c0_2, %c0_3] : memref<512x16xf32, #tpu.memory_space<vmem>>, vector<512x16xf32>
    %6 = arith.truncf %5 : vector<512x16xf32> to vector<512x16xbf16>
    %c0_4 = arith.constant 0 : index
    %c0_5 = arith.constant 0 : index
    %7 = vector.load %arg3[%c0_4, %c0_5] : memref<512x8xf32, #tpu.memory_space<vmem>>, vector<512x8xf32>
    %8 = arith.truncf %7 : vector<512x8xf32> to vector<512x8xbf16>
    %c0_6 = arith.constant 0 : index
    %c0_7 = arith.constant 0 : index
    %9 = vector.load %arg4[%c0_6, %c0_7] : memref<16x16xbf16, #tpu.memory_space<vmem>>, vector<16x16xbf16>
    %cst = arith.constant dense<0.000000e+00> : vector<512x16xf32>
    %10 = tpu.matmul %6, %9, %cst {dimension_numbers = #tpu.dot_dimension_numbers<[1], [0], [0], [1], [0, 0, 1, 1], [], []>} : vector<512x16xbf16>, vector<16x16xbf16>, vector<512x16xf32> -> vector<512x16xf32>
    %c0_8 = arith.constant 0 : index
    %c0_9 = arith.constant 0 : index
    %11 = vector.load %arg5[%c0_8, %c0_9] : memref<1x16xf32, #tpu.memory_space<vmem>>, vector<1x16xf32>
    %12 = vector.broadcast %11 : vector<1x16xf32> to vector<512x16xf32>
    %13 = arith.addf %10, %12 : vector<512x16xf32>
    %c0_10 = arith.constant 0 : index
    %c0_11 = arith.constant 0 : index
    %14 = vector.load %arg6[%c0_10, %c0_11] : memref<8x16xbf16, #tpu.memory_space<vmem>>, vector<8x16xbf16>
    %cst_12 = arith.constant dense<0.000000e+00> : vector<512x16xf32>
    %15 = tpu.matmul %4, %14, %cst_12 {dimension_numbers = #tpu.dot_dimension_numbers<[1], [0], [0], [1], [0, 0, 1, 1], [], []>} : vector<512x8xbf16>, vector<8x16xbf16>, vector<512x16xf32> -> vector<512x16xf32>
    %c0_13 = arith.constant 0 : index
    %c0_14 = arith.constant 0 : index
    %16 = vector.load %arg7[%c0_13, %c0_14] : memref<1x16xf32, #tpu.memory_space<vmem>>, vector<1x16xf32>
    %17 = vector.broadcast %16 : vector<1x16xf32> to vector<512x16xf32>
    %18 = arith.addf %15, %17 : vector<512x16xf32>
    %c0_15 = arith.constant 0 : index
    %c0_16 = arith.constant 0 : index
    %19 = vector.load %arg8[%c0_15, %c0_16] : memref<8x160xbf16, #tpu.memory_space<vmem>>, vector<8x160xbf16>
    %cst_17 = arith.constant dense<0.000000e+00> : vector<512x160xf32>
    %20 = tpu.matmul %4, %19, %cst_17 {dimension_numbers = #tpu.dot_dimension_numbers<[1], [0], [0], [1], [0, 0, 1, 1], [], []>} : vector<512x8xbf16>, vector<8x160xbf16>, vector<512x160xf32> -> vector<512x160xf32>
    %c0_18 = arith.constant 0 : index
    %c0_19 = arith.constant 0 : index
    %21 = vector.load %arg9[%c0_18, %c0_19] : memref<16x160xbf16, #tpu.memory_space<vmem>>, vector<16x160xbf16>
    %cst_20 = arith.constant dense<0.000000e+00> : vector<512x160xf32>
    %22 = tpu.matmul %6, %21, %cst_20 {dimension_numbers = #tpu.dot_dimension_numbers<[1], [0], [0], [1], [0, 0, 1, 1], [], []>} : vector<512x16xbf16>, vector<16x160xbf16>, vector<512x160xf32> -> vector<512x160xf32>
    %23 = arith.addf %20, %22 : vector<512x160xf32>
    %24 = arith.truncf %13 : vector<512x16xf32> to vector<512x16xbf16>
    %c0_21 = arith.constant 0 : index
    %c0_22 = arith.constant 0 : index
    %25 = vector.load %arg10[%c0_21, %c0_22] : memref<16x160xbf16, #tpu.memory_space<vmem>>, vector<16x160xbf16>
    %cst_23 = arith.constant dense<0.000000e+00> : vector<512x160xf32>
    %26 = tpu.matmul %24, %25, %cst_23 {dimension_numbers = #tpu.dot_dimension_numbers<[1], [0], [0], [1], [0, 0, 1, 1], [], []>} : vector<512x16xbf16>, vector<16x160xbf16>, vector<512x160xf32> -> vector<512x160xf32>
    %27 = arith.addf %23, %26 : vector<512x160xf32>
    %28 = arith.truncf %18 : vector<512x16xf32> to vector<512x16xbf16>
    %c0_24 = arith.constant 0 : index
    %c0_25 = arith.constant 0 : index
    %29 = vector.load %arg11[%c0_24, %c0_25] : memref<16x160xbf16, #tpu.memory_space<vmem>>, vector<16x160xbf16>
    %cst_26 = arith.constant dense<0.000000e+00> : vector<512x160xf32>
    %30 = tpu.matmul %28, %29, %cst_26 {dimension_numbers = #tpu.dot_dimension_numbers<[1], [0], [0], [1], [0, 0, 1, 1], [], []>} : vector<512x16xbf16>, vector<16x160xbf16>, vector<512x160xf32> -> vector<512x160xf32>
    %31 = arith.addf %27, %30 : vector<512x160xf32>
    %c0_27 = arith.constant 0 : index
    %c0_28 = arith.constant 0 : index
    %32 = vector.load %arg12[%c0_27, %c0_28] : memref<8x160xbf16, #tpu.memory_space<vmem>>, vector<8x160xbf16>
    %cst_29 = arith.constant dense<0.000000e+00> : vector<512x160xf32>
    %33 = tpu.matmul %8, %32, %cst_29 {dimension_numbers = #tpu.dot_dimension_numbers<[1], [0], [0], [1], [0, 0, 1, 1], [], []>} : vector<512x8xbf16>, vector<8x160xbf16>, vector<512x160xf32> -> vector<512x160xf32>
    %34 = arith.addf %31, %33 : vector<512x160xf32>
    %c0_30 = arith.constant 0 : index
    %c0_31 = arith.constant 0 : index
    %35 = vector.load %arg13[%c0_30, %c0_31] : memref<1x160xf32, #tpu.memory_space<vmem>>, vector<1x160xf32>
    %36 = vector.broadcast %35 : vector<1x160xf32> to vector<512x160xf32>
    %37 = arith.addf %34, %36 : vector<512x160xf32>
    %c0_32 = arith.constant 0 : index
    %c0_33 = arith.constant 0 : index
    %38 = vector.load %arg14[%c0_32, %c0_33] : memref<512x160xf32, #tpu.memory_space<vmem>>, vector<512x160xf32>
    tpu.vector_store %arg14[%c0_32, %c0_33], %37 {strides = array<i32>} : memref<512x160xf32, #tpu.memory_space<vmem>>, vector<512x160xf32>,
    %c512_i32 = arith.constant 512 : i32
    %39 = arith.muli %arg0, %c512_i32 : i32
    %40 = tpu.iota {dimensions = array<i32: 0>} : vector<512x1xi32>
    %41 = vector.broadcast %39 : i32 to vector<512x1xi32>
    %42 = arith.addi %41, %40 : vector<512x1xi32>
    %c512_i32_34 = arith.constant 512 : i32
    %43 = vector.broadcast %c512_i32_34 : i32 to vector<512x1xi32>
    %44 = arith.cmpi slt, %42, %43 : vector<512x1xi32>
    %c0_35 = arith.constant 0 : index
    %c0_36 = arith.constant 0 : index
    %45 = vector.load %arg15[%c0_35, %c0_36] : memref<1x1xf32, #tpu.memory_space<vmem>>, vector<1x1xf32>
    %46 = math.absf %13 : vector<512x16xf32>
    %cst_37 = arith.constant dense<0.000000e+00> : vector<512xf32>
    %47 = vector.multi_reduction <add>, %46, %cst_37 [1] : vector<512x16xf32> to vector<512xf32>
    %48 = vector.shape_cast %47 : vector<512xf32> to vector<512x1xf32>
    %cst_38 = arith.constant 0.000000e+00 : f32
    %49 = vector.broadcast %cst_38 : f32 to vector<512x1xf32>
    %50 = arith.select %44, %48, %49 : vector<512x1xi1>, vector<512x1xf32>
    %51 = vector.shape_cast %50 : vector<512x1xf32> to vector<1x512x1xf32>
    %cst_39 = arith.constant dense<0.000000e+00> : vector<1xf32>
    %52 = vector.multi_reduction <add>, %51, %cst_39 [1, 2] : vector<1x512x1xf32> to vector<1xf32>
    %53 = vector.shape_cast %52 : vector<1xf32> to vector<1x1x1xf32>
    %54 = vector.extract %53[0, 0, 0] : f32 from vector<1x1x1xf32>
    %55 = vector.broadcast %54 : f32 to vector<1x1xf32>
    %56 = arith.addf %45, %55 : vector<1x1xf32>
    %c0_40 = arith.constant 0 : index
    %c0_41 = arith.constant 0 : index
    %57 = vector.load %arg15[%c0_40, %c0_41] : memref<1x1xf32, #tpu.memory_space<vmem>>, vector<1x1xf32>
    tpu.vector_store %arg15[%c0_40, %c0_41], %56 {strides = array<i32>} : memref<1x1xf32, #tpu.memory_space<vmem>>, vector<1x1xf32>,
    %c0_42 = arith.constant 0 : index
    %c0_43 = arith.constant 0 : index
    %58 = vector.load %arg16[%c0_42, %c0_43] : memref<1x1xf32, #tpu.memory_space<vmem>>, vector<1x1xf32>
    %59 = math.absf %18 : vector<512x16xf32>
    %cst_44 = arith.constant dense<0.000000e+00> : vector<512xf32>
    %60 = vector.multi_reduction <add>, %59, %cst_44 [1] : vector<512x16xf32> to vector<512xf32>
    %61 = vector.shape_cast %60 : vector<512xf32> to vector<512x1xf32>
    %cst_45 = arith.constant 0.000000e+00 : f32
    %62 = vector.broadcast %cst_45 : f32 to vector<512x1xf32>
    %63 = arith.select %44, %61, %62 : vector<512x1xi1>, vector<512x1xf32>
    %64 = vector.shape_cast %63 : vector<512x1xf32> to vector<1x512x1xf32>
    %cst_46 = arith.constant dense<0.000000e+00> : vector<1xf32>
    %65 = vector.multi_reduction <add>, %64, %cst_46 [1, 2] : vector<1x512x1xf32> to vector<1xf32>
    %66 = vector.shape_cast %65 : vector<1xf32> to vector<1x1x1xf32>
    %67 = vector.extract %66[0, 0, 0] : f32 from vector<1x1x1xf32>
    %68 = vector.broadcast %67 : f32 to vector<1x1xf32>
    %69 = arith.addf %58, %68 : vector<1x1xf32>
    %c0_47 = arith.constant 0 : index
    %c0_48 = arith.constant 0 : index
    %70 = vector.load %arg16[%c0_47, %c0_48] : memref<1x1xf32, #tpu.memory_space<vmem>>, vector<1x1xf32>
    tpu.vector_store %arg16[%c0_47, %c0_48], %69 {strides = array<i32>} : memref<1x1xf32, #tpu.memory_space<vmem>>, vector<1x1xf32>,
    return
  }
  func.func @transform_0(%arg0: i32) -> (i32, i32) {
    %c0_i32 = arith.constant 0 : i32
    %c0_i32_0 = arith.constant 0 : i32
    return %arg0, %c0_i32 : i32, i32
  }
  func.func @transform_1(%arg0: i32) -> (i32, i32) {
    %c0_i32 = arith.constant 0 : i32
    %c0_i32_0 = arith.constant 0 : i32
    return %arg0, %c0_i32 : i32, i32
  }
  func.func @transform_2(%arg0: i32) -> (i32, i32) {
    %c0_i32 = arith.constant 0 : i32
    %c0_i32_0 = arith.constant 0 : i32
    return %arg0, %c0_i32 : i32, i32
  }
  func.func @transform_3(%arg0: i32) -> (i32, i32) {
    %c0_i32 = arith.constant 0 : i32
    %c0_i32_0 = arith.constant 0 : i32
    %c0_i32_1 = arith.constant 0 : i32
    return %c0_i32, %c0_i32_0 : i32, i32
  }
  func.func @transform_4(%arg0: i32) -> (i32, i32) {
    %c0_i32 = arith.constant 0 : i32
    %c0_i32_0 = arith.constant 0 : i32
    %c0_i32_1 = arith.constant 0 : i32
    return %c0_i32, %c0_i32_0 : i32, i32
  }
  func.func @transform_5(%arg0: i32) -> (i32, i32) {
    %c0_i32 = arith.constant 0 : i32
    %c0_i32_0 = arith.constant 0 : i32
    %c0_i32_1 = arith.constant 0 : i32
    return %c0_i32, %c0_i32_0 : i32, i32
  }
  func.func @transform_6(%arg0: i32) -> (i32, i32) {
    %c0_i32 = arith.constant 0 : i32
    %c0_i32_0 = arith.constant 0 : i32
    %c0_i32_1 = arith.constant 0 : i32
    return %c0_i32, %c0_i32_0 : i32, i32
  }
  func.func @transform_7(%arg0: i32) -> (i32, i32) {
    %c0_i32 = arith.constant 0 : i32
    %c0_i32_0 = arith.constant 0 : i32
    %c0_i32_1 = arith.constant 0 : i32
    return %c0_i32, %c0_i32_0 : i32, i32
  }
  func.func @transform_8(%arg0: i32) -> (i32, i32) {
    %c0_i32 = arith.constant 0 : i32
    %c0_i32_0 = arith.constant 0 : i32
    %c0_i32_1 = arith.constant 0 : i32
    return %c0_i32, %c0_i32_0 : i32, i32
  }
  func.func @transform_9(%arg0: i32) -> (i32, i32) {
    %c0_i32 = arith.constant 0 : i32
    %c0_i32_0 = arith.constant 0 : i32
    %c0_i32_1 = arith.constant 0 : i32
    return %c0_i32, %c0_i32_0 : i32, i32
  }
  func.func @transform_10(%arg0: i32) -> (i32, i32) {
    %c0_i32 = arith.constant 0 : i32
    %c0_i32_0 = arith.constant 0 : i32
    %c0_i32_1 = arith.constant 0 : i32
    return %c0_i32, %c0_i32_0 : i32, i32
  }
  func.func @transform_11(%arg0: i32) -> (i32, i32) {
    %c0_i32 = arith.constant 0 : i32
    %c0_i32_0 = arith.constant 0 : i32
    %c0_i32_1 = arith.constant 0 : i32
    return %c0_i32, %c0_i32_0 : i32, i32
  }
  func.func @transform_12(%arg0: i32) -> (i32, i32) {
    %c0_i32 = arith.constant 0 : i32
    %c0_i32_0 = arith.constant 0 : i32
    %c0_i32_1 = arith.constant 0 : i32
    return %c0_i32, %c0_i32_0 : i32, i32
  }
  func.func @transform_13(%arg0: i32) -> (i32, i32) {
    %c0_i32 = arith.constant 0 : i32
    %c0_i32_0 = arith.constant 0 : i32
    return %arg0, %c0_i32 : i32, i32
  }
  func.func @transform_14(%arg0: i32) -> (i32, i32) {
    %c0_i32 = arith.constant 0 : i32
    %c0_i32_0 = arith.constant 0 : i32
    %c0_i32_1 = arith.constant 0 : i32
    return %c0_i32, %c0_i32_0 : i32, i32
  }
  func.func @transform_15(%arg0: i32) -> (i32, i32) {
    %c0_i32 = arith.constant 0 : i32
    %c0_i32_0 = arith.constant 0 : i32
    %c0_i32_1 = arith.constant 0 : i32
    return %c0_i32, %c0_i32_0 : i32, i32
  }
}

</mosaic_0001>

<llo_original>
// kernel: tpu_custom_call.1
$region0: #{tpu_custom_call.1}
  #allocation0 [shape = 'u32[]', space=smem, size = 0x4, offset = 0x4, fixed_abs, tag = 'smem constant byte address 0x4 - core index']
  #allocation1 [shape = 'u32[144,128]{1,0:T(1,128)}', space=vmem, size = 0x12000, scoped, tag = 'internal scratch']
  %s0 = inlined_call_operand.vmem [shape: f32[512,8], index: 0, kind: input, shape index: {}]
  %s1 = inlined_call_operand.vmem [shape: f32[512,16], index: 1, kind: input, shape index: {}]
  %s2 = inlined_call_operand.vmem [shape: f32[512,8], index: 2, kind: input, shape index: {}]
  %s3 = inlined_call_operand.vmem [shape: bf16[16,16], index: 3, kind: input, shape index: {}]
  %s4 = inlined_call_operand.vmem [shape: f32[1,16], index: 4, kind: input, shape index: {}]
  %s5 = inlined_call_operand.vmem [shape: bf16[8,16], index: 5, kind: input, shape index: {}]
  %s6 = inlined_call_operand.vmem [shape: f32[1,16], index: 6, kind: input, shape index: {}]
  %s7 = inlined_call_operand.vmem [shape: bf16[8,160], index: 7, kind: input, shape index: {}]
  %s8 = inlined_call_operand.vmem [shape: bf16[16,160], index: 8, kind: input, shape index: {}]
  %s9 = inlined_call_operand.vmem [shape: bf16[16,160], index: 9, kind: input, shape index: {}]
  %s10 = inlined_call_operand.vmem [shape: bf16[16,160], index: 10, kind: input, shape index: {}]
  %s11 = inlined_call_operand.vmem [shape: bf16[8,160], index: 11, kind: input, shape index: {}]
  %s12 = inlined_call_operand.vmem [shape: f32[1,160], index: 12, kind: input, shape index: {}]
  %s13 = inlined_call_operand.vmem [shape: f32[512,160], index: 13, kind: output, shape index: {0}]
  %s14 = inlined_call_operand.hbm [shape: f32[1,1], index: 14, kind: output, shape index: {1}]
  %s15 = inlined_call_operand.hbm [shape: f32[1,1], index: 15, kind: output, shape index: {2}]
  %16 = xla_tuple %s13, %s14, %s15
  %s17 = sld [smem:[#allocation0]]
  $region82: #{tpu_custom_call.1} parent=0
    _
  %s19 = ssub.s32 1, %s17
  %s20 = scalar_select 0, %s19, %s17
  $region1: #{tpu_custom_call.1} parent=0
    #allocation2 [shape = 'u8[512]{0}', space=vmem, size = 0x400, scoped, tag = 'output window, operand 1, single buffered']
    #allocation3 [shape = 's32[1]{0}', space=sflag, size = 0x4, scoped, tag = 'scoped memory for tpu_custom_call.1']
    #allocation4 [shape = 'u8[512]{0}', space=vmem, size = 0x400, scoped, tag = 'output window, operand 2, single buffered']
    #allocation5 [shape = 's32[1]{0}', space=sflag, size = 0x4, scoped, tag = 'scoped memory for tpu_custom_call.1']
    %21 = vsyncpa [#allocation3], 0
    %22 = vsyncpa [#allocation5], 0
    // Predicated region
    $region2: #{tpu_custom_call.1} parent=1 // pred_check
      _
    $region3: #{tpu_custom_call.1} parent=1 // pred_check_branch
      %24 = sbr.rel (0) target = $region5
    $region4: #{tpu_custom_call.1} parent=1 // pred_region
      _
    $region5: #{tpu_custom_call.1} parent=1 // pred_fallthru
      _
    // Predicated region
    $region6: #{tpu_custom_call.1} parent=1 // pred_check
      _
    $region7: #{tpu_custom_call.1} parent=1 // pred_check_branch
      %26 = sbr.rel (0) target = $region9
    $region8: #{tpu_custom_call.1} parent=1 // pred_region
      _
    $region9: #{tpu_custom_call.1} parent=1 // pred_fallthru
      _
    // Predicated region
    $region10: #{tpu_custom_call.1} parent=1 // pred_check
      _
    $region11: #{tpu_custom_call.1} parent=1 // pred_check_branch
      %28 = sbr.rel (0) target = $region13
    $region12: #{tpu_custom_call.1} parent=1 // pred_region
      _
    $region13: #{tpu_custom_call.1} parent=1 // pred_fallthru
      _
    // Predicated region
    $region14: #{tpu_custom_call.1} parent=1 // pred_check
      _
    $region15: #{tpu_custom_call.1} parent=1 // pred_check_branch
      %30 = sbr.rel (0) target = $region17
    $region16: #{tpu_custom_call.1} parent=1 // pred_region
      _
    $region17: #{tpu_custom_call.1} parent=1 // pred_fallthru
      _
    // Predicated region
    $region18: #{tpu_custom_call.1} parent=1 // pred_check
      _
    $region19: #{tpu_custom_call.1} parent=1 // pred_check_branch
      %32 = sbr.rel (0) target = $region21
    $region20: #{tpu_custom_call.1} parent=1 // pred_region
      _
    $region21: #{tpu_custom_call.1} parent=1 // pred_fallthru
      _
    // Predicated region
    $region22: #{tpu_custom_call.1} parent=1 // pred_check
      _
    $region23: #{tpu_custom_call.1} parent=1 // pred_check_branch
      %34 = sbr.rel (0) target = $region25
    $region24: #{tpu_custom_call.1} parent=1 // pred_region
      _
    $region25: #{tpu_custom_call.1} parent=1 // pred_fallthru
      _
    // Predicated region
    $region26: #{tpu_custom_call.1} parent=1 // pred_check
      _
    $region27: #{tpu_custom_call.1} parent=1 // pred_check_branch
      %36 = sbr.rel (0) target = $region29
    $region28: #{tpu_custom_call.1} parent=1 // pred_region
      _
    $region29: #{tpu_custom_call.1} parent=1 // pred_fallthru
      _
    // Predicated region
    $region30: #{tpu_custom_call.1} parent=1 // pred_check
      _
    $region31: #{tpu_custom_call.1} parent=1 // pred_check_branch
      %38 = sbr.rel (0) target = $region33
    $region32: #{tpu_custom_call.1} parent=1 // pred_region
      _
    $region33: #{tpu_custom_call.1} parent=1 // pred_fallthru
      _
    // Predicated region
    $region34: #{tpu_custom_call.1} parent=1 // pred_check
      _
    $region35: #{tpu_custom_call.1} parent=1 // pred_check_branch
      %40 = sbr.rel (0) target = $region37
    $region36: #{tpu_custom_call.1} parent=1 // pred_region
      _
    $region37: #{tpu_custom_call.1} parent=1 // pred_fallthru
      _
    // Predicated region
    $region38: #{tpu_custom_call.1} parent=1 // pred_check
      _
    $region39: #{tpu_custom_call.1} parent=1 // pred_check_branch
      %42 = sbr.rel (0) target = $region41
    $region40: #{tpu_custom_call.1} parent=1 // pred_region
      _
    $region41: #{tpu_custom_call.1} parent=1 // pred_fallthru
      _
    // Predicated region
    $region42: #{tpu_custom_call.1} parent=1 // pred_check
      _
    $region43: #{tpu_custom_call.1} parent=1 // pred_check_branch
      %44 = sbr.rel (0) target = $region45
    $region44: #{tpu_custom_call.1} parent=1 // pred_region
      _
    $region45: #{tpu_custom_call.1} parent=1 // pred_fallthru
      _
    // Predicated region
    $region46: #{tpu_custom_call.1} parent=1 // pred_check
      _
    $region47: #{tpu_custom_call.1} parent=1 // pred_check_branch
      %46 = sbr.rel (0) target = $region49
    $region48: #{tpu_custom_call.1} parent=1 // pred_region
      _
    $region49: #{tpu_custom_call.1} parent=1 // pred_fallthru
      _
    // Predicated region
    $region50: #{tpu_custom_call.1} parent=1 // pred_check
      _
    $region51: #{tpu_custom_call.1} parent=1 // pred_check_branch
      %48 = sbr.rel (0) target = $region53
    $region52: #{tpu_custom_call.1} parent=1 // pred_region
      _
    $region53: #{tpu_custom_call.1} parent=1 // pred_fallthru
      _
    %p50 = scmp.eq.s32.totalorder 0, 0
    // Predicated region
    $region54: #{tpu_custom_call.1} parent=1 // pred_check
      %p51 = pneg %p50
    $region55: #{tpu_custom_call.1} parent=1 // pred_check_branch
      %53 = sbr.rel (%p51) target = $region57
    $region56: #{tpu_custom_call.1} parent=1 // pred_region
      %vm54 = vcmask 0
      %55 = vst.msk [vmem:[#allocation2] sm:$0x1] %vm54, 0.0
      %56 = vst.msk [vmem:[#allocation4] sm:$0x1] %vm54, 0.0
    $region57: #{tpu_custom_call.1} parent=1 // pred_fallthru
      _
    %v57 = vld [vmem:[%s0] sm:$0xff]
    %v58 = vld [vmem:[%s0 + $0x8] sm:$0xff]
    %v59 = vld [vmem:[%s0 + $0x10] sm:$0xff]
    %v60 = vld [vmem:[%s0 + $0x18] sm:$0xff]
    %v61 = vld [vmem:[%s0 + $0x20] sm:$0xff]
    %v62 = vld [vmem:[%s0 + $0x28] sm:$0xff]
    %v63 = vld [vmem:[%s0 + $0x30] sm:$0xff]
    %v64 = vld [vmem:[%s0 + $0x38] sm:$0xff]
    %v65 = vld [vmem:[%s0 + $0x40] sm:$0xff]
    %v66 = vld [vmem:[%s0 + $0x48] sm:$0xff]
    %v67 = vld [vmem:[%s0 + $0x50] sm:$0xff]
    %v68 = vld [vmem:[%s0 + $0x58] sm:$0xff]
    %v69 = vld [vmem:[%s0 + $0x60] sm:$0xff]
    %v70 = vld [vmem:[%s0 + $0x68] sm:$0xff]
    %v71 = vld [vmem:[%s0 + $0x70] sm:$0xff]
    %v72 = vld [vmem:[%s0 + $0x78] sm:$0xff]
    %v73 = vld [vmem:[%s0 + $0x80] sm:$0xff]
    %v74 = vld [vmem:[%s0 + $0x88] sm:$0xff]
    %v75 = vld [vmem:[%s0 + $0x90] sm:$0xff]
    %v76 = vld [vmem:[%s0 + $0x98] sm:$0xff]
    %v77 = vld [vmem:[%s0 + $0xa0] sm:$0xff]
    %v78 = vld [vmem:[%s0 + $0xa8] sm:$0xff]
    %v79 = vld [vmem:[%s0 + $0xb0] sm:$0xff]
    %v80 = vld [vmem:[%s0 + $0xb8] sm:$0xff]
    %v81 = vld [vmem:[%s0 + $0xc0] sm:$0xff]
    %v82 = vld [vmem:[%s0 + $0xc8] sm:$0xff]
    %v83 = vld [vmem:[%s0 + $0xd0] sm:$0xff]
    %v84 = vld [vmem:[%s0 + $0xd8] sm:$0xff]
    %v85 = vld [vmem:[%s0 + $0xe0] sm:$0xff]
    %v86 = vld [vmem:[%s0 + $0xe8] sm:$0xff]
    %v87 = vld [vmem:[%s0 + $0xf0] sm:$0xff]
    %v88 = vld [vmem:[%s0 + $0xf8] sm:$0xff]
    %v89 = vld [vmem:[%s0 + $0x100] sm:$0xff]
    %v90 = vld [vmem:[%s0 + $0x108] sm:$0xff]
    %v91 = vld [vmem:[%s0 + $0x110] sm:$0xff]
    %v92 = vld [vmem:[%s0 + $0x118] sm:$0xff]
    %v93 = vld [vmem:[%s0 + $0x120] sm:$0xff]
    %v94 = vld [vmem:[%s0 + $0x128] sm:$0xff]
    %v95 = vld [vmem:[%s0 + $0x130] sm:$0xff]
    %v96 = vld [vmem:[%s0 + $0x138] sm:$0xff]
    %v97 = vld [vmem:[%s0 + $0x140] sm:$0xff]
    %v98 = vld [vmem:[%s0 + $0x148] sm:$0xff]
    %v99 = vld [vmem:[%s0 + $0x150] sm:$0xff]
    %v100 = vld [vmem:[%s0 + $0x158] sm:$0xff]
    %v101 = vld [vmem:[%s0 + $0x160] sm:$0xff]
    %v102 = vld [vmem:[%s0 + $0x168] sm:$0xff]
    %v103 = vld [vmem:[%s0 + $0x170] sm:$0xff]
    %v104 = vld [vmem:[%s0 + $0x178] sm:$0xff]
    %v105 = vld [vmem:[%s0 + $0x180] sm:$0xff]
    %v106 = vld [vmem:[%s0 + $0x188] sm:$0xff]
    %v107 = vld [vmem:[%s0 + $0x190] sm:$0xff]
    %v108 = vld [vmem:[%s0 + $0x198] sm:$0xff]
    %v109 = vld [vmem:[%s0 + $0x1a0] sm:$0xff]
    %v110 = vld [vmem:[%s0 + $0x1a8] sm:$0xff]
    %v111 = vld [vmem:[%s0 + $0x1b0] sm:$0xff]
    %v112 = vld [vmem:[%s0 + $0x1b8] sm:$0xff]
    %v113 = vld [vmem:[%s0 + $0x1c0] sm:$0xff]
    %v114 = vld [vmem:[%s0 + $0x1c8] sm:$0xff]
    %v115 = vld [vmem:[%s0 + $0x1d0] sm:$0xff]
    %v116 = vld [vmem:[%s0 + $0x1d8] sm:$0xff]
    %v117 = vld [vmem:[%s0 + $0x1e0] sm:$0xff]
    %v118 = vld [vmem:[%s0 + $0x1e8] sm:$0xff]
    %v119 = vld [vmem:[%s0 + $0x1f0] sm:$0xff]
    %v120 = vld [vmem:[%s0 + $0x1f8] sm:$0xff]
    %v121 = vpack.c.bf16 %v58, %v57
    %v122 = vpack.c.bf16 %v60, %v59
    %v123 = vpack.c.bf16 %v62, %v61
    %v124 = vpack.c.bf16 %v64, %v63
    %v125 = vpack.c.bf16 %v66, %v65
    %v126 = vpack.c.bf16 %v68, %v67
    %v127 = vpack.c.bf16 %v70, %v69
    %v128 = vpack.c.bf16 %v72, %v71
    %v129 = vpack.c.bf16 %v74, %v73
    %v130 = vpack.c.bf16 %v76, %v75
    %v131 = vpack.c.bf16 %v78, %v77
    %v132 = vpack.c.bf16 %v80, %v79
    %v133 = vpack.c.bf16 %v82, %v81
    %v134 = vpack.c.bf16 %v84, %v83
    %v135 = vpack.c.bf16 %v86, %v85
    %v136 = vpack.c.bf16 %v88, %v87
    %v137 = vpack.c.bf16 %v90, %v89
    %v138 = vpack.c.bf16 %v92, %v91
    %v139 = vpack.c.bf16 %v94, %v93
    %v140 = vpack.c.bf16 %v96, %v95
    %v141 = vpack.c.bf16 %v98, %v97
    %v142 = vpack.c.bf16 %v100, %v99
    %v143 = vpack.c.bf16 %v102, %v101
    %v144 = vpack.c.bf16 %v104, %v103
    %v145 = vpack.c.bf16 %v106, %v105
    %v146 = vpack.c.bf16 %v108, %v107
    %v147 = vpack.c.bf16 %v110, %v109
    %v148 = vpack.c.bf16 %v112, %v111
    %v149 = vpack.c.bf16 %v114, %v113
    %v150 = vpack.c.bf16 %v116, %v115
    %v151 = vpack.c.bf16 %v118, %v117
    %v152 = vpack.c.bf16 %v120, %v119
    %v153 = vld [vmem:[%s1] sm:$0xff]
    %v154 = vld [vmem:[%s1 + $0x8] sm:$0xff]
    %v155 = vld [vmem:[%s1 + $0x10] sm:$0xff]
    %v156 = vld [vmem:[%s1 + $0x18] sm:$0xff]
    %v157 = vld [vmem:[%s1 + $0x20] sm:$0xff]
    %v158 = vld [vmem:[%s1 + $0x28] sm:$0xff]
    %v159 = vld [vmem:[%s1 + $0x30] sm:$0xff]
    %v160 = vld [vmem:[%s1 + $0x38] sm:$0xff]
    %v161 = vld [vmem:[%s1 + $0x40] sm:$0xff]
    %v162 = vld [vmem:[%s1 + $0x48] sm:$0xff]
    %v163 = vld [vmem:[%s1 + $0x50] sm:$0xff]
    %v164 = vld [vmem:[%s1 + $0x58] sm:$0xff]
    %v165 = vld [vmem:[%s1 + $0x60] sm:$0xff]
    %v166 = vld [vmem:[%s1 + $0x68] sm:$0xff]
    %v167 = vld [vmem:[%s1 + $0x70] sm:$0xff]
    %v168 = vld [vmem:[%s1 + $0x78] sm:$0xff]
    %v169 = vld [vmem:[%s1 + $0x80] sm:$0xff]
    %v170 = vld [vmem:[%s1 + $0x88] sm:$0xff]
    %v171 = vld [vmem:[%s1 + $0x90] sm:$0xff]
    %v172 = vld [vmem:[%s1 + $0x98] sm:$0xff]
    %v173 = vld [vmem:[%s1 + $0xa0] sm:$0xff]
    %v174 = vld [vmem:[%s1 + $0xa8] sm:$0xff]
    %v175 = vld [vmem:[%s1 + $0xb0] sm:$0xff]
    %v176 = vld [vmem:[%s1 + $0xb8] sm:$0xff]
    %v177 = vld [vmem:[%s1 + $0xc0] sm:$0xff]
    %v178 = vld [vmem:[%s1 + $0xc8] sm:$0xff]
    %v179 = vld [vmem:[%s1 + $0xd0] sm:$0xff]
    %v180 = vld [vmem:[%s1 + $0xd8] sm:$0xff]
    %v181 = vld [vmem:[%s1 + $0xe0] sm:$0xff]
    %v182 = vld [vmem:[%s1 + $0xe8] sm:$0xff]
    %v183 = vld [vmem:[%s1 + $0xf0] sm:$0xff]
    %v184 = vld [vmem:[%s1 + $0xf8] sm:$0xff]
    %v185 = vld [vmem:[%s1 + $0x100] sm:$0xff]
    %v186 = vld [vmem:[%s1 + $0x108] sm:$0xff]
    %v187 = vld [vmem:[%s1 + $0x110] sm:$0xff]
    %v188 = vld [vmem:[%s1 + $0x118] sm:$0xff]
    %v189 = vld [vmem:[%s1 + $0x120] sm:$0xff]
    %v190 = vld [vmem:[%s1 + $0x128] sm:$0xff]
    %v191 = vld [vmem:[%s1 + $0x130] sm:$0xff]
    %v192 = vld [vmem:[%s1 + $0x138] sm:$0xff]
    %v193 = vld [vmem:[%s1 + $0x140] sm:$0xff]
    %v194 = vld [vmem:[%s1 + $0x148] sm:$0xff]
    %v195 = vld [vmem:[%s1 + $0x150] sm:$0xff]
    %v196 = vld [vmem:[%s1 + $0x158] sm:$0xff]
    %v197 = vld [vmem:[%s1 + $0x160] sm:$0xff]
    %v198 = vld [vmem:[%s1 + $0x168] sm:$0xff]
    %v199 = vld [vmem:[%s1 + $0x170] sm:$0xff]
    %v200 = vld [vmem:[%s1 + $0x178] sm:$0xff]
    %v201 = vld [vmem:[%s1 + $0x180] sm:$0xff]
    %v202 = vld [vmem:[%s1 + $0x188] sm:$0xff]
    %v203 = vld [vmem:[%s1 + $0x190] sm:$0xff]
    %v204 = vld [vmem:[%s1 + $0x198] sm:$0xff]
    %v205 = vld [vmem:[%s1 + $0x1a0] sm:$0xff]
    %v206 = vld [vmem:[%s1 + $0x1a8] sm:$0xff]
    %v207 = vld [vmem:[%s1 + $0x1b0] sm:$0xff]
    %v208 = vld [vmem:[%s1 + $0x1b8] sm:$0xff]
    %v209 = vld [vmem:[%s1 + $0x1c0] sm:$0xff]
    %v210 = vld [vmem:[%s1 + $0x1c8] sm:$0xff]
    %v211 = vld [vmem:[%s1 + $0x1d0] sm:$0xff]
    %v212 = vld [vmem:[%s1 + $0x1d8] sm:$0xff]
    %v213 = vld [vmem:[%s1 + $0x1e0] sm:$0xff]
    %v214 = vld [vmem:[%s1 + $0x1e8] sm:$0xff]
    %v215 = vld [vmem:[%s1 + $0x1f0] sm:$0xff]
    %v216 = vld [vmem:[%s1 + $0x1f8] sm:$0xff]
    %v217 = vpack.c.bf16 %v154, %v153
    %v218 = vpack.c.bf16 %v156, %v155
    %v219 = vpack.c.bf16 %v158, %v157
    %v220 = vpack.c.bf16 %v160, %v159
    %v221 = vpack.c.bf16 %v162, %v161
    %v222 = vpack.c.bf16 %v164, %v163
    %v223 = vpack.c.bf16 %v166, %v165
    %v224 = vpack.c.bf16 %v168, %v167
    %v225 = vpack.c.bf16 %v170, %v169
    %v226 = vpack.c.bf16 %v172, %v171
    %v227 = vpack.c.bf16 %v174, %v173
    %v228 = vpack.c.bf16 %v176, %v175
    %v229 = vpack.c.bf16 %v178, %v177
    %v230 = vpack.c.bf16 %v180, %v179
    %v231 = vpack.c.bf16 %v182, %v181
    %v232 = vpack.c.bf16 %v184, %v183
    %v233 = vpack.c.bf16 %v186, %v185
    %v234 = vpack.c.bf16 %v188, %v187
    %v235 = vpack.c.bf16 %v190, %v189
    %v236 = vpack.c.bf16 %v192, %v191
    %v237 = vpack.c.bf16 %v194, %v193
    %v238 = vpack.c.bf16 %v196, %v195
    %v239 = vpack.c.bf16 %v198, %v197
    %v240 = vpack.c.bf16 %v200, %v199
    %v241 = vpack.c.bf16 %v202, %v201
    %v242 = vpack.c.bf16 %v204, %v203
    %v243 = vpack.c.bf16 %v206, %v205
    %v244 = vpack.c.bf16 %v208, %v207
    %v245 = vpack.c.bf16 %v210, %v209
    %v246 = vpack.c.bf16 %v212, %v211
    %v247 = vpack.c.bf16 %v214, %v213
    %v248 = vpack.c.bf16 %v216, %v215
    %v249 = vld [vmem:[%s2] sm:$0xff]
    %v250 = vld [vmem:[%s2 + $0x8] sm:$0xff]
    %v251 = vld [vmem:[%s2 + $0x10] sm:$0xff]
    %v252 = vld [vmem:[%s2 + $0x18] sm:$0xff]
    %v253 = vld [vmem:[%s2 + $0x20] sm:$0xff]
    %v254 = vld [vmem:[%s2 + $0x28] sm:$0xff]
    %v255 = vld [vmem:[%s2 + $0x30] sm:$0xff]
    %v256 = vld [vmem:[%s2 + $0x38] sm:$0xff]
    %v257 = vld [vmem:[%s2 + $0x40] sm:$0xff]
    %v258 = vld [vmem:[%s2 + $0x48] sm:$0xff]
    %v259 = vld [vmem:[%s2 + $0x50] sm:$0xff]
    %v260 = vld [vmem:[%s2 + $0x58] sm:$0xff]
    %v261 = vld [vmem:[%s2 + $0x60] sm:$0xff]
    %v262 = vld [vmem:[%s2 + $0x68] sm:$0xff]
    %v263 = vld [vmem:[%s2 + $0x70] sm:$0xff]
    %v264 = vld [vmem:[%s2 + $0x78] sm:$0xff]
    %v265 = vld [vmem:[%s2 + $0x80] sm:$0xff]
    %v266 = vld [vmem:[%s2 + $0x88] sm:$0xff]
    %v267 = vld [vmem:[%s2 + $0x90] sm:$0xff]
    %v268 = vld [vmem:[%s2 + $0x98] sm:$0xff]
    %v269 = vld [vmem:[%s2 + $0xa0] sm:$0xff]
    %v270 = vld [vmem:[%s2 + $0xa8] sm:$0xff]
    %v271 = vld [vmem:[%s2 + $0xb0] sm:$0xff]
    %v272 = vld [vmem:[%s2 + $0xb8] sm:$0xff]
    %v273 = vld [vmem:[%s2 + $0xc0] sm:$0xff]
    %v274 = vld [vmem:[%s2 + $0xc8] sm:$0xff]
    %v275 = vld [vmem:[%s2 + $0xd0] sm:$0xff]
    %v276 = vld [vmem:[%s2 + $0xd8] sm:$0xff]
    %v277 = vld [vmem:[%s2 + $0xe0] sm:$0xff]
    %v278 = vld [vmem:[%s2 + $0xe8] sm:$0xff]
    %v279 = vld [vmem:[%s2 + $0xf0] sm:$0xff]
    %v280 = vld [vmem:[%s2 + $0xf8] sm:$0xff]
    %v281 = vld [vmem:[%s2 + $0x100] sm:$0xff]
    %v282 = vld [vmem:[%s2 + $0x108] sm:$0xff]
    %v283 = vld [vmem:[%s2 + $0x110] sm:$0xff]
    %v284 = vld [vmem:[%s2 + $0x118] sm:$0xff]
    %v285 = vld [vmem:[%s2 + $0x120] sm:$0xff]
    %v286 = vld [vmem:[%s2 + $0x128] sm:$0xff]
    %v287 = vld [vmem:[%s2 + $0x130] sm:$0xff]
    %v288 = vld [vmem:[%s2 + $0x138] sm:$0xff]
    %v289 = vld [vmem:[%s2 + $0x140] sm:$0xff]
    %v290 = vld [vmem:[%s2 + $0x148] sm:$0xff]
    %v291 = vld [vmem:[%s2 + $0x150] sm:$0xff]
    %v292 = vld [vmem:[%s2 + $0x158] sm:$0xff]
    %v293 = vld [vmem:[%s2 + $0x160] sm:$0xff]
    %v294 = vld [vmem:[%s2 + $0x168] sm:$0xff]
    %v295 = vld [vmem:[%s2 + $0x170] sm:$0xff]
    %v296 = vld [vmem:[%s2 + $0x178] sm:$0xff]
    %v297 = vld [vmem:[%s2 + $0x180] sm:$0xff]
    %v298 = vld [vmem:[%s2 + $0x188] sm:$0xff]
    %v299 = vld [vmem:[%s2 + $0x190] sm:$0xff]
    %v300 = vld [vmem:[%s2 + $0x198] sm:$0xff]
    %v301 = vld [vmem:[%s2 + $0x1a0] sm:$0xff]
    %v302 = vld [vmem:[%s2 + $0x1a8] sm:$0xff]
    %v303 = vld [vmem:[%s2 + $0x1b0] sm:$0xff]
    %v304 = vld [vmem:[%s2 + $0x1b8] sm:$0xff]
    %v305 = vld [vmem:[%s2 + $0x1c0] sm:$0xff]
    %v306 = vld [vmem:[%s2 + $0x1c8] sm:$0xff]
    %v307 = vld [vmem:[%s2 + $0x1d0] sm:$0xff]
    %v308 = vld [vmem:[%s2 + $0x1d8] sm:$0xff]
    %v309 = vld [vmem:[%s2 + $0x1e0] sm:$0xff]
    %v310 = vld [vmem:[%s2 + $0x1e8] sm:$0xff]
    %v311 = vld [vmem:[%s2 + $0x1f0] sm:$0xff]
    %v312 = vld [vmem:[%s2 + $0x1f8] sm:$0xff]
    %v313 = vpack.c.bf16 %v250, %v249
    %v314 = vpack.c.bf16 %v252, %v251
    %v315 = vpack.c.bf16 %v254, %v253
    %v316 = vpack.c.bf16 %v256, %v255
    %v317 = vpack.c.bf16 %v258, %v257
    %v318 = vpack.c.bf16 %v260, %v259
    %v319 = vpack.c.bf16 %v262, %v261
    %v320 = vpack.c.bf16 %v264, %v263
    %v321 = vpack.c.bf16 %v266, %v265
    %v322 = vpack.c.bf16 %v268, %v267
    %v323 = vpack.c.bf16 %v270, %v269
    %v324 = vpack.c.bf16 %v272, %v271
    %v325 = vpack.c.bf16 %v274, %v273
    %v326 = vpack.c.bf16 %v276, %v275
    %v327 = vpack.c.bf16 %v278, %v277
    %v328 = vpack.c.bf16 %v280, %v279
    %v329 = vpack.c.bf16 %v282, %v281
    %v330 = vpack.c.bf16 %v284, %v283
    %v331 = vpack.c.bf16 %v286, %v285
    %v332 = vpack.c.bf16 %v288, %v287
    %v333 = vpack.c.bf16 %v290, %v289
    %v334 = vpack.c.bf16 %v292, %v291
    %v335 = vpack.c.bf16 %v294, %v293
    %v336 = vpack.c.bf16 %v296, %v295
    %v337 = vpack.c.bf16 %v298, %v297
    %v338 = vpack.c.bf16 %v300, %v299
    %v339 = vpack.c.bf16 %v302, %v301
    %v340 = vpack.c.bf16 %v304, %v303
    %v341 = vpack.c.bf16 %v306, %v305
    %v342 = vpack.c.bf16 %v308, %v307
    %v343 = vpack.c.bf16 %v310, %v309
    %v344 = vpack.c.bf16 %v312, %v311
    %v345 = vld [vmem:[%s3] sm:$0xf]
    %v346 = vld [vmem:[%s3 + $0x4] sm:$0xf]
    %v347 = vld [vmem:[%s4] sm:$0x1]
    %v349 = vlaneseq
    %v350 = vshrl.u32 %v349, 7
    %v351 = vsub.s32 0, %v350
    %v352 = vrot.slane %v347, %v351
    %v356 = vunpack.c.l.b16 %v345
    %v357 = vunpack.c.l.b16 %v346
    %v358 = vpack.c.b16 %v357, %v356
    %vm360 = vcmask 130048
    %v362 = vsel %vm360, %v217, 0
    %v365 = vsel %vm360, %v218, 0
    %v368 = vsel %vm360, %v219, 0
    %v371 = vsel %vm360, %v220, 0
    %v374 = vsel %vm360, %v221, 0
    %v377 = vsel %vm360, %v222, 0
    %v380 = vsel %vm360, %v223, 0
    %v383 = vsel %vm360, %v224, 0
    %v386 = vsel %vm360, %v225, 0
    %v389 = vsel %vm360, %v226, 0
    %v392 = vsel %vm360, %v227, 0
    %v395 = vsel %vm360, %v228, 0
    %v398 = vsel %vm360, %v229, 0
    %v401 = vsel %vm360, %v230, 0
    %v404 = vsel %vm360, %v231, 0
    %v407 = vsel %vm360, %v232, 0
    %v410 = vsel %vm360, %v233, 0
    %v413 = vsel %vm360, %v234, 0
    %v416 = vsel %vm360, %v235, 0
    %v419 = vsel %vm360, %v236, 0
    %v422 = vsel %vm360, %v237, 0
    %v425 = vsel %vm360, %v238, 0
    %v428 = vsel %vm360, %v239, 0
    %v431 = vsel %vm360, %v240, 0
    %v434 = vsel %vm360, %v241, 0
    %v437 = vsel %vm360, %v242, 0
    %v440 = vsel %vm360, %v243, 0
    %v443 = vsel %vm360, %v244, 0
    %v446 = vsel %vm360, %v245, 0
    %v449 = vsel %vm360, %v246, 0
    %v452 = vsel %vm360, %v247, 0
    %v455 = vsel %vm360, %v248, 0
    %457 = vmatprep.subr.bf16.mxu0 0
    %458 = vmatpush1.bf16.msra.mxu0 %v358
    %459 = vmatprep.subr.bf16.mxu0 0
    %460 = vmatpush1.bf16.msra.mxu0 0
    %461 = vmatprep.subr.bf16.mxu0 0
    %462 = vmatpush1.bf16.msra.mxu0 0
    %463 = vmatprep.subr.bf16.mxu0 0
    %464 = vmatpush1.bf16.msra.mxu0 0
    %465 = vmatprep.subr.bf16.mxu0 0
    %466 = vmatpush1.bf16.msra.mxu0 0
    %467 = vmatprep.subr.bf16.mxu0 0
    %468 = vmatpush1.bf16.msra.mxu0 0
    %469 = vmatprep.subr.bf16.mxu0 0
    %470 = vmatpush1.bf16.msra.mxu0 0
    %471 = vmatprep.subr.bf16.mxu0 0
    %472 = vmatpush1.bf16.msra.mxu0 0
    %473 = vmatprep.subr.bf16.mxu0 0
    %474 = vmatpush1.bf16.msra.mxu0 0
    %475 = vmatprep.subr.bf16.mxu0 0
    %476 = vmatpush1.bf16.msra.mxu0 0
    %477 = vmatprep.subr.bf16.mxu0 0
    %478 = vmatpush1.bf16.msra.mxu0 0
    %479 = vmatprep.subr.bf16.mxu0 0
    %480 = vmatpush1.bf16.msra.mxu0 0
    %481 = vmatprep.subr.bf16.mxu0 0
    %482 = vmatpush1.bf16.msra.mxu0 0
    %483 = vmatprep.subr.bf16.mxu0 0
    %484 = vmatpush1.bf16.msra.mxu0 0
    %485 = vmatprep.subr.bf16.mxu0 0
    %486 = vmatpush1.bf16.msra.mxu0 0
    %487 = vmatprep.subr.bf16.mxu0 0
    %488 = vmatpush1.bf16.msra.mxu0 0
    %489 = vmatprep.mubr.bf16.mxu0 0
    %490 = vmatmul.mubr.bf16.gmra.mrb[0].mxu0 %v362
    %v491 = vpop.f32.mrb[0].mxu0
    %v492 = vadd.f32 %v352, %v491
    %v493 = vpop.f32.mrb[0].mxu0
    %v494 = vpop.f32.mrb[0].mxu0
    %v495 = vadd.f32 %v352, %v494
    %v496 = vpop.f32.mrb[0].mxu0
    %497 = vmatprep.mubr.bf16.mxu0 0
    %498 = vmatmul.mubr.bf16.gmra.mrb[0].mxu0 %v365
    %v499 = vpop.f32.mrb[0].mxu0
    %v500 = vadd.f32 %v352, %v499
    %v501 = vpop.f32.mrb[0].mxu0
    %v502 = vpop.f32.mrb[0].mxu0
    %v503 = vadd.f32 %v352, %v502
    %v504 = vpop.f32.mrb[0].mxu0
    %505 = vmatprep.mubr.bf16.mxu0 0
    %506 = vmatmul.mubr.bf16.gmra.mrb[0].mxu0 %v368
    %v507 = vpop.f32.mrb[0].mxu0
    %v508 = vadd.f32 %v352, %v507
    %v509 = vpop.f32.mrb[0].mxu0
    %v510 = vpop.f32.mrb[0].mxu0
    %v511 = vadd.f32 %v352, %v510
    %v512 = vpop.f32.mrb[0].mxu0
    %513 = vmatprep.mubr.bf16.mxu0 0
    %514 = vmatmul.mubr.bf16.gmra.mrb[0].mxu0 %v371
    %v515 = vpop.f32.mrb[0].mxu0
    %v516 = vadd.f32 %v352, %v515
    %v517 = vpop.f32.mrb[0].mxu0
    %v518 = vpop.f32.mrb[0].mxu0
    %v519 = vadd.f32 %v352, %v518
    %v520 = vpop.f32.mrb[0].mxu0
    %521 = vmatprep.mubr.bf16.mxu0 0
    %522 = vmatmul.mubr.bf16.gmra.mrb[0].mxu0 %v374
    %v523 = vpop.f32.mrb[0].mxu0
    %v524 = vadd.f32 %v352, %v523
    %v525 = vpop.f32.mrb[0].mxu0
    %v526 = vpop.f32.mrb[0].mxu0
    %v527 = vadd.f32 %v352, %v526
    %v528 = vpop.f32.mrb[0].mxu0
    %529 = vmatprep.mubr.bf16.mxu0 0
    %530 = vmatmul.mubr.bf16.gmra.mrb[0].mxu0 %v377
    %v531 = vpop.f32.mrb[0].mxu0
    %v532 = vadd.f32 %v352, %v531
    %v533 = vpop.f32.mrb[0].mxu0
    %v534 = vpop.f32.mrb[0].mxu0
    %v535 = vadd.f32 %v352, %v534
    %v536 = vpop.f32.mrb[0].mxu0
    %537 = vmatprep.mubr.bf16.mxu0 0
    %538 = vmatmul.mubr.bf16.gmra.mrb[0].mxu0 %v380
    %v539 = vpop.f32.mrb[0].mxu0
    %v540 = vadd.f32 %v352, %v539
    %v541 = vpop.f32.mrb[0].mxu0
    %v542 = vpop.f32.mrb[0].mxu0
    %v543 = vadd.f32 %v352, %v542
    %v544 = vpop.f32.mrb[0].mxu0
    %545 = vmatprep.mubr.bf16.mxu0 0
    %546 = vmatmul.mubr.bf16.gmra.mrb[0].mxu0 %v383
    %v547 = vpop.f32.mrb[0].mxu0
    %v548 = vadd.f32 %v352, %v547
    %v549 = vpop.f32.mrb[0].mxu0
    %v550 = vpop.f32.mrb[0].mxu0
    %v551 = vadd.f32 %v352, %v550
    %v552 = vpop.f32.mrb[0].mxu0
    %553 = vmatprep.mubr.bf16.mxu0 0
    %554 = vmatmul.mubr.bf16.gmra.mrb[0].mxu0 %v386
    %v555 = vpop.f32.mrb[0].mxu0
    %v556 = vadd.f32 %v352, %v555
    %v557 = vpop.f32.mrb[0].mxu0
    %v558 = vpop.f32.mrb[0].mxu0
    %v559 = vadd.f32 %v352, %v558
    %v560 = vpop.f32.mrb[0].mxu0
    %561 = vmatprep.mubr.bf16.mxu0 0
    %562 = vmatmul.mubr.bf16.gmra.mrb[0].mxu0 %v389
    %v563 = vpop.f32.mrb[0].mxu0
    %v564 = vadd.f32 %v352, %v563
    %v565 = vpop.f32.mrb[0].mxu0
    %v566 = vpop.f32.mrb[0].mxu0
    %v567 = vadd.f32 %v352, %v566
    %v568 = vpop.f32.mrb[0].mxu0
    %569 = vmatprep.mubr.bf16.mxu0 0
    %570 = vmatmul.mubr.bf16.gmra.mrb[0].mxu0 %v392
    %v571 = vpop.f32.mrb[0].mxu0
    %v572 = vadd.f32 %v352, %v571
    %v573 = vpop.f32.mrb[0].mxu0
    %v574 = vpop.f32.mrb[0].mxu0
    %v575 = vadd.f32 %v352, %v574
    %v576 = vpop.f32.mrb[0].mxu0
    %577 = vmatprep.mubr.bf16.mxu0 0
    %578 = vmatmul.mubr.bf16.gmra.mrb[0].mxu0 %v395
    %v579 = vpop.f32.mrb[0].mxu0
    %v580 = vadd.f32 %v352, %v579
    %v581 = vpop.f32.mrb[0].mxu0
    %v582 = vpop.f32.mrb[0].mxu0
    %v583 = vadd.f32 %v352, %v582
    %v584 = vpop.f32.mrb[0].mxu0
    %585 = vmatprep.mubr.bf16.mxu0 0
    %586 = vmatmul.mubr.bf16.gmra.mrb[0].mxu0 %v398
    %v587 = vpop.f32.mrb[0].mxu0
    %v588 = vadd.f32 %v352, %v587
    %v589 = vpop.f32.mrb[0].mxu0
    %v590 = vpop.f32.mrb[0].mxu0
    %v591 = vadd.f32 %v352, %v590
    %v592 = vpop.f32.mrb[0].mxu0
    %593 = vmatprep.mubr.bf16.mxu0 0
    %594 = vmatmul.mubr.bf16.gmra.mrb[0].mxu0 %v401
    %v595 = vpop.f32.mrb[0].mxu0
    %v596 = vadd.f32 %v352, %v595
    %v597 = vpop.f32.mrb[0].mxu0
    %v598 = vpop.f32.mrb[0].mxu0
    %v599 = vadd.f32 %v352, %v598
    %v600 = vpop.f32.mrb[0].mxu0
    %601 = vmatprep.mubr.bf16.mxu0 0
    %602 = vmatmul.mubr.bf16.gmra.mrb[0].mxu0 %v404
    %v603 = vpop.f32.mrb[0].mxu0
    %v604 = vadd.f32 %v352, %v603
    %v605 = vpop.f32.mrb[0].mxu0
    %v606 = vpop.f32.mrb[0].mxu0
    %v607 = vadd.f32 %v352, %v606
    %v608 = vpop.f32.mrb[0].mxu0
    %609 = vmatprep.mubr.bf16.mxu0 0
    %610 = vmatmul.mubr.bf16.gmra.mrb[0].mxu0 %v407
    %v611 = vpop.f32.mrb[0].mxu0
    %v612 = vadd.f32 %v352, %v611
    %v613 = vpop.f32.mrb[0].mxu0
    %v614 = vpop.f32.mrb[0].mxu0
    %v615 = vadd.f32 %v352, %v614
    %v616 = vpop.f32.mrb[0].mxu0
    %617 = vmatprep.mubr.bf16.mxu0 0
    %618 = vmatmul.mubr.bf16.gmra.mrb[0].mxu0 %v410
    %v619 = vpop.f32.mrb[0].mxu0
    %v620 = vadd.f32 %v352, %v619
    %v621 = vpop.f32.mrb[0].mxu0
    %v622 = vpop.f32.mrb[0].mxu0
    %v623 = vadd.f32 %v352, %v622
    %v624 = vpop.f32.mrb[0].mxu0
    %625 = vmatprep.mubr.bf16.mxu0 0
    %626 = vmatmul.mubr.bf16.gmra.mrb[0].mxu0 %v413
    %v627 = vpop.f32.mrb[0].mxu0
    %v628 = vadd.f32 %v352, %v627
    %v629 = vpop.f32.mrb[0].mxu0
    %v630 = vpop.f32.mrb[0].mxu0
    %v631 = vadd.f32 %v352, %v630
    %v632 = vpop.f32.mrb[0].mxu0
    %633 = vmatprep.mubr.bf16.mxu0 0
    %634 = vmatmul.mubr.bf16.gmra.mrb[0].mxu0 %v416
    %v635 = vpop.f32.mrb[0].mxu0
    %v636 = vadd.f32 %v352, %v635
    %v637 = vpop.f32.mrb[0].mxu0
    %v638 = vpop.f32.mrb[0].mxu0
    %v639 = vadd.f32 %v352, %v638
    %v640 = vpop.f32.mrb[0].mxu0
    %641 = vmatprep.mubr.bf16.mxu0 0
    %642 = vmatmul.mubr.bf16.gmra.mrb[0].mxu0 %v419
    %v643 = vpop.f32.mrb[0].mxu0
    %v644 = vadd.f32 %v352, %v643
    %v645 = vpop.f32.mrb[0].mxu0
    %v646 = vpop.f32.mrb[0].mxu0
    %v647 = vadd.f32 %v352, %v646
    %v648 = vpop.f32.mrb[0].mxu0
    %649 = vmatprep.mubr.bf16.mxu0 0
    %650 = vmatmul.mubr.bf16.gmra.mrb[0].mxu0 %v422
    %v651 = vpop.f32.mrb[0].mxu0
    %v652 = vadd.f32 %v352, %v651
    %v653 = vpop.f32.mrb[0].mxu0
    %v654 = vpop.f32.mrb[0].mxu0
    %v655 = vadd.f32 %v352, %v654
    %v656 = vpop.f32.mrb[0].mxu0
    %657 = vmatprep.mubr.bf16.mxu0 0
    %658 = vmatmul.mubr.bf16.gmra.mrb[0].mxu0 %v425
    %v659 = vpop.f32.mrb[0].mxu0
    %v660 = vadd.f32 %v352, %v659
    %v661 = vpop.f32.mrb[0].mxu0
    %v662 = vpop.f32.mrb[0].mxu0
    %v663 = vadd.f32 %v352, %v662
    %v664 = vpop.f32.mrb[0].mxu0
    %665 = vmatprep.mubr.bf16.mxu0 0
    %666 = vmatmul.mubr.bf16.gmra.mrb[0].mxu0 %v428
    %v667 = vpop.f32.mrb[0].mxu0
    %v668 = vadd.f32 %v352, %v667
    %v669 = vpop.f32.mrb[0].mxu0
    %v670 = vpop.f32.mrb[0].mxu0
    %v671 = vadd.f32 %v352, %v670
    %v672 = vpop.f32.mrb[0].mxu0
    %673 = vmatprep.mubr.bf16.mxu0 0
    %674 = vmatmul.mubr.bf16.gmra.mrb[0].mxu0 %v431
    %v675 = vpop.f32.mrb[0].mxu0
    %v676 = vadd.f32 %v352, %v675
    %v677 = vpop.f32.mrb[0].mxu0
    %v678 = vpop.f32.mrb[0].mxu0
    %v679 = vadd.f32 %v352, %v678
    %v680 = vpop.f32.mrb[0].mxu0
    %681 = vmatprep.mubr.bf16.mxu0 0
    %682 = vmatmul.mubr.bf16.gmra.mrb[0].mxu0 %v434
    %v683 = vpop.f32.mrb[0].mxu0
    %v684 = vadd.f32 %v352, %v683
    %v685 = vpop.f32.mrb[0].mxu0
    %v686 = vpop.f32.mrb[0].mxu0
    %v687 = vadd.f32 %v352, %v686
    %v688 = vpop.f32.mrb[0].mxu0
    %689 = vmatprep.mubr.bf16.mxu0 0
    %690 = vmatmul.mubr.bf16.gmra.mrb[0].mxu0 %v437
    %v691 = vpop.f32.mrb[0].mxu0
    %v692 = vadd.f32 %v352, %v691
    %v693 = vpop.f32.mrb[0].mxu0
    %v694 = vpop.f32.mrb[0].mxu0
    %v695 = vadd.f32 %v352, %v694
    %v696 = vpop.f32.mrb[0].mxu0
    %697 = vmatprep.mubr.bf16.mxu0 0
    %698 = vmatmul.mubr.bf16.gmra.mrb[0].mxu0 %v440
    %v699 = vpop.f32.mrb[0].mxu0
    %v700 = vadd.f32 %v352, %v699
    %v701 = vpop.f32.mrb[0].mxu0
    %v702 = vpop.f32.mrb[0].mxu0
    %v703 = vadd.f32 %v352, %v702
    %v704 = vpop.f32.mrb[0].mxu0
    %705 = vmatprep.mubr.bf16.mxu0 0
    %706 = vmatmul.mubr.bf16.gmra.mrb[0].mxu0 %v443
    %v707 = vpop.f32.mrb[0].mxu0
    %v708 = vadd.f32 %v352, %v707
    %v709 = vpop.f32.mrb[0].mxu0
    %v710 = vpop.f32.mrb[0].mxu0
    %v711 = vadd.f32 %v352, %v710
    %v712 = vpop.f32.mrb[0].mxu0
    %713 = vmatprep.mubr.bf16.mxu0 0
    %714 = vmatmul.mubr.bf16.gmra.mrb[0].mxu0 %v446
    %v715 = vpop.f32.mrb[0].mxu0
    %v716 = vadd.f32 %v352, %v715
    %v717 = vpop.f32.mrb[0].mxu0
    %v718 = vpop.f32.mrb[0].mxu0
    %v719 = vadd.f32 %v352, %v718
    %v720 = vpop.f32.mrb[0].mxu0
    %721 = vmatprep.mubr.bf16.mxu0 0
    %722 = vmatmul.mubr.bf16.gmra.mrb[0].mxu0 %v449
    %v723 = vpop.f32.mrb[0].mxu0
    %v724 = vadd.f32 %v352, %v723
    %v725 = vpop.f32.mrb[0].mxu0
    %v726 = vpop.f32.mrb[0].mxu0
    %v727 = vadd.f32 %v352, %v726
    %v728 = vpop.f32.mrb[0].mxu0
    %729 = vmatprep.mubr.bf16.mxu0 0
    %730 = vmatmul.mubr.bf16.gmra.mrb[0].mxu0 %v452
    %v731 = vpop.f32.mrb[0].mxu0
    %v732 = vadd.f32 %v352, %v731
    %v733 = vpop.f32.mrb[0].mxu0
    %v734 = vpop.f32.mrb[0].mxu0
    %v735 = vadd.f32 %v352, %v734
    %v736 = vpop.f32.mrb[0].mxu0
    %737 = vmatprep.mubr.bf16.mxu0 0
    %738 = vmatmul.mubr.bf16.gmra.mrb[0].mxu0 %v455
    %v739 = vpop.f32.mrb[0].mxu0
    %v740 = vadd.f32 %v352, %v739
    %v741 = vpop.f32.mrb[0].mxu0
    %v742 = vpop.f32.mrb[0].mxu0
    %v743 = vadd.f32 %v352, %v742
    %v744 = vpop.f32.mrb[0].mxu0
    %745 = vdwg.mxu0
    %v746 = vld [vmem:[%s5] sm:$0xf]
    %v747 = vld [vmem:[%s6] sm:$0x1]
    %v749 = vlaneseq
    %v750 = vshrl.u32 %v749, 7
    %v751 = vsub.s32 0, %v750
    %v752 = vrot.slane %v747, %v751
    %vm754 = vcmask 64512
    %v756 = vsel %vm754, %v121, 0
    %v759 = vsel %vm754, %v122, 0
    %v762 = vsel %vm754, %v123, 0
    %v765 = vsel %vm754, %v124, 0
    %v768 = vsel %vm754, %v125, 0
    %v771 = vsel %vm754, %v126, 0
    %v774 = vsel %vm754, %v127, 0
    %v777 = vsel %vm754, %v128, 0
    %v780 = vsel %vm754, %v129, 0
    %v783 = vsel %vm754, %v130, 0
    %v786 = vsel %vm754, %v131, 0
    %v789 = vsel %vm754, %v132, 0
    %v792 = vsel %vm754, %v133, 0
    %v795 = vsel %vm754, %v134, 0
    %v798 = vsel %vm754, %v135, 0
    %v801 = vsel %vm754, %v136, 0
    %v804 = vsel %vm754, %v137, 0
    %v807 = vsel %vm754, %v138, 0
    %v810 = vsel %vm754, %v139, 0
    %v813 = vsel %vm754, %v140, 0
    %v816 = vsel %vm754, %v141, 0
    %v819 = vsel %vm754, %v142, 0
    %v822 = vsel %vm754, %v143, 0
    %v825 = vsel %vm754, %v144, 0
    %v828 = vsel %vm754, %v145, 0
    %v831 = vsel %vm754, %v146, 0
    %v834 = vsel %vm754, %v147, 0
    %v837 = vsel %vm754, %v148, 0
    %v840 = vsel %vm754, %v149, 0
    %v843 = vsel %vm754, %v150, 0
    %v846 = vsel %vm754, %v151, 0
    %v849 = vsel %vm754, %v152, 0
    %vm851 = vcmask 1043456
    %v853 = vsel %vm851, %v746, 0
    %855 = vmatprep.subr.bf16.mxu0 0
    %856 = vmatpush1.bf16.msra.mxu0 %v853
    %857 = vmatprep.subr.bf16.mxu0 0
    %858 = vmatpush1.bf16.msra.mxu0 0
    %859 = vmatprep.subr.bf16.mxu0 0
    %860 = vmatpush1.bf16.msra.mxu0 0
    %861 = vmatprep.subr.bf16.mxu0 0
    %862 = vmatpush1.bf16.msra.mxu0 0
    %863 = vmatprep.subr.bf16.mxu0 0
    %864 = vmatpush1.bf16.msra.mxu0 0
    %865 = vmatprep.subr.bf16.mxu0 0
    %866 = vmatpush1.bf16.msra.mxu0 0
    %867 = vmatprep.subr.bf16.mxu0 0
    %868 = vmatpush1.bf16.msra.mxu0 0
    %869 = vmatprep.subr.bf16.mxu0 0
    %870 = vmatpush1.bf16.msra.mxu0 0
    %871 = vmatprep.subr.bf16.mxu0 0
    %872 = vmatpush1.bf16.msra.mxu0 0
    %873 = vmatprep.subr.bf16.mxu0 0
    %874 = vmatpush1.bf16.msra.mxu0 0
    %875 = vmatprep.subr.bf16.mxu0 0
    %876 = vmatpush1.bf16.msra.mxu0 0
    %877 = vmatprep.subr.bf16.mxu0 0
    %878 = vmatpush1.bf16.msra.mxu0 0
    %879 = vmatprep.subr.bf16.mxu0 0
    %880 = vmatpush1.bf16.msra.mxu0 0
    %881 = vmatprep.subr.bf16.mxu0 0
    %882 = vmatpush1.bf16.msra.mxu0 0
    %883 = vmatprep.subr.bf16.mxu0 0
    %884 = vmatpush1.bf16.msra.mxu0 0
    %885 = vmatprep.subr.bf16.mxu0 0
    %886 = vmatpush1.bf16.msra.mxu0 0
    %887 = vmatprep.mubr.bf16.mxu0 0
    %888 = vmatmul.mubr.bf16.gmra.mrb[0].mxu0 %v756
    %v889 = vpop.f32.mrb[0].mxu0
    %v890 = vadd.f32 %v752, %v889
    %v891 = vpop.f32.mrb[0].mxu0
    %v892 = vpop.f32.mrb[0].mxu0
    %v893 = vadd.f32 %v752, %v892
    %v894 = vpop.f32.mrb[0].mxu0
    %895 = vmatprep.mubr.bf16.mxu0 0
    %896 = vmatmul.mubr.bf16.gmra.mrb[0].mxu0 %v759
    %v897 = vpop.f32.mrb[0].mxu0
    %v898 = vadd.f32 %v752, %v897
    %v899 = vpop.f32.mrb[0].mxu0
    %v900 = vpop.f32.mrb[0].mxu0
    %v901 = vadd.f32 %v752, %v900
    %v902 = vpop.f32.mrb[0].mxu0
    %903 = vmatprep.mubr.bf16.mxu0 0
    %904 = vmatmul.mubr.bf16.gmra.mrb[0].mxu0 %v762
    %v905 = vpop.f32.mrb[0].mxu0
    %v906 = vadd.f32 %v752, %v905
    %v907 = vpop.f32.mrb[0].mxu0
    %v908 = vpop.f32.mrb[0].mxu0
    %v909 = vadd.f32 %v752, %v908
    %v910 = vpop.f32.mrb[0].mxu0
    %911 = vmatprep.mubr.bf16.mxu0 0
    %912 = vmatmul.mubr.bf16.gmra.mrb[0].mxu0 %v765
    %v913 = vpop.f32.mrb[0].mxu0
    %v914 = vadd.f32 %v752, %v913
    %v915 = vpop.f32.mrb[0].mxu0
    %v916 = vpop.f32.mrb[0].mxu0
    %v917 = vadd.f32 %v752, %v916
    %v918 = vpop.f32.mrb[0].mxu0
    %919 = vmatprep.mubr.bf16.mxu0 0
    %920 = vmatmul.mubr.bf16.gmra.mrb[0].mxu0 %v768
    %v921 = vpop.f32.mrb[0].mxu0
    %v922 = vadd.f32 %v752, %v921
    %v923 = vpop.f32.mrb[0].mxu0
    %v924 = vpop.f32.mrb[0].mxu0
    %v925 = vadd.f32 %v752, %v924
    %v926 = vpop.f32.mrb[0].mxu0
    %927 = vmatprep.mubr.bf16.mxu0 0
    %928 = vmatmul.mubr.bf16.gmra.mrb[0].mxu0 %v771
    %v929 = vpop.f32.mrb[0].mxu0
    %v930 = vadd.f32 %v752, %v929
    %v931 = vpop.f32.mrb[0].mxu0
    %v932 = vpop.f32.mrb[0].mxu0
    %v933 = vadd.f32 %v752, %v932
    %v934 = vpop.f32.mrb[0].mxu0
    %935 = vmatprep.mubr.bf16.mxu0 0
    %936 = vmatmul.mubr.bf16.gmra.mrb[0].mxu0 %v774
    %v937 = vpop.f32.mrb[0].mxu0
    %v938 = vadd.f32 %v752, %v937
    %v939 = vpop.f32.mrb[0].mxu0
    %v940 = vpop.f32.mrb[0].mxu0
    %v941 = vadd.f32 %v752, %v940
    %v942 = vpop.f32.mrb[0].mxu0
    %943 = vmatprep.mubr.bf16.mxu0 0
    %944 = vmatmul.mubr.bf16.gmra.mrb[0].mxu0 %v777
    %v945 = vpop.f32.mrb[0].mxu0
    %v946 = vadd.f32 %v752, %v945
    %v947 = vpop.f32.mrb[0].mxu0
    %v948 = vpop.f32.mrb[0].mxu0
    %v949 = vadd.f32 %v752, %v948
    %v950 = vpop.f32.mrb[0].mxu0
    %951 = vmatprep.mubr.bf16.mxu0 0
    %952 = vmatmul.mubr.bf16.gmra.mrb[0].mxu0 %v780
    %v953 = vpop.f32.mrb[0].mxu0
    %v954 = vadd.f32 %v752, %v953
    %v955 = vpop.f32.mrb[0].mxu0
    %v956 = vpop.f32.mrb[0].mxu0
    %v957 = vadd.f32 %v752, %v956
    %v958 = vpop.f32.mrb[0].mxu0
    %959 = vmatprep.mubr.bf16.mxu0 0
    %960 = vmatmul.mubr.bf16.gmra.mrb[0].mxu0 %v783
    %v961 = vpop.f32.mrb[0].mxu0
    %v962 = vadd.f32 %v752, %v961
    %v963 = vpop.f32.mrb[0].mxu0
    %v964 = vpop.f32.mrb[0].mxu0
    %v965 = vadd.f32 %v752, %v964
    %v966 = vpop.f32.mrb[0].mxu0
    %967 = vmatprep.mubr.bf16.mxu0 0
    %968 = vmatmul.mubr.bf16.gmra.mrb[0].mxu0 %v786
    %v969 = vpop.f32.mrb[0].mxu0
    %v970 = vadd.f32 %v752, %v969
    %v971 = vpop.f32.mrb[0].mxu0
    %v972 = vpop.f32.mrb[0].mxu0
    %v973 = vadd.f32 %v752, %v972
    %v974 = vpop.f32.mrb[0].mxu0
    %975 = vmatprep.mubr.bf16.mxu0 0
    %976 = vmatmul.mubr.bf16.gmra.mrb[0].mxu0 %v789
    %v977 = vpop.f32.mrb[0].mxu0
    %v978 = vadd.f32 %v752, %v977
    %v979 = vpop.f32.mrb[0].mxu0
    %v980 = vpop.f32.mrb[0].mxu0
    %v981 = vadd.f32 %v752, %v980
    %v982 = vpop.f32.mrb[0].mxu0
    %983 = vmatprep.mubr.bf16.mxu0 0
    %984 = vmatmul.mubr.bf16.gmra.mrb[0].mxu0 %v792
    %v985 = vpop.f32.mrb[0].mxu0
    %v986 = vadd.f32 %v752, %v985
    %v987 = vpop.f32.mrb[0].mxu0
    %v988 = vpop.f32.mrb[0].mxu0
    %v989 = vadd.f32 %v752, %v988
    %v990 = vpop.f32.mrb[0].mxu0
    %991 = vmatprep.mubr.bf16.mxu0 0
    %992 = vmatmul.mubr.bf16.gmra.mrb[0].mxu0 %v795
    %v993 = vpop.f32.mrb[0].mxu0
    %v994 = vadd.f32 %v752, %v993
    %v995 = vpop.f32.mrb[0].mxu0
    %v996 = vpop.f32.mrb[0].mxu0
    %v997 = vadd.f32 %v752, %v996
    %v998 = vpop.f32.mrb[0].mxu0
    %999 = vmatprep.mubr.bf16.mxu0 0
    %1000 = vmatmul.mubr.bf16.gmra.mrb[0].mxu0 %v798
    %v1001 = vpop.f32.mrb[0].mxu0
    %v1002 = vadd.f32 %v752, %v1001
    %v1003 = vpop.f32.mrb[0].mxu0
    %v1004 = vpop.f32.mrb[0].mxu0
    %v1005 = vadd.f32 %v752, %v1004
    %v1006 = vpop.f32.mrb[0].mxu0
    %1007 = vmatprep.mubr.bf16.mxu0 0
    %1008 = vmatmul.mubr.bf16.gmra.mrb[0].mxu0 %v801
    %v1009 = vpop.f32.mrb[0].mxu0
    %v1010 = vadd.f32 %v752, %v1009
    %v1011 = vpop.f32.mrb[0].mxu0
    %v1012 = vpop.f32.mrb[0].mxu0
    %v1013 = vadd.f32 %v752, %v1012
    %v1014 = vpop.f32.mrb[0].mxu0
    %1015 = vmatprep.mubr.bf16.mxu0 0
    %1016 = vmatmul.mubr.bf16.gmra.mrb[0].mxu0 %v804
    %v1017 = vpop.f32.mrb[0].mxu0
    %v1018 = vadd.f32 %v752, %v1017
    %v1019 = vpop.f32.mrb[0].mxu0
    %v1020 = vpop.f32.mrb[0].mxu0
    %v1021 = vadd.f32 %v752, %v1020
    %v1022 = vpop.f32.mrb[0].mxu0
    %1023 = vmatprep.mubr.bf16.mxu0 0
    %1024 = vmatmul.mubr.bf16.gmra.mrb[0].mxu0 %v807
    %v1025 = vpop.f32.mrb[0].mxu0
    %v1026 = vadd.f32 %v752, %v1025
    %v1027 = vpop.f32.mrb[0].mxu0
    %v1028 = vpop.f32.mrb[0].mxu0
    %v1029 = vadd.f32 %v752, %v1028
    %v1030 = vpop.f32.mrb[0].mxu0
    %1031 = vmatprep.mubr.bf16.mxu0 0
    %1032 = vmatmul.mubr.bf16.gmra.mrb[0].mxu0 %v810
    %v1033 = vpop.f32.mrb[0].mxu0
    %v1034 = vadd.f32 %v752, %v1033
    %v1035 = vpop.f32.mrb[0].mxu0
    %v1036 = vpop.f32.mrb[0].mxu0
    %v1037 = vadd.f32 %v752, %v1036
    %v1038 = vpop.f32.mrb[0].mxu0
    %1039 = vmatprep.mubr.bf16.mxu0 0
    %1040 = vmatmul.mubr.bf16.gmra.mrb[0].mxu0 %v813
    %v1041 = vpop.f32.mrb[0].mxu0
    %v1042 = vadd.f32 %v752, %v1041
    %v1043 = vpop.f32.mrb[0].mxu0
    %v1044 = vpop.f32.mrb[0].mxu0
    %v1045 = vadd.f32 %v752, %v1044
    %v1046 = vpop.f32.mrb[0].mxu0
    %1047 = vmatprep.mubr.bf16.mxu0 0
    %1048 = vmatmul.mubr.bf16.gmra.mrb[0].mxu0 %v816
    %v1049 = vpop.f32.mrb[0].mxu0
    %v1050 = vadd.f32 %v752, %v1049
    %v1051 = vpop.f32.mrb[0].mxu0
    %v1052 = vpop.f32.mrb[0].mxu0
    %v1053 = vadd.f32 %v752, %v1052
    %v1054 = vpop.f32.mrb[0].mxu0
    %1055 = vmatprep.mubr.bf16.mxu0 0
    %1056 = vmatmul.mubr.bf16.gmra.mrb[0].mxu0 %v819
    %v1057 = vpop.f32.mrb[0].mxu0
    %v1058 = vadd.f32 %v752, %v1057
    %v1059 = vpop.f32.mrb[0].mxu0
    %v1060 = vpop.f32.mrb[0].mxu0
    %v1061 = vadd.f32 %v752, %v1060
    %v1062 = vpop.f32.mrb[0].mxu0
    %1063 = vmatprep.mubr.bf16.mxu0 0
    %1064 = vmatmul.mubr.bf16.gmra.mrb[0].mxu0 %v822
    %v1065 = vpop.f32.mrb[0].mxu0
    %v1066 = vadd.f32 %v752, %v1065
    %v1067 = vpop.f32.mrb[0].mxu0
    %v1068 = vpop.f32.mrb[0].mxu0
    %v1069 = vadd.f32 %v752, %v1068
    %v1070 = vpop.f32.mrb[0].mxu0
    %1071 = vmatprep.mubr.bf16.mxu0 0
    %1072 = vmatmul.mubr.bf16.gmra.mrb[0].mxu0 %v825
    %v1073 = vpop.f32.mrb[0].mxu0
    %v1074 = vadd.f32 %v752, %v1073
    %v1075 = vpop.f32.mrb[0].mxu0
    %v1076 = vpop.f32.mrb[0].mxu0
    %v1077 = vadd.f32 %v752, %v1076
    %v1078 = vpop.f32.mrb[0].mxu0
    %1079 = vmatprep.mubr.bf16.mxu0 0
    %1080 = vmatmul.mubr.bf16.gmra.mrb[0].mxu0 %v828
    %v1081 = vpop.f32.mrb[0].mxu0
    %v1082 = vadd.f32 %v752, %v1081
    %v1083 = vpop.f32.mrb[0].mxu0
    %v1084 = vpop.f32.mrb[0].mxu0
    %v1085 = vadd.f32 %v752, %v1084
    %v1086 = vpop.f32.mrb[0].mxu0
    %1087 = vmatprep.mubr.bf16.mxu0 0
    %1088 = vmatmul.mubr.bf16.gmra.mrb[0].mxu0 %v831
    %v1089 = vpop.f32.mrb[0].mxu0
    %v1090 = vadd.f32 %v752, %v1089
    %v1091 = vpop.f32.mrb[0].mxu0
    %v1092 = vpop.f32.mrb[0].mxu0
    %v1093 = vadd.f32 %v752, %v1092
    %v1094 = vpop.f32.mrb[0].mxu0
    %1095 = vmatprep.mubr.bf16.mxu0 0
    %1096 = vmatmul.mubr.bf16.gmra.mrb[0].mxu0 %v834
    %v1097 = vpop.f32.mrb[0].mxu0
    %v1098 = vadd.f32 %v752, %v1097
    %v1099 = vpop.f32.mrb[0].mxu0
    %v1100 = vpop.f32.mrb[0].mxu0
    %v1101 = vadd.f32 %v752, %v1100
    %v1102 = vpop.f32.mrb[0].mxu0
    %1103 = vmatprep.mubr.bf16.mxu0 0
    %1104 = vmatmul.mubr.bf16.gmra.mrb[0].mxu0 %v837
    %v1105 = vpop.f32.mrb[0].mxu0
    %v1106 = vadd.f32 %v752, %v1105
    %v1107 = vpop.f32.mrb[0].mxu0
    %v1108 = vpop.f32.mrb[0].mxu0
    %v1109 = vadd.f32 %v752, %v1108
    %v1110 = vpop.f32.mrb[0].mxu0
    %1111 = vmatprep.mubr.bf16.mxu0 0
    %1112 = vmatmul.mubr.bf16.gmra.mrb[0].mxu0 %v840
    %v1113 = vpop.f32.mrb[0].mxu0
    %v1114 = vadd.f32 %v752, %v1113
    %v1115 = vpop.f32.mrb[0].mxu0
    %v1116 = vpop.f32.mrb[0].mxu0
    %v1117 = vadd.f32 %v752, %v1116
    %v1118 = vpop.f32.mrb[0].mxu0
    %1119 = vmatprep.mubr.bf16.mxu0 0
    %1120 = vmatmul.mubr.bf16.gmra.mrb[0].mxu0 %v843
    %v1121 = vpop.f32.mrb[0].mxu0
    %v1122 = vadd.f32 %v752, %v1121
    %v1123 = vpop.f32.mrb[0].mxu0
    %v1124 = vpop.f32.mrb[0].mxu0
    %v1125 = vadd.f32 %v752, %v1124
    %v1126 = vpop.f32.mrb[0].mxu0
    %1127 = vmatprep.mubr.bf16.mxu0 0
    %1128 = vmatmul.mubr.bf16.gmra.mrb[0].mxu0 %v846
    %v1129 = vpop.f32.mrb[0].mxu0
    %v1130 = vadd.f32 %v752, %v1129
    %v1131 = vpop.f32.mrb[0].mxu0
    %v1132 = vpop.f32.mrb[0].mxu0
    %v1133 = vadd.f32 %v752, %v1132
    %v1134 = vpop.f32.mrb[0].mxu0
    %1135 = vmatprep.mubr.bf16.mxu0 0
    %1136 = vmatmul.mubr.bf16.gmra.mrb[0].mxu0 %v849
    %v1137 = vpop.f32.mrb[0].mxu0
    %v1138 = vadd.f32 %v752, %v1137
    %v1139 = vpop.f32.mrb[0].mxu0
    %v1140 = vpop.f32.mrb[0].mxu0
    %v1141 = vadd.f32 %v752, %v1140
    %v1142 = vpop.f32.mrb[0].mxu0
    %1143 = vdwg.mxu0
    %v1144 = vld [vmem:[%s7] sm:$0xff]
    %v1145 = vld [vmem:[%s8] sm:$0xff]
    %v1146 = vld [vmem:[%s8 + $0x8] sm:$0xff]
    %v1149 = vunpack.c.l.b16 %v1145
    %v1150 = vunpack.c.h.b16 %v1145
    %v1151 = vunpack.c.l.b16 %v1146
    %v1152 = vunpack.c.h.b16 %v1146
    %v1153 = vpack.c.b16 %v1151, %v1149
    %v1154 = vpack.c.b16 %v1152, %v1150
    %1157 = vmatprep.subr.bf16.mxu0 %v1154
    %1158 = vmatpush1.bf16.msra.mxu0 %v1153
    %1159 = vmatprep.subr.bf16.mxu0 0
    %1160 = vmatpush1.bf16.msra.mxu0 0
    %1161 = vmatprep.subr.bf16.mxu0 0
    %1162 = vmatpush1.bf16.msra.mxu0 0
    %1163 = vmatprep.subr.bf16.mxu0 0
    %1164 = vmatpush1.bf16.msra.mxu0 0
    %1165 = vmatprep.subr.bf16.mxu0 0
    %1166 = vmatpush1.bf16.msra.mxu0 0
    %1167 = vmatprep.subr.bf16.mxu0 0
    %1168 = vmatpush1.bf16.msra.mxu0 0
    %1169 = vmatprep.subr.bf16.mxu0 0
    %1170 = vmatpush1.bf16.msra.mxu0 0
    %1171 = vmatprep.subr.bf16.mxu0 0
    %1172 = vmatpush1.bf16.msra.mxu0 0
    %1173 = vmatprep.subr.bf16.mxu0 0
    %1174 = vmatpush1.bf16.msra.mxu0 0
    %1175 = vmatprep.subr.bf16.mxu0 0
    %1176 = vmatpush1.bf16.msra.mxu0 0
    %1177 = vmatprep.subr.bf16.mxu0 0
    %1178 = vmatpush1.bf16.msra.mxu0 0
    %1179 = vmatprep.subr.bf16.mxu0 0
    %1180 = vmatpush1.bf16.msra.mxu0 0
    %1181 = vmatprep.subr.bf16.mxu0 0
    %1182 = vmatpush1.bf16.msra.mxu0 0
    %1183 = vmatprep.subr.bf16.mxu0 0
    %1184 = vmatpush1.bf16.msra.mxu0 0
    %1185 = vmatprep.subr.bf16.mxu0 0
    %1186 = vmatpush1.bf16.msra.mxu0 0
    %1187 = vmatprep.subr.bf16.mxu0 0
    %1188 = vmatpush1.bf16.msra.mxu0 0
    %1189 = vmatprep.mubr.bf16.mxu0 0
    %1190 = vmatmul.mubr.bf16.gmra.mrb[0].mxu0 %v362
    %v1191 = vpop.f32.mrb[0].mxu0
    %v1192 = vadd.f32 0.0, %v1191
    %v1193 = vpop.f32.mrb[0].mxu0
    %v1194 = vadd.f32 0.0, %v1193
    %v1195 = vpop.f32.mrb[0].mxu0
    %v1196 = vadd.f32 0.0, %v1195
    %v1197 = vpop.f32.mrb[0].mxu0
    %v1198 = vadd.f32 0.0, %v1197
    %1199 = vmatprep.mubr.bf16.mxu0 0
    %1200 = vmatmul.mubr.bf16.gmra.mrb[0].mxu0 %v365
    %v1201 = vpop.f32.mrb[0].mxu0
    %v1202 = vadd.f32 0.0, %v1201
    %v1203 = vpop.f32.mrb[0].mxu0
    %v1204 = vadd.f32 0.0, %v1203
    %v1205 = vpop.f32.mrb[0].mxu0
    %v1206 = vadd.f32 0.0, %v1205
    %v1207 = vpop.f32.mrb[0].mxu0
    %v1208 = vadd.f32 0.0, %v1207
    %1209 = vmatprep.mubr.bf16.mxu0 0
    %1210 = vmatmul.mubr.bf16.gmra.mrb[0].mxu0 %v368
    %v1211 = vpop.f32.mrb[0].mxu0
    %v1212 = vadd.f32 0.0, %v1211
    %v1213 = vpop.f32.mrb[0].mxu0
    %v1214 = vadd.f32 0.0, %v1213
    %v1215 = vpop.f32.mrb[0].mxu0
    %v1216 = vadd.f32 0.0, %v1215
    %v1217 = vpop.f32.mrb[0].mxu0
    %v1218 = vadd.f32 0.0, %v1217
    %1219 = vmatprep.mubr.bf16.mxu0 0
    %1220 = vmatmul.mubr.bf16.gmra.mrb[0].mxu0 %v371
    %v1221 = vpop.f32.mrb[0].mxu0
    %v1222 = vadd.f32 0.0, %v1221
    %v1223 = vpop.f32.mrb[0].mxu0
    %v1224 = vadd.f32 0.0, %v1223
    %v1225 = vpop.f32.mrb[0].mxu0
    %v1226 = vadd.f32 0.0, %v1225
    %v1227 = vpop.f32.mrb[0].mxu0
    %v1228 = vadd.f32 0.0, %v1227
    %1229 = vmatprep.mubr.bf16.mxu0 0
    %1230 = vmatmul.mubr.bf16.gmra.mrb[0].mxu0 %v374
    %v1231 = vpop.f32.mrb[0].mxu0
    %v1232 = vadd.f32 0.0, %v1231
    %v1233 = vpop.f32.mrb[0].mxu0
    %v1234 = vadd.f32 0.0, %v1233
    %v1235 = vpop.f32.mrb[0].mxu0
    %v1236 = vadd.f32 0.0, %v1235
    %v1237 = vpop.f32.mrb[0].mxu0
    %v1238 = vadd.f32 0.0, %v1237
    %1239 = vmatprep.mubr.bf16.mxu0 0
    %1240 = vmatmul.mubr.bf16.gmra.mrb[0].mxu0 %v377
    %v1241 = vpop.f32.mrb[0].mxu0
    %v1242 = vadd.f32 0.0, %v1241
    %v1243 = vpop.f32.mrb[0].mxu0
    %v1244 = vadd.f32 0.0, %v1243
    %v1245 = vpop.f32.mrb[0].mxu0
    %v1246 = vadd.f32 0.0, %v1245
    %v1247 = vpop.f32.mrb[0].mxu0
    %v1248 = vadd.f32 0.0, %v1247
    %1249 = vmatprep.mubr.bf16.mxu0 0
    %1250 = vmatmul.mubr.bf16.gmra.mrb[0].mxu0 %v380
    %v1251 = vpop.f32.mrb[0].mxu0
    %v1252 = vadd.f32 0.0, %v1251
    %v1253 = vpop.f32.mrb[0].mxu0
    %v1254 = vadd.f32 0.0, %v1253
    %v1255 = vpop.f32.mrb[0].mxu0
    %v1256 = vadd.f32 0.0, %v1255
    %v1257 = vpop.f32.mrb[0].mxu0
    %v1258 = vadd.f32 0.0, %v1257
    %1259 = vmatprep.mubr.bf16.mxu0 0
    %1260 = vmatmul.mubr.bf16.gmra.mrb[0].mxu0 %v383
    %v1261 = vpop.f32.mrb[0].mxu0
    %v1262 = vadd.f32 0.0, %v1261
    %v1263 = vpop.f32.mrb[0].mxu0
    %v1264 = vadd.f32 0.0, %v1263
    %v1265 = vpop.f32.mrb[0].mxu0
    %v1266 = vadd.f32 0.0, %v1265
    %v1267 = vpop.f32.mrb[0].mxu0
    %v1268 = vadd.f32 0.0, %v1267
    %1269 = vmatprep.mubr.bf16.mxu0 0
    %1270 = vmatmul.mubr.bf16.gmra.mrb[0].mxu0 %v386
    %v1271 = vpop.f32.mrb[0].mxu0
    %v1272 = vadd.f32 0.0, %v1271
    %v1273 = vpop.f32.mrb[0].mxu0
    %v1274 = vadd.f32 0.0, %v1273
    %v1275 = vpop.f32.mrb[0].mxu0
    %v1276 = vadd.f32 0.0, %v1275
    %v1277 = vpop.f32.mrb[0].mxu0
    %v1278 = vadd.f32 0.0, %v1277
    %1279 = vmatprep.mubr.bf16.mxu0 0
    %1280 = vmatmul.mubr.bf16.gmra.mrb[0].mxu0 %v389
    %v1281 = vpop.f32.mrb[0].mxu0
    %v1282 = vadd.f32 0.0, %v1281
    %v1283 = vpop.f32.mrb[0].mxu0
    %v1284 = vadd.f32 0.0, %v1283
    %v1285 = vpop.f32.mrb[0].mxu0
    %v1286 = vadd.f32 0.0, %v1285
    %v1287 = vpop.f32.mrb[0].mxu0
    %v1288 = vadd.f32 0.0, %v1287
    %1289 = vmatprep.mubr.bf16.mxu0 0
    %1290 = vmatmul.mubr.bf16.gmra.mrb[0].mxu0 %v392
    %v1291 = vpop.f32.mrb[0].mxu0
    %v1292 = vadd.f32 0.0, %v1291
    %v1293 = vpop.f32.mrb[0].mxu0
    %v1294 = vadd.f32 0.0, %v1293
    %v1295 = vpop.f32.mrb[0].mxu0
    %v1296 = vadd.f32 0.0, %v1295
    %v1297 = vpop.f32.mrb[0].mxu0
    %v1298 = vadd.f32 0.0, %v1297
    %1299 = vmatprep.mubr.bf16.mxu0 0
    %1300 = vmatmul.mubr.bf16.gmra.mrb[0].mxu0 %v395
    %v1301 = vpop.f32.mrb[0].mxu0
    %v1302 = vadd.f32 0.0, %v1301
    %v1303 = vpop.f32.mrb[0].mxu0
    %v1304 = vadd.f32 0.0, %v1303
    %v1305 = vpop.f32.mrb[0].mxu0
    %v1306 = vadd.f32 0.0, %v1305
    %v1307 = vpop.f32.mrb[0].mxu0
    %v1308 = vadd.f32 0.0, %v1307
    %1309 = vmatprep.mubr.bf16.mxu0 0
    %1310 = vmatmul.mubr.bf16.gmra.mrb[0].mxu0 %v398
    %v1311 = vpop.f32.mrb[0].mxu0
    %v1312 = vadd.f32 0.0, %v1311
    %v1313 = vpop.f32.mrb[0].mxu0
    %v1314 = vadd.f32 0.0, %v1313
    %v1315 = vpop.f32.mrb[0].mxu0
    %v1316 = vadd.f32 0.0, %v1315
    %v1317 = vpop.f32.mrb[0].mxu0
    %v1318 = vadd.f32 0.0, %v1317
    %1319 = vmatprep.mubr.bf16.mxu0 0
    %1320 = vmatmul.mubr.bf16.gmra.mrb[0].mxu0 %v401
    %v1321 = vpop.f32.mrb[0].mxu0
    %v1322 = vadd.f32 0.0, %v1321
    %v1323 = vpop.f32.mrb[0].mxu0
    %v1324 = vadd.f32 0.0, %v1323
    %v1325 = vpop.f32.mrb[0].mxu0
    %v1326 = vadd.f32 0.0, %v1325
    %v1327 = vpop.f32.mrb[0].mxu0
    %v1328 = vadd.f32 0.0, %v1327
    %1329 = vmatprep.mubr.bf16.mxu0 0
    %1330 = vmatmul.mubr.bf16.gmra.mrb[0].mxu0 %v404
    %v1331 = vpop.f32.mrb[0].mxu0
    %v1332 = vadd.f32 0.0, %v1331
    %v1333 = vpop.f32.mrb[0].mxu0
    %v1334 = vadd.f32 0.0, %v1333
    %v1335 = vpop.f32.mrb[0].mxu0
    %v1336 = vadd.f32 0.0, %v1335
    %v1337 = vpop.f32.mrb[0].mxu0
    %v1338 = vadd.f32 0.0, %v1337
    %1339 = vmatprep.mubr.bf16.mxu0 0
    %1340 = vmatmul.mubr.bf16.gmra.mrb[0].mxu0 %v407
    %v1341 = vpop.f32.mrb[0].mxu0
    %v1342 = vadd.f32 0.0, %v1341
    %v1343 = vpop.f32.mrb[0].mxu0
    %v1344 = vadd.f32 0.0, %v1343
    %v1345 = vpop.f32.mrb[0].mxu0
    %v1346 = vadd.f32 0.0, %v1345
    %v1347 = vpop.f32.mrb[0].mxu0
    %v1348 = vadd.f32 0.0, %v1347
    %1349 = vmatprep.mubr.bf16.mxu0 0
    %1350 = vmatmul.mubr.bf16.gmra.mrb[0].mxu0 %v410
    %v1351 = vpop.f32.mrb[0].mxu0
    %v1352 = vadd.f32 0.0, %v1351
    %v1353 = vpop.f32.mrb[0].mxu0
    %v1354 = vadd.f32 0.0, %v1353
    %v1355 = vpop.f32.mrb[0].mxu0
    %v1356 = vadd.f32 0.0, %v1355
    %v1357 = vpop.f32.mrb[0].mxu0
    %v1358 = vadd.f32 0.0, %v1357
    %1359 = vmatprep.mubr.bf16.mxu0 0
    %1360 = vmatmul.mubr.bf16.gmra.mrb[0].mxu0 %v413
    %v1361 = vpop.f32.mrb[0].mxu0
    %v1362 = vadd.f32 0.0, %v1361
    %v1363 = vpop.f32.mrb[0].mxu0
    %v1364 = vadd.f32 0.0, %v1363
    %v1365 = vpop.f32.mrb[0].mxu0
    %v1366 = vadd.f32 0.0, %v1365
    %v1367 = vpop.f32.mrb[0].mxu0
    %v1368 = vadd.f32 0.0, %v1367
    %1369 = vmatprep.mubr.bf16.mxu0 0
    %1370 = vmatmul.mubr.bf16.gmra.mrb[0].mxu0 %v416
    %v1371 = vpop.f32.mrb[0].mxu0
    %v1372 = vadd.f32 0.0, %v1371
    %v1373 = vpop.f32.mrb[0].mxu0
    %v1374 = vadd.f32 0.0, %v1373
    %v1375 = vpop.f32.mrb[0].mxu0
    %v1376 = vadd.f32 0.0, %v1375
    %v1377 = vpop.f32.mrb[0].mxu0
    %v1378 = vadd.f32 0.0, %v1377
    %1379 = vmatprep.mubr.bf16.mxu0 0
    %1380 = vmatmul.mubr.bf16.gmra.mrb[0].mxu0 %v419
    %v1381 = vpop.f32.mrb[0].mxu0
    %v1382 = vadd.f32 0.0, %v1381
    %v1383 = vpop.f32.mrb[0].mxu0
    %v1384 = vadd.f32 0.0, %v1383
    %v1385 = vpop.f32.mrb[0].mxu0
    %v1386 = vadd.f32 0.0, %v1385
    %v1387 = vpop.f32.mrb[0].mxu0
    %v1388 = vadd.f32 0.0, %v1387
    %1389 = vmatprep.mubr.bf16.mxu0 0
    %1390 = vmatmul.mubr.bf16.gmra.mrb[0].mxu0 %v422
    %v1391 = vpop.f32.mrb[0].mxu0
    %v1392 = vadd.f32 0.0, %v1391
    %v1393 = vpop.f32.mrb[0].mxu0
    %v1394 = vadd.f32 0.0, %v1393
    %v1395 = vpop.f32.mrb[0].mxu0
    %v1396 = vadd.f32 0.0, %v1395
    %v1397 = vpop.f32.mrb[0].mxu0
    %v1398 = vadd.f32 0.0, %v1397
    %1399 = vmatprep.mubr.bf16.mxu0 0
    %1400 = vmatmul.mubr.bf16.gmra.mrb[0].mxu0 %v425
    %v1401 = vpop.f32.mrb[0].mxu0
    %v1402 = vadd.f32 0.0, %v1401
    %v1403 = vpop.f32.mrb[0].mxu0
    %v1404 = vadd.f32 0.0, %v1403
    %v1405 = vpop.f32.mrb[0].mxu0
    %v1406 = vadd.f32 0.0, %v1405
    %v1407 = vpop.f32.mrb[0].mxu0
    %v1408 = vadd.f32 0.0, %v1407
    %1409 = vmatprep.mubr.bf16.mxu0 0
    %1410 = vmatmul.mubr.bf16.gmra.mrb[0].mxu0 %v428
    %v1411 = vpop.f32.mrb[0].mxu0
    %v1412 = vadd.f32 0.0, %v1411
    %v1413 = vpop.f32.mrb[0].mxu0
    %v1414 = vadd.f32 0.0, %v1413
    %v1415 = vpop.f32.mrb[0].mxu0
    %v1416 = vadd.f32 0.0, %v1415
    %v1417 = vpop.f32.mrb[0].mxu0
    %v1418 = vadd.f32 0.0, %v1417
    %1419 = vmatprep.mubr.bf16.mxu0 0
    %1420 = vmatmul.mubr.bf16.gmra.mrb[0].mxu0 %v431
    %v1421 = vpop.f32.mrb[0].mxu0
    %v1422 = vadd.f32 0.0, %v1421
    %v1423 = vpop.f32.mrb[0].mxu0
    %v1424 = vadd.f32 0.0, %v1423
    %v1425 = vpop.f32.mrb[0].mxu0
    %v1426 = vadd.f32 0.0, %v1425
    %v1427 = vpop.f32.mrb[0].mxu0
    %v1428 = vadd.f32 0.0, %v1427
    %1429 = vmatprep.mubr.bf16.mxu0 0
    %1430 = vmatmul.mubr.bf16.gmra.mrb[0].mxu0 %v434
    %v1431 = vpop.f32.mrb[0].mxu0
    %v1432 = vadd.f32 0.0, %v1431
    %v1433 = vpop.f32.mrb[0].mxu0
    %v1434 = vadd.f32 0.0, %v1433
    %v1435 = vpop.f32.mrb[0].mxu0
    %v1436 = vadd.f32 0.0, %v1435
    %v1437 = vpop.f32.mrb[0].mxu0
    %v1438 = vadd.f32 0.0, %v1437
    %1439 = vmatprep.mubr.bf16.mxu0 0
    %1440 = vmatmul.mubr.bf16.gmra.mrb[0].mxu0 %v437
    %v1441 = vpop.f32.mrb[0].mxu0
    %v1442 = vadd.f32 0.0, %v1441
    %v1443 = vpop.f32.mrb[0].mxu0
    %v1444 = vadd.f32 0.0, %v1443
    %v1445 = vpop.f32.mrb[0].mxu0
    %v1446 = vadd.f32 0.0, %v1445
    %v1447 = vpop.f32.mrb[0].mxu0
    %v1448 = vadd.f32 0.0, %v1447
    %1449 = vmatprep.mubr.bf16.mxu0 0
    %1450 = vmatmul.mubr.bf16.gmra.mrb[0].mxu0 %v440
    %v1451 = vpop.f32.mrb[0].mxu0
    %v1452 = vadd.f32 0.0, %v1451
    %v1453 = vpop.f32.mrb[0].mxu0
    %v1454 = vadd.f32 0.0, %v1453
    %v1455 = vpop.f32.mrb[0].mxu0
    %v1456 = vadd.f32 0.0, %v1455
    %v1457 = vpop.f32.mrb[0].mxu0
    %v1458 = vadd.f32 0.0, %v1457
    %1459 = vmatprep.mubr.bf16.mxu0 0
    %1460 = vmatmul.mubr.bf16.gmra.mrb[0].mxu0 %v443
    %v1461 = vpop.f32.mrb[0].mxu0
    %v1462 = vadd.f32 0.0, %v1461
    %v1463 = vpop.f32.mrb[0].mxu0
    %v1464 = vadd.f32 0.0, %v1463
    %v1465 = vpop.f32.mrb[0].mxu0
    %v1466 = vadd.f32 0.0, %v1465
    %v1467 = vpop.f32.mrb[0].mxu0
    %v1468 = vadd.f32 0.0, %v1467
    %1469 = vmatprep.mubr.bf16.mxu0 0
    %1470 = vmatmul.mubr.bf16.gmra.mrb[0].mxu0 %v446
    %v1471 = vpop.f32.mrb[0].mxu0
    %v1472 = vadd.f32 0.0, %v1471
    %v1473 = vpop.f32.mrb[0].mxu0
    %v1474 = vadd.f32 0.0, %v1473
    %v1475 = vpop.f32.mrb[0].mxu0
    %v1476 = vadd.f32 0.0, %v1475
    %v1477 = vpop.f32.mrb[0].mxu0
    %v1478 = vadd.f32 0.0, %v1477
    %1479 = vmatprep.mubr.bf16.mxu0 0
    %1480 = vmatmul.mubr.bf16.gmra.mrb[0].mxu0 %v449
    %v1481 = vpop.f32.mrb[0].mxu0
    %v1482 = vadd.f32 0.0, %v1481
    %v1483 = vpop.f32.mrb[0].mxu0
    %v1484 = vadd.f32 0.0, %v1483
    %v1485 = vpop.f32.mrb[0].mxu0
    %v1486 = vadd.f32 0.0, %v1485
    %v1487 = vpop.f32.mrb[0].mxu0
    %v1488 = vadd.f32 0.0, %v1487
    %1489 = vmatprep.mubr.bf16.mxu0 0
    %1490 = vmatmul.mubr.bf16.gmra.mrb[0].mxu0 %v452
    %v1491 = vpop.f32.mrb[0].mxu0
    %v1492 = vadd.f32 0.0, %v1491
    %v1493 = vpop.f32.mrb[0].mxu0
    %v1494 = vadd.f32 0.0, %v1493
    %v1495 = vpop.f32.mrb[0].mxu0
    %v1496 = vadd.f32 0.0, %v1495
    %v1497 = vpop.f32.mrb[0].mxu0
    %v1498 = vadd.f32 0.0, %v1497
    %1499 = vmatprep.mubr.bf16.mxu0 0
    %1500 = vmatmul.mubr.bf16.gmra.mrb[0].mxu0 %v455
    %v1501 = vpop.f32.mrb[0].mxu0
    %v1502 = vadd.f32 0.0, %v1501
    %v1503 = vpop.f32.mrb[0].mxu0
    %v1504 = vadd.f32 0.0, %v1503
    %v1505 = vpop.f32.mrb[0].mxu0
    %v1506 = vadd.f32 0.0, %v1505
    %v1507 = vpop.f32.mrb[0].mxu0
    %v1508 = vadd.f32 0.0, %v1507
    %1509 = vdwg.mxu0
    %v1511 = vunpack.c.l.b16 %v1144
    %v1512 = vunpack.c.h.b16 %v1144
    %v1513 = vpack.c.b16 %v1511, %v1511
    %v1514 = vpack.c.b16 %v1512, %v1512
    %v1516 = vsel %vm851, %v1513, 0
    %v1519 = vsel %vm851, %v1514, 0
    %1521 = vmatprep.subr.bf16.mxu0 %v1519
    %1522 = vmatpush1.bf16.msra.mxu0 %v1516
    %1523 = vmatprep.subr.bf16.mxu0 0
    %1524 = vmatpush1.bf16.msra.mxu0 0
    %1525 = vmatprep.subr.bf16.mxu0 0
    %1526 = vmatpush1.bf16.msra.mxu0 0
    %1527 = vmatprep.subr.bf16.mxu0 0
    %1528 = vmatpush1.bf16.msra.mxu0 0
    %1529 = vmatprep.subr.bf16.mxu0 0
    %1530 = vmatpush1.bf16.msra.mxu0 0
    %1531 = vmatprep.subr.bf16.mxu0 0
    %1532 = vmatpush1.bf16.msra.mxu0 0
    %1533 = vmatprep.subr.bf16.mxu0 0
    %1534 = vmatpush1.bf16.msra.mxu0 0
    %1535 = vmatprep.subr.bf16.mxu0 0
    %1536 = vmatpush1.bf16.msra.mxu0 0
    %1537 = vmatprep.subr.bf16.mxu0 0
    %1538 = vmatpush1.bf16.msra.mxu0 0
    %1539 = vmatprep.subr.bf16.mxu0 0
    %1540 = vmatpush1.bf16.msra.mxu0 0
    %1541 = vmatprep.subr.bf16.mxu0 0
    %1542 = vmatpush1.bf16.msra.mxu0 0
    %1543 = vmatprep.subr.bf16.mxu0 0
    %1544 = vmatpush1.bf16.msra.mxu0 0
    %1545 = vmatprep.subr.bf16.mxu0 0
    %1546 = vmatpush1.bf16.msra.mxu0 0
    %1547 = vmatprep.subr.bf16.mxu0 0
    %1548 = vmatpush1.bf16.msra.mxu0 0
    %1549 = vmatprep.subr.bf16.mxu0 0
    %1550 = vmatpush1.bf16.msra.mxu0 0
    %1551 = vmatprep.subr.bf16.mxu0 0
    %1552 = vmatpush1.bf16.msra.mxu0 0
    %1553 = vmatprep.mubr.bf16.mxu0 0
    %1554 = vmatmul.mubr.bf16.gmra.mrb[0].mxu0 %v756
    %v1555 = vpop.f32.mrb[0].mxu0
    %v1556 = vadd.f32 %v1192, %v1555
    %v1557 = vpop.f32.mrb[0].mxu0
    %v1558 = vadd.f32 %v1194, %v1557
    %v1559 = vpop.f32.mrb[0].mxu0
    %v1560 = vadd.f32 %v1196, %v1559
    %v1561 = vpop.f32.mrb[0].mxu0
    %v1562 = vadd.f32 %v1198, %v1561
    %1563 = vmatprep.mubr.bf16.mxu0 0
    %1564 = vmatmul.mubr.bf16.gmra.mrb[0].mxu0 %v759
    %v1565 = vpop.f32.mrb[0].mxu0
    %v1566 = vadd.f32 %v1202, %v1565
    %v1567 = vpop.f32.mrb[0].mxu0
    %v1568 = vadd.f32 %v1204, %v1567
    %v1569 = vpop.f32.mrb[0].mxu0
    %v1570 = vadd.f32 %v1206, %v1569
    %v1571 = vpop.f32.mrb[0].mxu0
    %v1572 = vadd.f32 %v1208, %v1571
    %1573 = vmatprep.mubr.bf16.mxu0 0
    %1574 = vmatmul.mubr.bf16.gmra.mrb[0].mxu0 %v762
    %v1575 = vpop.f32.mrb[0].mxu0
    %v1576 = vadd.f32 %v1212, %v1575
    %v1577 = vpop.f32.mrb[0].mxu0
    %v1578 = vadd.f32 %v1214, %v1577
    %v1579 = vpop.f32.mrb[0].mxu0
    %v1580 = vadd.f32 %v1216, %v1579
    %v1581 = vpop.f32.mrb[0].mxu0
    %v1582 = vadd.f32 %v1218, %v1581
    %1583 = vmatprep.mubr.bf16.mxu0 0
    %1584 = vmatmul.mubr.bf16.gmra.mrb[0].mxu0 %v765
    %v1585 = vpop.f32.mrb[0].mxu0
    %v1586 = vadd.f32 %v1222, %v1585
    %v1587 = vpop.f32.mrb[0].mxu0
    %v1588 = vadd.f32 %v1224, %v1587
    %v1589 = vpop.f32.mrb[0].mxu0
    %v1590 = vadd.f32 %v1226, %v1589
    %v1591 = vpop.f32.mrb[0].mxu0
    %v1592 = vadd.f32 %v1228, %v1591
    %1593 = vmatprep.mubr.bf16.mxu0 0
    %1594 = vmatmul.mubr.bf16.gmra.mrb[0].mxu0 %v768
    %v1595 = vpop.f32.mrb[0].mxu0
    %v1596 = vadd.f32 %v1232, %v1595
    %v1597 = vpop.f32.mrb[0].mxu0
    %v1598 = vadd.f32 %v1234, %v1597
    %v1599 = vpop.f32.mrb[0].mxu0
    %v1600 = vadd.f32 %v1236, %v1599
    %v1601 = vpop.f32.mrb[0].mxu0
    %v1602 = vadd.f32 %v1238, %v1601
    %1603 = vmatprep.mubr.bf16.mxu0 0
    %1604 = vmatmul.mubr.bf16.gmra.mrb[0].mxu0 %v771
    %v1605 = vpop.f32.mrb[0].mxu0
    %v1606 = vadd.f32 %v1242, %v1605
    %v1607 = vpop.f32.mrb[0].mxu0
    %v1608 = vadd.f32 %v1244, %v1607
    %v1609 = vpop.f32.mrb[0].mxu0
    %v1610 = vadd.f32 %v1246, %v1609
    %v1611 = vpop.f32.mrb[0].mxu0
    %v1612 = vadd.f32 %v1248, %v1611
    %1613 = vmatprep.mubr.bf16.mxu0 0
    %1614 = vmatmul.mubr.bf16.gmra.mrb[0].mxu0 %v774
    %v1615 = vpop.f32.mrb[0].mxu0
    %v1616 = vadd.f32 %v1252, %v1615
    %v1617 = vpop.f32.mrb[0].mxu0
    %v1618 = vadd.f32 %v1254, %v1617
    %v1619 = vpop.f32.mrb[0].mxu0
    %v1620 = vadd.f32 %v1256, %v1619
    %v1621 = vpop.f32.mrb[0].mxu0
    %v1622 = vadd.f32 %v1258, %v1621
    %1623 = vmatprep.mubr.bf16.mxu0 0
    %1624 = vmatmul.mubr.bf16.gmra.mrb[0].mxu0 %v777
    %v1625 = vpop.f32.mrb[0].mxu0
    %v1626 = vadd.f32 %v1262, %v1625
    %v1627 = vpop.f32.mrb[0].mxu0
    %v1628 = vadd.f32 %v1264, %v1627
    %v1629 = vpop.f32.mrb[0].mxu0
    %v1630 = vadd.f32 %v1266, %v1629
    %v1631 = vpop.f32.mrb[0].mxu0
    %v1632 = vadd.f32 %v1268, %v1631
    %1633 = vmatprep.mubr.bf16.mxu0 0
    %1634 = vmatmul.mubr.bf16.gmra.mrb[0].mxu0 %v780
    %v1635 = vpop.f32.mrb[0].mxu0
    %v1636 = vadd.f32 %v1272, %v1635
    %v1637 = vpop.f32.mrb[0].mxu0
    %v1638 = vadd.f32 %v1274, %v1637
    %v1639 = vpop.f32.mrb[0].mxu0
    %v1640 = vadd.f32 %v1276, %v1639
    %v1641 = vpop.f32.mrb[0].mxu0
    %v1642 = vadd.f32 %v1278, %v1641
    %1643 = vmatprep.mubr.bf16.mxu0 0
    %1644 = vmatmul.mubr.bf16.gmra.mrb[0].mxu0 %v783
    %v1645 = vpop.f32.mrb[0].mxu0
    %v1646 = vadd.f32 %v1282, %v1645
    %v1647 = vpop.f32.mrb[0].mxu0
    %v1648 = vadd.f32 %v1284, %v1647
    %v1649 = vpop.f32.mrb[0].mxu0
    %v1650 = vadd.f32 %v1286, %v1649
    %v1651 = vpop.f32.mrb[0].mxu0
    %v1652 = vadd.f32 %v1288, %v1651
    %1653 = vmatprep.mubr.bf16.mxu0 0
    %1654 = vmatmul.mubr.bf16.gmra.mrb[0].mxu0 %v786
    %v1655 = vpop.f32.mrb[0].mxu0
    %v1656 = vadd.f32 %v1292, %v1655
    %v1657 = vpop.f32.mrb[0].mxu0
    %v1658 = vadd.f32 %v1294, %v1657
    %v1659 = vpop.f32.mrb[0].mxu0
    %v1660 = vadd.f32 %v1296, %v1659
    %v1661 = vpop.f32.mrb[0].mxu0
    %v1662 = vadd.f32 %v1298, %v1661
    %1663 = vmatprep.mubr.bf16.mxu0 0
    %1664 = vmatmul.mubr.bf16.gmra.mrb[0].mxu0 %v789
    %v1665 = vpop.f32.mrb[0].mxu0
    %v1666 = vadd.f32 %v1302, %v1665
    %v1667 = vpop.f32.mrb[0].mxu0
    %v1668 = vadd.f32 %v1304, %v1667
    %v1669 = vpop.f32.mrb[0].mxu0
    %v1670 = vadd.f32 %v1306, %v1669
    %v1671 = vpop.f32.mrb[0].mxu0
    %v1672 = vadd.f32 %v1308, %v1671
    %1673 = vmatprep.mubr.bf16.mxu0 0
    %1674 = vmatmul.mubr.bf16.gmra.mrb[0].mxu0 %v792
    %v1675 = vpop.f32.mrb[0].mxu0
    %v1676 = vadd.f32 %v1312, %v1675
    %v1677 = vpop.f32.mrb[0].mxu0
    %v1678 = vadd.f32 %v1314, %v1677
    %v1679 = vpop.f32.mrb[0].mxu0
    %v1680 = vadd.f32 %v1316, %v1679
    %v1681 = vpop.f32.mrb[0].mxu0
    %v1682 = vadd.f32 %v1318, %v1681
    %1683 = vmatprep.mubr.bf16.mxu0 0
    %1684 = vmatmul.mubr.bf16.gmra.mrb[0].mxu0 %v795
    %v1685 = vpop.f32.mrb[0].mxu0
    %v1686 = vadd.f32 %v1322, %v1685
    %v1687 = vpop.f32.mrb[0].mxu0
    %v1688 = vadd.f32 %v1324, %v1687
    %v1689 = vpop.f32.mrb[0].mxu0
    %v1690 = vadd.f32 %v1326, %v1689
    %v1691 = vpop.f32.mrb[0].mxu0
    %v1692 = vadd.f32 %v1328, %v1691
    %1693 = vmatprep.mubr.bf16.mxu0 0
    %1694 = vmatmul.mubr.bf16.gmra.mrb[0].mxu0 %v798
    %v1695 = vpop.f32.mrb[0].mxu0
    %v1696 = vadd.f32 %v1332, %v1695
    %v1697 = vpop.f32.mrb[0].mxu0
    %v1698 = vadd.f32 %v1334, %v1697
    %v1699 = vpop.f32.mrb[0].mxu0
    %v1700 = vadd.f32 %v1336, %v1699
    %v1701 = vpop.f32.mrb[0].mxu0
    %v1702 = vadd.f32 %v1338, %v1701
    %1703 = vmatprep.mubr.bf16.mxu0 0
    %1704 = vmatmul.mubr.bf16.gmra.mrb[0].mxu0 %v801
    %v1705 = vpop.f32.mrb[0].mxu0
    %v1706 = vadd.f32 %v1342, %v1705
    %v1707 = vpop.f32.mrb[0].mxu0
    %v1708 = vadd.f32 %v1344, %v1707
    %v1709 = vpop.f32.mrb[0].mxu0
    %v1710 = vadd.f32 %v1346, %v1709
    %v1711 = vpop.f32.mrb[0].mxu0
    %v1712 = vadd.f32 %v1348, %v1711
    %1713 = vmatprep.mubr.bf16.mxu0 0
    %1714 = vmatmul.mubr.bf16.gmra.mrb[0].mxu0 %v804
    %v1715 = vpop.f32.mrb[0].mxu0
    %v1716 = vadd.f32 %v1352, %v1715
    %v1717 = vpop.f32.mrb[0].mxu0
    %v1718 = vadd.f32 %v1354, %v1717
    %v1719 = vpop.f32.mrb[0].mxu0
    %v1720 = vadd.f32 %v1356, %v1719
    %v1721 = vpop.f32.mrb[0].mxu0
    %v1722 = vadd.f32 %v1358, %v1721
    %1723 = vmatprep.mubr.bf16.mxu0 0
    %1724 = vmatmul.mubr.bf16.gmra.mrb[0].mxu0 %v807
    %v1725 = vpop.f32.mrb[0].mxu0
    %v1726 = vadd.f32 %v1362, %v1725
    %v1727 = vpop.f32.mrb[0].mxu0
    %v1728 = vadd.f32 %v1364, %v1727
    %v1729 = vpop.f32.mrb[0].mxu0
    %v1730 = vadd.f32 %v1366, %v1729
    %v1731 = vpop.f32.mrb[0].mxu0
    %v1732 = vadd.f32 %v1368, %v1731
    %1733 = vmatprep.mubr.bf16.mxu0 0
    %1734 = vmatmul.mubr.bf16.gmra.mrb[0].mxu0 %v810
    %v1735 = vpop.f32.mrb[0].mxu0
    %v1736 = vadd.f32 %v1372, %v1735
    %v1737 = vpop.f32.mrb[0].mxu0
    %v1738 = vadd.f32 %v1374, %v1737
    %v1739 = vpop.f32.mrb[0].mxu0
    %v1740 = vadd.f32 %v1376, %v1739
    %v1741 = vpop.f32.mrb[0].mxu0
    %v1742 = vadd.f32 %v1378, %v1741
    %1743 = vmatprep.mubr.bf16.mxu0 0
    %1744 = vmatmul.mubr.bf16.gmra.mrb[0].mxu0 %v813
    %v1745 = vpop.f32.mrb[0].mxu0
    %v1746 = vadd.f32 %v1382, %v1745
    %v1747 = vpop.f32.mrb[0].mxu0
    %v1748 = vadd.f32 %v1384, %v1747
    %v1749 = vpop.f32.mrb[0].mxu0
    %v1750 = vadd.f32 %v1386, %v1749
    %v1751 = vpop.f32.mrb[0].mxu0
    %v1752 = vadd.f32 %v1388, %v1751
    %1753 = vmatprep.mubr.bf16.mxu0 0
    %1754 = vmatmul.mubr.bf16.gmra.mrb[0].mxu0 %v816
    %v1755 = vpop.f32.mrb[0].mxu0
    %v1756 = vadd.f32 %v1392, %v1755
    %v1757 = vpop.f32.mrb[0].mxu0
    %v1758 = vadd.f32 %v1394, %v1757
    %v1759 = vpop.f32.mrb[0].mxu0
    %v1760 = vadd.f32 %v1396, %v1759
    %v1761 = vpop.f32.mrb[0].mxu0
    %v1762 = vadd.f32 %v1398, %v1761
    %1763 = vmatprep.mubr.bf16.mxu0 0
    %1764 = vmatmul.mubr.bf16.gmra.mrb[0].mxu0 %v819
    %v1765 = vpop.f32.mrb[0].mxu0
    %v1766 = vadd.f32 %v1402, %v1765
    %v1767 = vpop.f32.mrb[0].mxu0
    %v1768 = vadd.f32 %v1404, %v1767
    %v1769 = vpop.f32.mrb[0].mxu0
    %v1770 = vadd.f32 %v1406, %v1769
    %v1771 = vpop.f32.mrb[0].mxu0
    %v1772 = vadd.f32 %v1408, %v1771
    %1773 = vmatprep.mubr.bf16.mxu0 0
    %1774 = vmatmul.mubr.bf16.gmra.mrb[0].mxu0 %v822
    %v1775 = vpop.f32.mrb[0].mxu0
    %v1776 = vadd.f32 %v1412, %v1775
    %v1777 = vpop.f32.mrb[0].mxu0
    %v1778 = vadd.f32 %v1414, %v1777
    %v1779 = vpop.f32.mrb[0].mxu0
    %v1780 = vadd.f32 %v1416, %v1779
    %v1781 = vpop.f32.mrb[0].mxu0
    %v1782 = vadd.f32 %v1418, %v1781
    %1783 = vmatprep.mubr.bf16.mxu0 0
    %1784 = vmatmul.mubr.bf16.gmra.mrb[0].mxu0 %v825
    %v1785 = vpop.f32.mrb[0].mxu0
    %v1786 = vadd.f32 %v1422, %v1785
    %v1787 = vpop.f32.mrb[0].mxu0
    %v1788 = vadd.f32 %v1424, %v1787
    %v1789 = vpop.f32.mrb[0].mxu0
    %v1790 = vadd.f32 %v1426, %v1789
    %v1791 = vpop.f32.mrb[0].mxu0
    %v1792 = vadd.f32 %v1428, %v1791
    %1793 = vmatprep.mubr.bf16.mxu0 0
    %1794 = vmatmul.mubr.bf16.gmra.mrb[0].mxu0 %v828
    %v1795 = vpop.f32.mrb[0].mxu0
    %v1796 = vadd.f32 %v1432, %v1795
    %v1797 = vpop.f32.mrb[0].mxu0
    %v1798 = vadd.f32 %v1434, %v1797
    %v1799 = vpop.f32.mrb[0].mxu0
    %v1800 = vadd.f32 %v1436, %v1799
    %v1801 = vpop.f32.mrb[0].mxu0
    %v1802 = vadd.f32 %v1438, %v1801
    %1803 = vmatprep.mubr.bf16.mxu0 0
    %1804 = vmatmul.mubr.bf16.gmra.mrb[0].mxu0 %v831
    %v1805 = vpop.f32.mrb[0].mxu0
    %v1806 = vadd.f32 %v1442, %v1805
    %v1807 = vpop.f32.mrb[0].mxu0
    %v1808 = vadd.f32 %v1444, %v1807
    %v1809 = vpop.f32.mrb[0].mxu0
    %v1810 = vadd.f32 %v1446, %v1809
    %v1811 = vpop.f32.mrb[0].mxu0
    %v1812 = vadd.f32 %v1448, %v1811
    %1813 = vmatprep.mubr.bf16.mxu0 0
    %1814 = vmatmul.mubr.bf16.gmra.mrb[0].mxu0 %v834
    %v1815 = vpop.f32.mrb[0].mxu0
    %v1816 = vadd.f32 %v1452, %v1815
    %v1817 = vpop.f32.mrb[0].mxu0
    %v1818 = vadd.f32 %v1454, %v1817
    %v1819 = vpop.f32.mrb[0].mxu0
    %v1820 = vadd.f32 %v1456, %v1819
    %v1821 = vpop.f32.mrb[0].mxu0
    %v1822 = vadd.f32 %v1458, %v1821
    %1823 = vmatprep.mubr.bf16.mxu0 0
    %1824 = vmatmul.mubr.bf16.gmra.mrb[0].mxu0 %v837
    %v1825 = vpop.f32.mrb[0].mxu0
    %v1826 = vadd.f32 %v1462, %v1825
    %v1827 = vpop.f32.mrb[0].mxu0
    %v1828 = vadd.f32 %v1464, %v1827
    %v1829 = vpop.f32.mrb[0].mxu0
    %v1830 = vadd.f32 %v1466, %v1829
    %v1831 = vpop.f32.mrb[0].mxu0
    %v1832 = vadd.f32 %v1468, %v1831
    %1833 = vmatprep.mubr.bf16.mxu0 0
    %1834 = vmatmul.mubr.bf16.gmra.mrb[0].mxu0 %v840
    %v1835 = vpop.f32.mrb[0].mxu0
    %v1836 = vadd.f32 %v1472, %v1835
    %v1837 = vpop.f32.mrb[0].mxu0
    %v1838 = vadd.f32 %v1474, %v1837
    %v1839 = vpop.f32.mrb[0].mxu0
    %v1840 = vadd.f32 %v1476, %v1839
    %v1841 = vpop.f32.mrb[0].mxu0
    %v1842 = vadd.f32 %v1478, %v1841
    %1843 = vmatprep.mubr.bf16.mxu0 0
    %1844 = vmatmul.mubr.bf16.gmra.mrb[0].mxu0 %v843
    %v1845 = vpop.f32.mrb[0].mxu0
    %v1846 = vadd.f32 %v1482, %v1845
    %v1847 = vpop.f32.mrb[0].mxu0
    %v1848 = vadd.f32 %v1484, %v1847
    %v1849 = vpop.f32.mrb[0].mxu0
    %v1850 = vadd.f32 %v1486, %v1849
    %v1851 = vpop.f32.mrb[0].mxu0
    %v1852 = vadd.f32 %v1488, %v1851
    %1853 = vmatprep.mubr.bf16.mxu0 0
    %1854 = vmatmul.mubr.bf16.gmra.mrb[0].mxu0 %v846
    %v1855 = vpop.f32.mrb[0].mxu0
    %v1856 = vadd.f32 %v1492, %v1855
    %v1857 = vpop.f32.mrb[0].mxu0
    %v1858 = vadd.f32 %v1494, %v1857
    %v1859 = vpop.f32.mrb[0].mxu0
    %v1860 = vadd.f32 %v1496, %v1859
    %v1861 = vpop.f32.mrb[0].mxu0
    %v1862 = vadd.f32 %v1498, %v1861
    %1863 = vmatprep.mubr.bf16.mxu0 0
    %1864 = vmatmul.mubr.bf16.gmra.mrb[0].mxu0 %v849
    %v1865 = vpop.f32.mrb[0].mxu0
    %v1866 = vadd.f32 %v1502, %v1865
    %v1867 = vpop.f32.mrb[0].mxu0
    %v1868 = vadd.f32 %v1504, %v1867
    %v1869 = vpop.f32.mrb[0].mxu0
    %v1870 = vadd.f32 %v1506, %v1869
    %v1871 = vpop.f32.mrb[0].mxu0
    %v1872 = vadd.f32 %v1508, %v1871
    %1873 = vdwg.mxu0
    %v1874 = vpack.c.bf16 %v495, %v492
    %v1875 = vpack.c.bf16 %v503, %v500
    %v1876 = vpack.c.bf16 %v511, %v508
    %v1877 = vpack.c.bf16 %v519, %v516
    %v1878 = vpack.c.bf16 %v527, %v524
    %v1879 = vpack.c.bf16 %v535, %v532
    %v1880 = vpack.c.bf16 %v543, %v540
    %v1881 = vpack.c.bf16 %v551, %v548
    %v1882 = vpack.c.bf16 %v559, %v556
    %v1883 = vpack.c.bf16 %v567, %v564
    %v1884 = vpack.c.bf16 %v575, %v572
    %v1885 = vpack.c.bf16 %v583, %v580
    %v1886 = vpack.c.bf16 %v591, %v588
    %v1887 = vpack.c.bf16 %v599, %v596
    %v1888 = vpack.c.bf16 %v607, %v604
    %v1889 = vpack.c.bf16 %v615, %v612
    %v1890 = vpack.c.bf16 %v623, %v620
    %v1891 = vpack.c.bf16 %v631, %v628
    %v1892 = vpack.c.bf16 %v639, %v636
    %v1893 = vpack.c.bf16 %v647, %v644
    %v1894 = vpack.c.bf16 %v655, %v652
    %v1895 = vpack.c.bf16 %v663, %v660
    %v1896 = vpack.c.bf16 %v671, %v668
    %v1897 = vpack.c.bf16 %v679, %v676
    %v1898 = vpack.c.bf16 %v687, %v684
    %v1899 = vpack.c.bf16 %v695, %v692
    %v1900 = vpack.c.bf16 %v703, %v700
    %v1901 = vpack.c.bf16 %v711, %v708
    %v1902 = vpack.c.bf16 %v719, %v716
    %v1903 = vpack.c.bf16 %v727, %v724
    %v1904 = vpack.c.bf16 %v735, %v732
    %v1905 = vpack.c.bf16 %v743, %v740
    %v1906 = vld [vmem:[%s9] sm:$0xff]
    %v1907 = vld [vmem:[%s9 + $0x8] sm:$0xff]
    %v1910 = vunpack.c.l.b16 %v1906
    %v1911 = vunpack.c.h.b16 %v1906
    %v1912 = vunpack.c.l.b16 %v1907
    %v1913 = vunpack.c.h.b16 %v1907
    %v1914 = vpack.c.b16 %v1912, %v1910
    %v1915 = vpack.c.b16 %v1913, %v1911
    %v1919 = vsel %vm360, %v1874, 0
    %v1922 = vsel %vm360, %v1875, 0
    %v1925 = vsel %vm360, %v1876, 0
    %v1928 = vsel %vm360, %v1877, 0
    %v1931 = vsel %vm360, %v1878, 0
    %v1934 = vsel %vm360, %v1879, 0
    %v1937 = vsel %vm360, %v1880, 0
    %v1940 = vsel %vm360, %v1881, 0
    %v1943 = vsel %vm360, %v1882, 0
    %v1946 = vsel %vm360, %v1883, 0
    %v1949 = vsel %vm360, %v1884, 0
    %v1952 = vsel %vm360, %v1885, 0
    %v1955 = vsel %vm360, %v1886, 0
    %v1958 = vsel %vm360, %v1887, 0
    %v1961 = vsel %vm360, %v1888, 0
    %v1964 = vsel %vm360, %v1889, 0
    %v1967 = vsel %vm360, %v1890, 0
    %v1970 = vsel %vm360, %v1891, 0
    %v1973 = vsel %vm360, %v1892, 0
    %v1976 = vsel %vm360, %v1893, 0
    %v1979 = vsel %vm360, %v1894, 0
    %v1982 = vsel %vm360, %v1895, 0
    %v1985 = vsel %vm360, %v1896, 0
    %v1988 = vsel %vm360, %v1897, 0
    %v1991 = vsel %vm360, %v1898, 0
    %v1994 = vsel %vm360, %v1899, 0
    %v1997 = vsel %vm360, %v1900, 0
    %v2000 = vsel %vm360, %v1901, 0
    %v2003 = vsel %vm360, %v1902, 0
    %v2006 = vsel %vm360, %v1903, 0
    %v2009 = vsel %vm360, %v1904, 0
    %v2012 = vsel %vm360, %v1905, 0
    %2014 = vmatprep.subr.bf16.mxu0 %v1915
    %2015 = vmatpush1.bf16.msra.mxu0 %v1914
    %2016 = vmatprep.subr.bf16.mxu0 0
    %2017 = vmatpush1.bf16.msra.mxu0 0
    %2018 = vmatprep.subr.bf16.mxu0 0
    %2019 = vmatpush1.bf16.msra.mxu0 0
    %2020 = vmatprep.subr.bf16.mxu0 0
    %2021 = vmatpush1.bf16.msra.mxu0 0
    %2022 = vmatprep.subr.bf16.mxu0 0
    %2023 = vmatpush1.bf16.msra.mxu0 0
    %2024 = vmatprep.subr.bf16.mxu0 0
    %2025 = vmatpush1.bf16.msra.mxu0 0
    %2026 = vmatprep.subr.bf16.mxu0 0
    %2027 = vmatpush1.bf16.msra.mxu0 0
    %2028 = vmatprep.subr.bf16.mxu0 0
    %2029 = vmatpush1.bf16.msra.mxu0 0
    %2030 = vmatprep.subr.bf16.mxu0 0
    %2031 = vmatpush1.bf16.msra.mxu0 0
    %2032 = vmatprep.subr.bf16.mxu0 0
    %2033 = vmatpush1.bf16.msra.mxu0 0
    %2034 = vmatprep.subr.bf16.mxu0 0
    %2035 = vmatpush1.bf16.msra.mxu0 0
    %2036 = vmatprep.subr.bf16.mxu0 0
    %2037 = vmatpush1.bf16.msra.mxu0 0
    %2038 = vmatprep.subr.bf16.mxu0 0
    %2039 = vmatpush1.bf16.msra.mxu0 0
    %2040 = vmatprep.subr.bf16.mxu0 0
    %2041 = vmatpush1.bf16.msra.mxu0 0
    %2042 = vmatprep.subr.bf16.mxu0 0
    %2043 = vmatpush1.bf16.msra.mxu0 0
    %2044 = vmatprep.subr.bf16.mxu0 0
    %2045 = vmatpush1.bf16.msra.mxu0 0
    %2046 = vmatprep.mubr.bf16.mxu0 0
    %2047 = vmatmul.mubr.bf16.gmra.mrb[0].mxu0 %v1919
    %v2048 = vpop.f32.mrb[0].mxu0
    %v2049 = vadd.f32 0.0, %v2048
    %v2050 = vpop.f32.mrb[0].mxu0
    %v2051 = vadd.f32 0.0, %v2050
    %v2052 = vpop.f32.mrb[0].mxu0
    %v2053 = vadd.f32 0.0, %v2052
    %v2054 = vpop.f32.mrb[0].mxu0
    %v2055 = vadd.f32 0.0, %v2054
    %2056 = vmatprep.mubr.bf16.mxu0 0
    %2057 = vmatmul.mubr.bf16.gmra.mrb[0].mxu0 %v1922
    %v2058 = vpop.f32.mrb[0].mxu0
    %v2059 = vadd.f32 0.0, %v2058
    %v2060 = vpop.f32.mrb[0].mxu0
    %v2061 = vadd.f32 0.0, %v2060
    %v2062 = vpop.f32.mrb[0].mxu0
    %v2063 = vadd.f32 0.0, %v2062
    %v2064 = vpop.f32.mrb[0].mxu0
    %v2065 = vadd.f32 0.0, %v2064
    %2066 = vmatprep.mubr.bf16.mxu0 0
    %2067 = vmatmul.mubr.bf16.gmra.mrb[0].mxu0 %v1925
    %v2068 = vpop.f32.mrb[0].mxu0
    %v2069 = vadd.f32 0.0, %v2068
    %v2070 = vpop.f32.mrb[0].mxu0
    %v2071 = vadd.f32 0.0, %v2070
    %v2072 = vpop.f32.mrb[0].mxu0
    %v2073 = vadd.f32 0.0, %v2072
    %v2074 = vpop.f32.mrb[0].mxu0
    %v2075 = vadd.f32 0.0, %v2074
    %2076 = vmatprep.mubr.bf16.mxu0 0
    %2077 = vmatmul.mubr.bf16.gmra.mrb[0].mxu0 %v1928
    %v2078 = vpop.f32.mrb[0].mxu0
    %v2079 = vadd.f32 0.0, %v2078
    %v2080 = vpop.f32.mrb[0].mxu0
    %v2081 = vadd.f32 0.0, %v2080
    %v2082 = vpop.f32.mrb[0].mxu0
    %v2083 = vadd.f32 0.0, %v2082
    %v2084 = vpop.f32.mrb[0].mxu0
    %v2085 = vadd.f32 0.0, %v2084
    %2086 = vmatprep.mubr.bf16.mxu0 0
    %2087 = vmatmul.mubr.bf16.gmra.mrb[0].mxu0 %v1931
    %v2088 = vpop.f32.mrb[0].mxu0
    %v2089 = vadd.f32 0.0, %v2088
    %v2090 = vpop.f32.mrb[0].mxu0
    %v2091 = vadd.f32 0.0, %v2090
    %v2092 = vpop.f32.mrb[0].mxu0
    %v2093 = vadd.f32 0.0, %v2092
    %v2094 = vpop.f32.mrb[0].mxu0
    %v2095 = vadd.f32 0.0, %v2094
    %2096 = vmatprep.mubr.bf16.mxu0 0
    %2097 = vmatmul.mubr.bf16.gmra.mrb[0].mxu0 %v1934
    %v2098 = vpop.f32.mrb[0].mxu0
    %v2099 = vadd.f32 0.0, %v2098
    %v2100 = vpop.f32.mrb[0].mxu0
    %v2101 = vadd.f32 0.0, %v2100
    %v2102 = vpop.f32.mrb[0].mxu0
    %v2103 = vadd.f32 0.0, %v2102
    %v2104 = vpop.f32.mrb[0].mxu0
    %v2105 = vadd.f32 0.0, %v2104
    %2106 = vmatprep.mubr.bf16.mxu0 0
    %2107 = vmatmul.mubr.bf16.gmra.mrb[0].mxu0 %v1937
    %v2108 = vpop.f32.mrb[0].mxu0
    %v2109 = vadd.f32 0.0, %v2108
    %v2110 = vpop.f32.mrb[0].mxu0
    %v2111 = vadd.f32 0.0, %v2110
    %v2112 = vpop.f32.mrb[0].mxu0
    %v2113 = vadd.f32 0.0, %v2112
    %v2114 = vpop.f32.mrb[0].mxu0
    %v2115 = vadd.f32 0.0, %v2114
    %2116 = vmatprep.mubr.bf16.mxu0 0
    %2117 = vmatmul.mubr.bf16.gmra.mrb[0].mxu0 %v1940
    %v2118 = vpop.f32.mrb[0].mxu0
    %v2119 = vadd.f32 0.0, %v2118
    %v2120 = vpop.f32.mrb[0].mxu0
    %v2121 = vadd.f32 0.0, %v2120
    %v2122 = vpop.f32.mrb[0].mxu0
    %v2123 = vadd.f32 0.0, %v2122
    %v2124 = vpop.f32.mrb[0].mxu0
    %v2125 = vadd.f32 0.0, %v2124
    %2126 = vmatprep.mubr.bf16.mxu0 0
    %2127 = vmatmul.mubr.bf16.gmra.mrb[0].mxu0 %v1943
    %v2128 = vpop.f32.mrb[0].mxu0
    %v2129 = vadd.f32 0.0, %v2128
    %v2130 = vpop.f32.mrb[0].mxu0
    %v2131 = vadd.f32 0.0, %v2130
    %v2132 = vpop.f32.mrb[0].mxu0
    %v2133 = vadd.f32 0.0, %v2132
    %v2134 = vpop.f32.mrb[0].mxu0
    %v2135 = vadd.f32 0.0, %v2134
    %2136 = vmatprep.mubr.bf16.mxu0 0
    %2137 = vmatmul.mubr.bf16.gmra.mrb[0].mxu0 %v1946
    %v2138 = vpop.f32.mrb[0].mxu0
    %v2139 = vadd.f32 0.0, %v2138
    %v2140 = vpop.f32.mrb[0].mxu0
    %v2141 = vadd.f32 0.0, %v2140
    %v2142 = vpop.f32.mrb[0].mxu0
    %v2143 = vadd.f32 0.0, %v2142
    %v2144 = vpop.f32.mrb[0].mxu0
    %v2145 = vadd.f32 0.0, %v2144
    %2146 = vmatprep.mubr.bf16.mxu0 0
    %2147 = vmatmul.mubr.bf16.gmra.mrb[0].mxu0 %v1949
    %v2148 = vpop.f32.mrb[0].mxu0
    %v2149 = vadd.f32 0.0, %v2148
    %v2150 = vpop.f32.mrb[0].mxu0
    %v2151 = vadd.f32 0.0, %v2150
    %v2152 = vpop.f32.mrb[0].mxu0
    %v2153 = vadd.f32 0.0, %v2152
    %v2154 = vpop.f32.mrb[0].mxu0
    %v2155 = vadd.f32 0.0, %v2154
    %2156 = vmatprep.mubr.bf16.mxu0 0
    %2157 = vmatmul.mubr.bf16.gmra.mrb[0].mxu0 %v1952
    %v2158 = vpop.f32.mrb[0].mxu0
    %v2159 = vadd.f32 0.0, %v2158
    %v2160 = vpop.f32.mrb[0].mxu0
    %v2161 = vadd.f32 0.0, %v2160
    %v2162 = vpop.f32.mrb[0].mxu0
    %v2163 = vadd.f32 0.0, %v2162
    %v2164 = vpop.f32.mrb[0].mxu0
    %v2165 = vadd.f32 0.0, %v2164
    %2166 = vmatprep.mubr.bf16.mxu0 0
    %2167 = vmatmul.mubr.bf16.gmra.mrb[0].mxu0 %v1955
    %v2168 = vpop.f32.mrb[0].mxu0
    %v2169 = vadd.f32 0.0, %v2168
    %v2170 = vpop.f32.mrb[0].mxu0
    %v2171 = vadd.f32 0.0, %v2170
    %v2172 = vpop.f32.mrb[0].mxu0
    %v2173 = vadd.f32 0.0, %v2172
    %v2174 = vpop.f32.mrb[0].mxu0
    %v2175 = vadd.f32 0.0, %v2174
    %2176 = vmatprep.mubr.bf16.mxu0 0
    %2177 = vmatmul.mubr.bf16.gmra.mrb[0].mxu0 %v1958
    %v2178 = vpop.f32.mrb[0].mxu0
    %v2179 = vadd.f32 0.0, %v2178
    %v2180 = vpop.f32.mrb[0].mxu0
    %v2181 = vadd.f32 0.0, %v2180
    %v2182 = vpop.f32.mrb[0].mxu0
    %v2183 = vadd.f32 0.0, %v2182
    %v2184 = vpop.f32.mrb[0].mxu0
    %v2185 = vadd.f32 0.0, %v2184
    %2186 = vmatprep.mubr.bf16.mxu0 0
    %2187 = vmatmul.mubr.bf16.gmra.mrb[0].mxu0 %v1961
    %v2188 = vpop.f32.mrb[0].mxu0
    %v2189 = vadd.f32 0.0, %v2188
    %v2190 = vpop.f32.mrb[0].mxu0
    %v2191 = vadd.f32 0.0, %v2190
    %v2192 = vpop.f32.mrb[0].mxu0
    %v2193 = vadd.f32 0.0, %v2192
    %v2194 = vpop.f32.mrb[0].mxu0
    %v2195 = vadd.f32 0.0, %v2194
    %2196 = vmatprep.mubr.bf16.mxu0 0
    %2197 = vmatmul.mubr.bf16.gmra.mrb[0].mxu0 %v1964
    %v2198 = vpop.f32.mrb[0].mxu0
    %v2199 = vadd.f32 0.0, %v2198
    %v2200 = vpop.f32.mrb[0].mxu0
    %v2201 = vadd.f32 0.0, %v2200
    %v2202 = vpop.f32.mrb[0].mxu0
    %v2203 = vadd.f32 0.0, %v2202
    %v2204 = vpop.f32.mrb[0].mxu0
    %v2205 = vadd.f32 0.0, %v2204
    %2206 = vmatprep.mubr.bf16.mxu0 0
    %2207 = vmatmul.mubr.bf16.gmra.mrb[0].mxu0 %v1967
    %v2208 = vpop.f32.mrb[0].mxu0
    %v2209 = vadd.f32 0.0, %v2208
    %v2210 = vpop.f32.mrb[0].mxu0
    %v2211 = vadd.f32 0.0, %v2210
    %v2212 = vpop.f32.mrb[0].mxu0
    %v2213 = vadd.f32 0.0, %v2212
    %v2214 = vpop.f32.mrb[0].mxu0
    %v2215 = vadd.f32 0.0, %v2214
    %2216 = vmatprep.mubr.bf16.mxu0 0
    %2217 = vmatmul.mubr.bf16.gmra.mrb[0].mxu0 %v1970
    %v2218 = vpop.f32.mrb[0].mxu0
    %v2219 = vadd.f32 0.0, %v2218
    %v2220 = vpop.f32.mrb[0].mxu0
    %v2221 = vadd.f32 0.0, %v2220
    %v2222 = vpop.f32.mrb[0].mxu0
    %v2223 = vadd.f32 0.0, %v2222
    %v2224 = vpop.f32.mrb[0].mxu0
    %v2225 = vadd.f32 0.0, %v2224
    %2226 = vmatprep.mubr.bf16.mxu0 0
    %2227 = vmatmul.mubr.bf16.gmra.mrb[0].mxu0 %v1973
    %v2228 = vpop.f32.mrb[0].mxu0
    %v2229 = vadd.f32 0.0, %v2228
    %v2230 = vpop.f32.mrb[0].mxu0
    %v2231 = vadd.f32 0.0, %v2230
    %v2232 = vpop.f32.mrb[0].mxu0
    %v2233 = vadd.f32 0.0, %v2232
    %v2234 = vpop.f32.mrb[0].mxu0
    %v2235 = vadd.f32 0.0, %v2234
    %2236 = vmatprep.mubr.bf16.mxu0 0
    %2237 = vmatmul.mubr.bf16.gmra.mrb[0].mxu0 %v1976
    %v2238 = vpop.f32.mrb[0].mxu0
    %v2239 = vadd.f32 0.0, %v2238
    %v2240 = vpop.f32.mrb[0].mxu0
    %v2241 = vadd.f32 0.0, %v2240
    %v2242 = vpop.f32.mrb[0].mxu0
    %v2243 = vadd.f32 0.0, %v2242
    %v2244 = vpop.f32.mrb[0].mxu0
    %v2245 = vadd.f32 0.0, %v2244
    %2246 = vmatprep.mubr.bf16.mxu0 0
    %2247 = vmatmul.mubr.bf16.gmra.mrb[0].mxu0 %v1979
    %v2248 = vpop.f32.mrb[0].mxu0
    %v2249 = vadd.f32 0.0, %v2248
    %v2250 = vpop.f32.mrb[0].mxu0
    %v2251 = vadd.f32 0.0, %v2250
    %v2252 = vpop.f32.mrb[0].mxu0
    %v2253 = vadd.f32 0.0, %v2252
    %v2254 = vpop.f32.mrb[0].mxu0
    %v2255 = vadd.f32 0.0, %v2254
    %2256 = vmatprep.mubr.bf16.mxu0 0
    %2257 = vmatmul.mubr.bf16.gmra.mrb[0].mxu0 %v1982
    %v2258 = vpop.f32.mrb[0].mxu0
    %v2259 = vadd.f32 0.0, %v2258
    %v2260 = vpop.f32.mrb[0].mxu0
    %v2261 = vadd.f32 0.0, %v2260
    %v2262 = vpop.f32.mrb[0].mxu0
    %v2263 = vadd.f32 0.0, %v2262
    %v2264 = vpop.f32.mrb[0].mxu0
    %v2265 = vadd.f32 0.0, %v2264
    %2266 = vmatprep.mubr.bf16.mxu0 0
    %2267 = vmatmul.mubr.bf16.gmra.mrb[0].mxu0 %v1985
    %v2268 = vpop.f32.mrb[0].mxu0
    %v2269 = vadd.f32 0.0, %v2268
    %v2270 = vpop.f32.mrb[0].mxu0
    %v2271 = vadd.f32 0.0, %v2270
    %v2272 = vpop.f32.mrb[0].mxu0
    %v2273 = vadd.f32 0.0, %v2272
    %v2274 = vpop.f32.mrb[0].mxu0
    %v2275 = vadd.f32 0.0, %v2274
    %2276 = vmatprep.mubr.bf16.mxu0 0
    %2277 = vmatmul.mubr.bf16.gmra.mrb[0].mxu0 %v1988
    %v2278 = vpop.f32.mrb[0].mxu0
    %v2279 = vadd.f32 0.0, %v2278
    %v2280 = vpop.f32.mrb[0].mxu0
    %v2281 = vadd.f32 0.0, %v2280
    %v2282 = vpop.f32.mrb[0].mxu0
    %v2283 = vadd.f32 0.0, %v2282
    %v2284 = vpop.f32.mrb[0].mxu0
    %v2285 = vadd.f32 0.0, %v2284
    %2286 = vmatprep.mubr.bf16.mxu0 0
    %2287 = vmatmul.mubr.bf16.gmra.mrb[0].mxu0 %v1991
    %v2288 = vpop.f32.mrb[0].mxu0
    %v2289 = vadd.f32 0.0, %v2288
    %v2290 = vpop.f32.mrb[0].mxu0
    %v2291 = vadd.f32 0.0, %v2290
    %v2292 = vpop.f32.mrb[0].mxu0
    %v2293 = vadd.f32 0.0, %v2292
    %v2294 = vpop.f32.mrb[0].mxu0
    %v2295 = vadd.f32 0.0, %v2294
    %2296 = vmatprep.mubr.bf16.mxu0 0
    %2297 = vmatmul.mubr.bf16.gmra.mrb[0].mxu0 %v1994
    %v2298 = vpop.f32.mrb[0].mxu0
    %v2299 = vadd.f32 0.0, %v2298
    %v2300 = vpop.f32.mrb[0].mxu0
    %v2301 = vadd.f32 0.0, %v2300
    %v2302 = vpop.f32.mrb[0].mxu0
    %v2303 = vadd.f32 0.0, %v2302
    %v2304 = vpop.f32.mrb[0].mxu0
    %v2305 = vadd.f32 0.0, %v2304
    %2306 = vmatprep.mubr.bf16.mxu0 0
    %2307 = vmatmul.mubr.bf16.gmra.mrb[0].mxu0 %v1997
    %v2308 = vpop.f32.mrb[0].mxu0
    %v2309 = vadd.f32 0.0, %v2308
    %v2310 = vpop.f32.mrb[0].mxu0
    %v2311 = vadd.f32 0.0, %v2310
    %v2312 = vpop.f32.mrb[0].mxu0
    %v2313 = vadd.f32 0.0, %v2312
    %v2314 = vpop.f32.mrb[0].mxu0
    %v2315 = vadd.f32 0.0, %v2314
    %2316 = vmatprep.mubr.bf16.mxu0 0
    %2317 = vmatmul.mubr.bf16.gmra.mrb[0].mxu0 %v2000
    %v2318 = vpop.f32.mrb[0].mxu0
    %v2319 = vadd.f32 0.0, %v2318
    %v2320 = vpop.f32.mrb[0].mxu0
    %v2321 = vadd.f32 0.0, %v2320
    %v2322 = vpop.f32.mrb[0].mxu0
    %v2323 = vadd.f32 0.0, %v2322
    %v2324 = vpop.f32.mrb[0].mxu0
    %v2325 = vadd.f32 0.0, %v2324
    %2326 = vmatprep.mubr.bf16.mxu0 0
    %2327 = vmatmul.mubr.bf16.gmra.mrb[0].mxu0 %v2003
    %v2328 = vpop.f32.mrb[0].mxu0
    %v2329 = vadd.f32 0.0, %v2328
    %v2330 = vpop.f32.mrb[0].mxu0
    %v2331 = vadd.f32 0.0, %v2330
    %v2332 = vpop.f32.mrb[0].mxu0
    %v2333 = vadd.f32 0.0, %v2332
    %v2334 = vpop.f32.mrb[0].mxu0
    %v2335 = vadd.f32 0.0, %v2334
    %2336 = vmatprep.mubr.bf16.mxu0 0
    %2337 = vmatmul.mubr.bf16.gmra.mrb[0].mxu0 %v2006
    %v2338 = vpop.f32.mrb[0].mxu0
    %v2339 = vadd.f32 0.0, %v2338
    %v2340 = vpop.f32.mrb[0].mxu0
    %v2341 = vadd.f32 0.0, %v2340
    %v2342 = vpop.f32.mrb[0].mxu0
    %v2343 = vadd.f32 0.0, %v2342
    %v2344 = vpop.f32.mrb[0].mxu0
    %v2345 = vadd.f32 0.0, %v2344
    %2346 = vmatprep.mubr.bf16.mxu0 0
    %2347 = vmatmul.mubr.bf16.gmra.mrb[0].mxu0 %v2009
    %v2348 = vpop.f32.mrb[0].mxu0
    %v2349 = vadd.f32 0.0, %v2348
    %v2350 = vpop.f32.mrb[0].mxu0
    %v2351 = vadd.f32 0.0, %v2350
    %v2352 = vpop.f32.mrb[0].mxu0
    %v2353 = vadd.f32 0.0, %v2352
    %v2354 = vpop.f32.mrb[0].mxu0
    %v2355 = vadd.f32 0.0, %v2354
    %2356 = vmatprep.mubr.bf16.mxu0 0
    %2357 = vmatmul.mubr.bf16.gmra.mrb[0].mxu0 %v2012
    %v2358 = vpop.f32.mrb[0].mxu0
    %v2359 = vadd.f32 0.0, %v2358
    %v2360 = vpop.f32.mrb[0].mxu0
    %v2361 = vadd.f32 0.0, %v2360
    %v2362 = vpop.f32.mrb[0].mxu0
    %v2363 = vadd.f32 0.0, %v2362
    %v2364 = vpop.f32.mrb[0].mxu0
    %v2365 = vadd.f32 0.0, %v2364
    %2366 = vdwg.mxu0
    %v2367 = vadd.f32 %v1556, %v2049
    %v2368 = vadd.f32 %v1558, %v2051
    %v2369 = vadd.f32 %v1560, %v2053
    %v2370 = vadd.f32 %v1562, %v2055
    %v2371 = vadd.f32 %v1566, %v2059
    %v2372 = vadd.f32 %v1568, %v2061
    %v2373 = vadd.f32 %v1570, %v2063
    %v2374 = vadd.f32 %v1572, %v2065
    %v2375 = vadd.f32 %v1576, %v2069
    %v2376 = vadd.f32 %v1578, %v2071
    %v2377 = vadd.f32 %v1580, %v2073
    %v2378 = vadd.f32 %v1582, %v2075
    %v2379 = vadd.f32 %v1586, %v2079
    %v2380 = vadd.f32 %v1588, %v2081
    %v2381 = vadd.f32 %v1590, %v2083
    %v2382 = vadd.f32 %v1592, %v2085
    %v2383 = vadd.f32 %v1596, %v2089
    %v2384 = vadd.f32 %v1598, %v2091
    %v2385 = vadd.f32 %v1600, %v2093
    %v2386 = vadd.f32 %v1602, %v2095
    %v2387 = vadd.f32 %v1606, %v2099
    %v2388 = vadd.f32 %v1608, %v2101
    %v2389 = vadd.f32 %v1610, %v2103
    %v2390 = vadd.f32 %v1612, %v2105
    %v2391 = vadd.f32 %v1616, %v2109
    %v2392 = vadd.f32 %v1618, %v2111
    %v2393 = vadd.f32 %v1620, %v2113
    %v2394 = vadd.f32 %v1622, %v2115
    %v2395 = vadd.f32 %v1626, %v2119
    %v2396 = vadd.f32 %v1628, %v2121
    %v2397 = vadd.f32 %v1630, %v2123
    %v2398 = vadd.f32 %v1632, %v2125
    %v2399 = vadd.f32 %v1636, %v2129
    %v2400 = vadd.f32 %v1638, %v2131
    %v2401 = vadd.f32 %v1640, %v2133
    %v2402 = vadd.f32 %v1642, %v2135
    %v2403 = vadd.f32 %v1646, %v2139
    %v2404 = vadd.f32 %v1648, %v2141
    %v2405 = vadd.f32 %v1650, %v2143
    %v2406 = vadd.f32 %v1652, %v2145
    %v2407 = vadd.f32 %v1656, %v2149
    %v2408 = vadd.f32 %v1658, %v2151
    %v2409 = vadd.f32 %v1660, %v2153
    %v2410 = vadd.f32 %v1662, %v2155
    %v2411 = vadd.f32 %v1666, %v2159
    %v2412 = vadd.f32 %v1668, %v2161
    %v2413 = vadd.f32 %v1670, %v2163
    %v2414 = vadd.f32 %v1672, %v2165
    %v2415 = vadd.f32 %v1676, %v2169
    %v2416 = vadd.f32 %v1678, %v2171
    %v2417 = vadd.f32 %v1680, %v2173
    %v2418 = vadd.f32 %v1682, %v2175
    %v2419 = vadd.f32 %v1686, %v2179
    %v2420 = vadd.f32 %v1688, %v2181
    %v2421 = vadd.f32 %v1690, %v2183
    %v2422 = vadd.f32 %v1692, %v2185
    %v2423 = vadd.f32 %v1696, %v2189
    %v2424 = vadd.f32 %v1698, %v2191
    %v2425 = vadd.f32 %v1700, %v2193
    %v2426 = vadd.f32 %v1702, %v2195
    %v2427 = vadd.f32 %v1706, %v2199
    %v2428 = vadd.f32 %v1708, %v2201
    %v2429 = vadd.f32 %v1710, %v2203
    %v2430 = vadd.f32 %v1712, %v2205
    %v2431 = vadd.f32 %v1716, %v2209
    %v2432 = vadd.f32 %v1718, %v2211
    %v2433 = vadd.f32 %v1720, %v2213
    %v2434 = vadd.f32 %v1722, %v2215
    %v2435 = vadd.f32 %v1726, %v2219
    %v2436 = vadd.f32 %v1728, %v2221
    %v2437 = vadd.f32 %v1730, %v2223
    %v2438 = vadd.f32 %v1732, %v2225
    %v2439 = vadd.f32 %v1736, %v2229
    %v2440 = vadd.f32 %v1738, %v2231
    %v2441 = vadd.f32 %v1740, %v2233
    %v2442 = vadd.f32 %v1742, %v2235
    %v2443 = vadd.f32 %v1746, %v2239
    %v2444 = vadd.f32 %v1748, %v2241
    %v2445 = vadd.f32 %v1750, %v2243
    %v2446 = vadd.f32 %v1752, %v2245
    %v2447 = vadd.f32 %v1756, %v2249
    %v2448 = vadd.f32 %v1758, %v2251
    %v2449 = vadd.f32 %v1760, %v2253
    %v2450 = vadd.f32 %v1762, %v2255
    %v2451 = vadd.f32 %v1766, %v2259
    %v2452 = vadd.f32 %v1768, %v2261
    %v2453 = vadd.f32 %v1770, %v2263
    %v2454 = vadd.f32 %v1772, %v2265
    %v2455 = vadd.f32 %v1776, %v2269
    %v2456 = vadd.f32 %v1778, %v2271
    %v2457 = vadd.f32 %v1780, %v2273
    %v2458 = vadd.f32 %v1782, %v2275
    %v2459 = vadd.f32 %v1786, %v2279
    %v2460 = vadd.f32 %v1788, %v2281
    %v2461 = vadd.f32 %v1790, %v2283
    %v2462 = vadd.f32 %v1792, %v2285
    %v2463 = vadd.f32 %v1796, %v2289
    %v2464 = vadd.f32 %v1798, %v2291
    %v2465 = vadd.f32 %v1800, %v2293
    %v2466 = vadd.f32 %v1802, %v2295
    %v2467 = vadd.f32 %v1806, %v2299
    %v2468 = vadd.f32 %v1808, %v2301
    %v2469 = vadd.f32 %v1810, %v2303
    %v2470 = vadd.f32 %v1812, %v2305
    %v2471 = vadd.f32 %v1816, %v2309
    %v2472 = vadd.f32 %v1818, %v2311
    %v2473 = vadd.f32 %v1820, %v2313
    %v2474 = vadd.f32 %v1822, %v2315
    %v2475 = vadd.f32 %v1826, %v2319
    %v2476 = vadd.f32 %v1828, %v2321
    %v2477 = vadd.f32 %v1830, %v2323
    %v2478 = vadd.f32 %v1832, %v2325
    %v2479 = vadd.f32 %v1836, %v2329
    %v2480 = vadd.f32 %v1838, %v2331
    %v2481 = vadd.f32 %v1840, %v2333
    %v2482 = vadd.f32 %v1842, %v2335
    %v2483 = vadd.f32 %v1846, %v2339
    %v2484 = vadd.f32 %v1848, %v2341
    %v2485 = vadd.f32 %v1850, %v2343
    %v2486 = vadd.f32 %v1852, %v2345
    %v2487 = vadd.f32 %v1856, %v2349
    %v2488 = vadd.f32 %v1858, %v2351
    %v2489 = vadd.f32 %v1860, %v2353
    %v2490 = vadd.f32 %v1862, %v2355
    %v2491 = vadd.f32 %v1866, %v2359
    %v2492 = vadd.f32 %v1868, %v2361
    %v2493 = vadd.f32 %v1870, %v2363
    %v2494 = vadd.f32 %v1872, %v2365
    %v2495 = vpack.c.bf16 %v893, %v890
    %v2496 = vpack.c.bf16 %v901, %v898
    %v2497 = vpack.c.bf16 %v909, %v906
    %v2498 = vpack.c.bf16 %v917, %v914
    %v2499 = vpack.c.bf16 %v925, %v922
    %v2500 = vpack.c.bf16 %v933, %v930
    %v2501 = vpack.c.bf16 %v941, %v938
    %v2502 = vpack.c.bf16 %v949, %v946
    %v2503 = vpack.c.bf16 %v957, %v954
    %v2504 = vpack.c.bf16 %v965, %v962
    %v2505 = vpack.c.bf16 %v973, %v970
    %v2506 = vpack.c.bf16 %v981, %v978
    %v2507 = vpack.c.bf16 %v989, %v986
    %v2508 = vpack.c.bf16 %v997, %v994
    %v2509 = vpack.c.bf16 %v1005, %v1002
    %v2510 = vpack.c.bf16 %v1013, %v1010
    %v2511 = vpack.c.bf16 %v1021, %v1018
    %v2512 = vpack.c.bf16 %v1029, %v1026
    %v2513 = vpack.c.bf16 %v1037, %v1034
    %v2514 = vpack.c.bf16 %v1045, %v1042
    %v2515 = vpack.c.bf16 %v1053, %v1050
    %v2516 = vpack.c.bf16 %v1061, %v1058
    %v2517 = vpack.c.bf16 %v1069, %v1066
    %v2518 = vpack.c.bf16 %v1077, %v1074
    %v2519 = vpack.c.bf16 %v1085, %v1082
    %v2520 = vpack.c.bf16 %v1093, %v1090
    %v2521 = vpack.c.bf16 %v1101, %v1098
    %v2522 = vpack.c.bf16 %v1109, %v1106
    %v2523 = vpack.c.bf16 %v1117, %v1114
    %v2524 = vpack.c.bf16 %v1125, %v1122
    %v2525 = vpack.c.bf16 %v1133, %v1130
    %v2526 = vpack.c.bf16 %v1141, %v1138
    %v2527 = vld [vmem:[%s10] sm:$0xff]
    %v2528 = vld [vmem:[%s10 + $0x8] sm:$0xff]
    %v2531 = vunpack.c.l.b16 %v2527
    %v2532 = vunpack.c.h.b16 %v2527
    %v2533 = vunpack.c.l.b16 %v2528
    %v2534 = vunpack.c.h.b16 %v2528
    %v2535 = vpack.c.b16 %v2533, %v2531
    %v2536 = vpack.c.b16 %v2534, %v2532
    %v2540 = vsel %vm360, %v2495, 0
    %v2543 = vsel %vm360, %v2496, 0
    %v2546 = vsel %vm360, %v2497, 0
    %v2549 = vsel %vm360, %v2498, 0
    %v2552 = vsel %vm360, %v2499, 0
    %v2555 = vsel %vm360, %v2500, 0
    %v2558 = vsel %vm360, %v2501, 0
    %v2561 = vsel %vm360, %v2502, 0
    %v2564 = vsel %vm360, %v2503, 0
    %v2567 = vsel %vm360, %v2504, 0
    %v2570 = vsel %vm360, %v2505, 0
    %v2573 = vsel %vm360, %v2506, 0
    %v2576 = vsel %vm360, %v2507, 0
    %v2579 = vsel %vm360, %v2508, 0
    %v2582 = vsel %vm360, %v2509, 0
    %v2585 = vsel %vm360, %v2510, 0
    %v2588 = vsel %vm360, %v2511, 0
    %v2591 = vsel %vm360, %v2512, 0
    %v2594 = vsel %vm360, %v2513, 0
    %v2597 = vsel %vm360, %v2514, 0
    %v2600 = vsel %vm360, %v2515, 0
    %v2603 = vsel %vm360, %v2516, 0
    %v2606 = vsel %vm360, %v2517, 0
    %v2609 = vsel %vm360, %v2518, 0
    %v2612 = vsel %vm360, %v2519, 0
    %v2615 = vsel %vm360, %v2520, 0
    %v2618 = vsel %vm360, %v2521, 0
    %v2621 = vsel %vm360, %v2522, 0
    %v2624 = vsel %vm360, %v2523, 0
    %v2627 = vsel %vm360, %v2524, 0
    %v2630 = vsel %vm360, %v2525, 0
    %v2633 = vsel %vm360, %v2526, 0
    %2635 = vmatprep.subr.bf16.mxu0 %v2536
    %2636 = vmatpush1.bf16.msra.mxu0 %v2535
    %2637 = vmatprep.subr.bf16.mxu0 0
    %2638 = vmatpush1.bf16.msra.mxu0 0
    %2639 = vmatprep.subr.bf16.mxu0 0
    %2640 = vmatpush1.bf16.msra.mxu0 0
    %2641 = vmatprep.subr.bf16.mxu0 0
    %2642 = vmatpush1.bf16.msra.mxu0 0
    %2643 = vmatprep.subr.bf16.mxu0 0
    %2644 = vmatpush1.bf16.msra.mxu0 0
    %2645 = vmatprep.subr.bf16.mxu0 0
    %2646 = vmatpush1.bf16.msra.mxu0 0
    %2647 = vmatprep.subr.bf16.mxu0 0
    %2648 = vmatpush1.bf16.msra.mxu0 0
    %2649 = vmatprep.subr.bf16.mxu0 0
    %2650 = vmatpush1.bf16.msra.mxu0 0
    %2651 = vmatprep.subr.bf16.mxu0 0
    %2652 = vmatpush1.bf16.msra.mxu0 0
    %2653 = vmatprep.subr.bf16.mxu0 0
    %2654 = vmatpush1.bf16.msra.mxu0 0
    %2655 = vmatprep.subr.bf16.mxu0 0
    %2656 = vmatpush1.bf16.msra.mxu0 0
    %2657 = vmatprep.subr.bf16.mxu0 0
    %2658 = vmatpush1.bf16.msra.mxu0 0
    %2659 = vmatprep.subr.bf16.mxu0 0
    %2660 = vmatpush1.bf16.msra.mxu0 0
    %2661 = vmatprep.subr.bf16.mxu0 0
    %2662 = vmatpush1.bf16.msra.mxu0 0
    %2663 = vmatprep.subr.bf16.mxu0 0
    %2664 = vmatpush1.bf16.msra.mxu0 0
    %2665 = vmatprep.subr.bf16.mxu0 0
    %2666 = vmatpush1.bf16.msra.mxu0 0
    %2667 = vmatprep.mubr.bf16.mxu0 0
    %2668 = vmatmul.mubr.bf16.gmra.mrb[0].mxu0 %v2540
    %v2669 = vpop.f32.mrb[0].mxu0
    %v2670 = vadd.f32 0.0, %v2669
    %v2671 = vpop.f32.mrb[0].mxu0
    %v2672 = vadd.f32 0.0, %v2671
    %v2673 = vpop.f32.mrb[0].mxu0
    %v2674 = vadd.f32 0.0, %v2673
    %v2675 = vpop.f32.mrb[0].mxu0
    %v2676 = vadd.f32 0.0, %v2675
    %2677 = vmatprep.mubr.bf16.mxu0 0
    %2678 = vmatmul.mubr.bf16.gmra.mrb[0].mxu0 %v2543
    %v2679 = vpop.f32.mrb[0].mxu0
    %v2680 = vadd.f32 0.0, %v2679
    %v2681 = vpop.f32.mrb[0].mxu0
    %v2682 = vadd.f32 0.0, %v2681
    %v2683 = vpop.f32.mrb[0].mxu0
    %v2684 = vadd.f32 0.0, %v2683
    %v2685 = vpop.f32.mrb[0].mxu0
    %v2686 = vadd.f32 0.0, %v2685
    %2687 = vmatprep.mubr.bf16.mxu0 0
    %2688 = vmatmul.mubr.bf16.gmra.mrb[0].mxu0 %v2546
    %v2689 = vpop.f32.mrb[0].mxu0
    %v2690 = vadd.f32 0.0, %v2689
    %v2691 = vpop.f32.mrb[0].mxu0
    %v2692 = vadd.f32 0.0, %v2691
    %v2693 = vpop.f32.mrb[0].mxu0
    %v2694 = vadd.f32 0.0, %v2693
    %v2695 = vpop.f32.mrb[0].mxu0
    %v2696 = vadd.f32 0.0, %v2695
    %2697 = vmatprep.mubr.bf16.mxu0 0
    %2698 = vmatmul.mubr.bf16.gmra.mrb[0].mxu0 %v2549
    %v2699 = vpop.f32.mrb[0].mxu0
    %v2700 = vadd.f32 0.0, %v2699
    %v2701 = vpop.f32.mrb[0].mxu0
    %v2702 = vadd.f32 0.0, %v2701
    %v2703 = vpop.f32.mrb[0].mxu0
    %v2704 = vadd.f32 0.0, %v2703
    %v2705 = vpop.f32.mrb[0].mxu0
    %v2706 = vadd.f32 0.0, %v2705
    %2707 = vmatprep.mubr.bf16.mxu0 0
    %2708 = vmatmul.mubr.bf16.gmra.mrb[0].mxu0 %v2552
    %v2709 = vpop.f32.mrb[0].mxu0
    %v2710 = vadd.f32 0.0, %v2709
    %v2711 = vpop.f32.mrb[0].mxu0
    %v2712 = vadd.f32 0.0, %v2711
    %v2713 = vpop.f32.mrb[0].mxu0
    %v2714 = vadd.f32 0.0, %v2713
    %v2715 = vpop.f32.mrb[0].mxu0
    %v2716 = vadd.f32 0.0, %v2715
    %2717 = vmatprep.mubr.bf16.mxu0 0
    %2718 = vmatmul.mubr.bf16.gmra.mrb[0].mxu0 %v2555
    %v2719 = vpop.f32.mrb[0].mxu0
    %v2720 = vadd.f32 0.0, %v2719
    %v2721 = vpop.f32.mrb[0].mxu0
    %v2722 = vadd.f32 0.0, %v2721
    %v2723 = vpop.f32.mrb[0].mxu0
    %v2724 = vadd.f32 0.0, %v2723
    %v2725 = vpop.f32.mrb[0].mxu0
    %v2726 = vadd.f32 0.0, %v2725
    %2727 = vmatprep.mubr.bf16.mxu0 0
    %2728 = vmatmul.mubr.bf16.gmra.mrb[0].mxu0 %v2558
    %v2729 = vpop.f32.mrb[0].mxu0
    %v2730 = vadd.f32 0.0, %v2729
    %v2731 = vpop.f32.mrb[0].mxu0
    %v2732 = vadd.f32 0.0, %v2731
    %v2733 = vpop.f32.mrb[0].mxu0
    %v2734 = vadd.f32 0.0, %v2733
    %v2735 = vpop.f32.mrb[0].mxu0
    %v2736 = vadd.f32 0.0, %v2735
    %2737 = vmatprep.mubr.bf16.mxu0 0
    %2738 = vmatmul.mubr.bf16.gmra.mrb[0].mxu0 %v2561
    %v2739 = vpop.f32.mrb[0].mxu0
    %v2740 = vadd.f32 0.0, %v2739
    %v2741 = vpop.f32.mrb[0].mxu0
    %v2742 = vadd.f32 0.0, %v2741
    %v2743 = vpop.f32.mrb[0].mxu0
    %v2744 = vadd.f32 0.0, %v2743
    %v2745 = vpop.f32.mrb[0].mxu0
    %v2746 = vadd.f32 0.0, %v2745
    %2747 = vmatprep.mubr.bf16.mxu0 0
    %2748 = vmatmul.mubr.bf16.gmra.mrb[0].mxu0 %v2564
    %v2749 = vpop.f32.mrb[0].mxu0
    %v2750 = vadd.f32 0.0, %v2749
    %v2751 = vpop.f32.mrb[0].mxu0
    %v2752 = vadd.f32 0.0, %v2751
    %v2753 = vpop.f32.mrb[0].mxu0
    %v2754 = vadd.f32 0.0, %v2753
    %v2755 = vpop.f32.mrb[0].mxu0
    %v2756 = vadd.f32 0.0, %v2755
    %2757 = vmatprep.mubr.bf16.mxu0 0
    %2758 = vmatmul.mubr.bf16.gmra.mrb[0].mxu0 %v2567
    %v2759 = vpop.f32.mrb[0].mxu0
    %v2760 = vadd.f32 0.0, %v2759
    %v2761 = vpop.f32.mrb[0].mxu0
    %v2762 = vadd.f32 0.0, %v2761
    %v2763 = vpop.f32.mrb[0].mxu0
    %v2764 = vadd.f32 0.0, %v2763
    %v2765 = vpop.f32.mrb[0].mxu0
    %v2766 = vadd.f32 0.0, %v2765
    %2767 = vmatprep.mubr.bf16.mxu0 0
    %2768 = vmatmul.mubr.bf16.gmra.mrb[0].mxu0 %v2570
    %v2769 = vpop.f32.mrb[0].mxu0
    %v2770 = vadd.f32 0.0, %v2769
    %v2771 = vpop.f32.mrb[0].mxu0
    %v2772 = vadd.f32 0.0, %v2771
    %v2773 = vpop.f32.mrb[0].mxu0
    %v2774 = vadd.f32 0.0, %v2773
    %v2775 = vpop.f32.mrb[0].mxu0
    %v2776 = vadd.f32 0.0, %v2775
    %2777 = vmatprep.mubr.bf16.mxu0 0
    %2778 = vmatmul.mubr.bf16.gmra.mrb[0].mxu0 %v2573
    %v2779 = vpop.f32.mrb[0].mxu0
    %v2780 = vadd.f32 0.0, %v2779
    %v2781 = vpop.f32.mrb[0].mxu0
    %v2782 = vadd.f32 0.0, %v2781
    %v2783 = vpop.f32.mrb[0].mxu0
    %v2784 = vadd.f32 0.0, %v2783
    %v2785 = vpop.f32.mrb[0].mxu0
    %v2786 = vadd.f32 0.0, %v2785
    %2787 = vmatprep.mubr.bf16.mxu0 0
    %2788 = vmatmul.mubr.bf16.gmra.mrb[0].mxu0 %v2576
    %v2789 = vpop.f32.mrb[0].mxu0
    %v2790 = vadd.f32 0.0, %v2789
    %v2791 = vpop.f32.mrb[0].mxu0
    %v2792 = vadd.f32 0.0, %v2791
    %v2793 = vpop.f32.mrb[0].mxu0
    %v2794 = vadd.f32 0.0, %v2793
    %v2795 = vpop.f32.mrb[0].mxu0
    %v2796 = vadd.f32 0.0, %v2795
    %2797 = vmatprep.mubr.bf16.mxu0 0
    %2798 = vmatmul.mubr.bf16.gmra.mrb[0].mxu0 %v2579
    %v2799 = vpop.f32.mrb[0].mxu0
    %v2800 = vadd.f32 0.0, %v2799
    %v2801 = vpop.f32.mrb[0].mxu0
    %v2802 = vadd.f32 0.0, %v2801
    %v2803 = vpop.f32.mrb[0].mxu0
    %v2804 = vadd.f32 0.0, %v2803
    %v2805 = vpop.f32.mrb[0].mxu0
    %v2806 = vadd.f32 0.0, %v2805
    %2807 = vmatprep.mubr.bf16.mxu0 0
    %2808 = vmatmul.mubr.bf16.gmra.mrb[0].mxu0 %v2582
    %v2809 = vpop.f32.mrb[0].mxu0
    %v2810 = vadd.f32 0.0, %v2809
    %v2811 = vpop.f32.mrb[0].mxu0
    %v2812 = vadd.f32 0.0, %v2811
    %v2813 = vpop.f32.mrb[0].mxu0
    %v2814 = vadd.f32 0.0, %v2813
    %v2815 = vpop.f32.mrb[0].mxu0
    %v2816 = vadd.f32 0.0, %v2815
    %2817 = vmatprep.mubr.bf16.mxu0 0
    %2818 = vmatmul.mubr.bf16.gmra.mrb[0].mxu0 %v2585
    %v2819 = vpop.f32.mrb[0].mxu0
    %v2820 = vadd.f32 0.0, %v2819
    %v2821 = vpop.f32.mrb[0].mxu0
    %v2822 = vadd.f32 0.0, %v2821
    %v2823 = vpop.f32.mrb[0].mxu0
    %v2824 = vadd.f32 0.0, %v2823
    %v2825 = vpop.f32.mrb[0].mxu0
    %v2826 = vadd.f32 0.0, %v2825
    %2827 = vmatprep.mubr.bf16.mxu0 0
    %2828 = vmatmul.mubr.bf16.gmra.mrb[0].mxu0 %v2588
    %v2829 = vpop.f32.mrb[0].mxu0
    %v2830 = vadd.f32 0.0, %v2829
    %v2831 = vpop.f32.mrb[0].mxu0
    %v2832 = vadd.f32 0.0, %v2831
    %v2833 = vpop.f32.mrb[0].mxu0
    %v2834 = vadd.f32 0.0, %v2833
    %v2835 = vpop.f32.mrb[0].mxu0
    %v2836 = vadd.f32 0.0, %v2835
    %2837 = vmatprep.mubr.bf16.mxu0 0
    %2838 = vmatmul.mubr.bf16.gmra.mrb[0].mxu0 %v2591
    %v2839 = vpop.f32.mrb[0].mxu0
    %v2840 = vadd.f32 0.0, %v2839
    %v2841 = vpop.f32.mrb[0].mxu0
    %v2842 = vadd.f32 0.0, %v2841
    %v2843 = vpop.f32.mrb[0].mxu0
    %v2844 = vadd.f32 0.0, %v2843
    %v2845 = vpop.f32.mrb[0].mxu0
    %v2846 = vadd.f32 0.0, %v2845
    %2847 = vmatprep.mubr.bf16.mxu0 0
    %2848 = vmatmul.mubr.bf16.gmra.mrb[0].mxu0 %v2594
    %v2849 = vpop.f32.mrb[0].mxu0
    %v2850 = vadd.f32 0.0, %v2849
    %v2851 = vpop.f32.mrb[0].mxu0
    %v2852 = vadd.f32 0.0, %v2851
    %v2853 = vpop.f32.mrb[0].mxu0
    %v2854 = vadd.f32 0.0, %v2853
    %v2855 = vpop.f32.mrb[0].mxu0
    %v2856 = vadd.f32 0.0, %v2855
    %2857 = vmatprep.mubr.bf16.mxu0 0
    %2858 = vmatmul.mubr.bf16.gmra.mrb[0].mxu0 %v2597
    %v2859 = vpop.f32.mrb[0].mxu0
    %v2860 = vadd.f32 0.0, %v2859
    %v2861 = vpop.f32.mrb[0].mxu0
    %v2862 = vadd.f32 0.0, %v2861
    %v2863 = vpop.f32.mrb[0].mxu0
    %v2864 = vadd.f32 0.0, %v2863
    %v2865 = vpop.f32.mrb[0].mxu0
    %v2866 = vadd.f32 0.0, %v2865
    %2867 = vmatprep.mubr.bf16.mxu0 0
    %2868 = vmatmul.mubr.bf16.gmra.mrb[0].mxu0 %v2600
    %v2869 = vpop.f32.mrb[0].mxu0
    %v2870 = vadd.f32 0.0, %v2869
    %v2871 = vpop.f32.mrb[0].mxu0
    %v2872 = vadd.f32 0.0, %v2871
    %v2873 = vpop.f32.mrb[0].mxu0
    %v2874 = vadd.f32 0.0, %v2873
    %v2875 = vpop.f32.mrb[0].mxu0
    %v2876 = vadd.f32 0.0, %v2875
    %2877 = vmatprep.mubr.bf16.mxu0 0
    %2878 = vmatmul.mubr.bf16.gmra.mrb[0].mxu0 %v2603
    %v2879 = vpop.f32.mrb[0].mxu0
    %v2880 = vadd.f32 0.0, %v2879
    %v2881 = vpop.f32.mrb[0].mxu0
    %v2882 = vadd.f32 0.0, %v2881
    %v2883 = vpop.f32.mrb[0].mxu0
    %v2884 = vadd.f32 0.0, %v2883
    %v2885 = vpop.f32.mrb[0].mxu0
    %v2886 = vadd.f32 0.0, %v2885
    %2887 = vmatprep.mubr.bf16.mxu0 0
    %2888 = vmatmul.mubr.bf16.gmra.mrb[0].mxu0 %v2606
    %v2889 = vpop.f32.mrb[0].mxu0
    %v2890 = vadd.f32 0.0, %v2889
    %v2891 = vpop.f32.mrb[0].mxu0
    %v2892 = vadd.f32 0.0, %v2891
    %v2893 = vpop.f32.mrb[0].mxu0
    %v2894 = vadd.f32 0.0, %v2893
    %v2895 = vpop.f32.mrb[0].mxu0
    %v2896 = vadd.f32 0.0, %v2895
    %2897 = vmatprep.mubr.bf16.mxu0 0
    %2898 = vmatmul.mubr.bf16.gmra.mrb[0].mxu0 %v2609
    %v2899 = vpop.f32.mrb[0].mxu0
    %v2900 = vadd.f32 0.0, %v2899
    %v2901 = vpop.f32.mrb[0].mxu0
    %v2902 = vadd.f32 0.0, %v2901
    %v2903 = vpop.f32.mrb[0].mxu0
    %v2904 = vadd.f32 0.0, %v2903
    %v2905 = vpop.f32.mrb[0].mxu0
    %v2906 = vadd.f32 0.0, %v2905
    %2907 = vmatprep.mubr.bf16.mxu0 0
    %2908 = vmatmul.mubr.bf16.gmra.mrb[0].mxu0 %v2612
    %v2909 = vpop.f32.mrb[0].mxu0
    %v2910 = vadd.f32 0.0, %v2909
    %v2911 = vpop.f32.mrb[0].mxu0
    %v2912 = vadd.f32 0.0, %v2911
    %v2913 = vpop.f32.mrb[0].mxu0
    %v2914 = vadd.f32 0.0, %v2913
    %v2915 = vpop.f32.mrb[0].mxu0
    %v2916 = vadd.f32 0.0, %v2915
    %2917 = vmatprep.mubr.bf16.mxu0 0
    %2918 = vmatmul.mubr.bf16.gmra.mrb[0].mxu0 %v2615
    %v2919 = vpop.f32.mrb[0].mxu0
    %v2920 = vadd.f32 0.0, %v2919
    %v2921 = vpop.f32.mrb[0].mxu0
    %v2922 = vadd.f32 0.0, %v2921
    %v2923 = vpop.f32.mrb[0].mxu0
    %v2924 = vadd.f32 0.0, %v2923
    %v2925 = vpop.f32.mrb[0].mxu0
    %v2926 = vadd.f32 0.0, %v2925
    %2927 = vmatprep.mubr.bf16.mxu0 0
    %2928 = vmatmul.mubr.bf16.gmra.mrb[0].mxu0 %v2618
    %v2929 = vpop.f32.mrb[0].mxu0
    %v2930 = vadd.f32 0.0, %v2929
    %v2931 = vpop.f32.mrb[0].mxu0
    %v2932 = vadd.f32 0.0, %v2931
    %v2933 = vpop.f32.mrb[0].mxu0
    %v2934 = vadd.f32 0.0, %v2933
    %v2935 = vpop.f32.mrb[0].mxu0
    %v2936 = vadd.f32 0.0, %v2935
    %2937 = vmatprep.mubr.bf16.mxu0 0
    %2938 = vmatmul.mubr.bf16.gmra.mrb[0].mxu0 %v2621
    %v2939 = vpop.f32.mrb[0].mxu0
    %v2940 = vadd.f32 0.0, %v2939
    %v2941 = vpop.f32.mrb[0].mxu0
    %v2942 = vadd.f32 0.0, %v2941
    %v2943 = vpop.f32.mrb[0].mxu0
    %v2944 = vadd.f32 0.0, %v2943
    %v2945 = vpop.f32.mrb[0].mxu0
    %v2946 = vadd.f32 0.0, %v2945
    %2947 = vmatprep.mubr.bf16.mxu0 0
    %2948 = vmatmul.mubr.bf16.gmra.mrb[0].mxu0 %v2624
    %v2949 = vpop.f32.mrb[0].mxu0
    %v2950 = vadd.f32 0.0, %v2949
    %v2951 = vpop.f32.mrb[0].mxu0
    %v2952 = vadd.f32 0.0, %v2951
    %v2953 = vpop.f32.mrb[0].mxu0
    %v2954 = vadd.f32 0.0, %v2953
    %v2955 = vpop.f32.mrb[0].mxu0
    %v2956 = vadd.f32 0.0, %v2955
    %2957 = vmatprep.mubr.bf16.mxu0 0
    %2958 = vmatmul.mubr.bf16.gmra.mrb[0].mxu0 %v2627
    %v2959 = vpop.f32.mrb[0].mxu0
    %v2960 = vadd.f32 0.0, %v2959
    %v2961 = vpop.f32.mrb[0].mxu0
    %v2962 = vadd.f32 0.0, %v2961
    %v2963 = vpop.f32.mrb[0].mxu0
    %v2964 = vadd.f32 0.0, %v2963
    %v2965 = vpop.f32.mrb[0].mxu0
    %v2966 = vadd.f32 0.0, %v2965
    %2967 = vmatprep.mubr.bf16.mxu0 0
    %2968 = vmatmul.mubr.bf16.gmra.mrb[0].mxu0 %v2630
    %v2969 = vpop.f32.mrb[0].mxu0
    %v2970 = vadd.f32 0.0, %v2969
    %v2971 = vpop.f32.mrb[0].mxu0
    %v2972 = vadd.f32 0.0, %v2971
    %v2973 = vpop.f32.mrb[0].mxu0
    %v2974 = vadd.f32 0.0, %v2973
    %v2975 = vpop.f32.mrb[0].mxu0
    %v2976 = vadd.f32 0.0, %v2975
    %2977 = vmatprep.mubr.bf16.mxu0 0
    %2978 = vmatmul.mubr.bf16.gmra.mrb[0].mxu0 %v2633
    %v2979 = vpop.f32.mrb[0].mxu0
    %v2980 = vadd.f32 0.0, %v2979
    %v2981 = vpop.f32.mrb[0].mxu0
    %v2982 = vadd.f32 0.0, %v2981
    %v2983 = vpop.f32.mrb[0].mxu0
    %v2984 = vadd.f32 0.0, %v2983
    %v2985 = vpop.f32.mrb[0].mxu0
    %v2986 = vadd.f32 0.0, %v2985
    %2987 = vdwg.mxu0
    %v2988 = vadd.f32 %v2367, %v2670
    %v2989 = vadd.f32 %v2368, %v2672
    %v2990 = vadd.f32 %v2369, %v2674
    %v2991 = vadd.f32 %v2370, %v2676
    %v2992 = vadd.f32 %v2371, %v2680
    %v2993 = vadd.f32 %v2372, %v2682
    %v2994 = vadd.f32 %v2373, %v2684
    %v2995 = vadd.f32 %v2374, %v2686
    %v2996 = vadd.f32 %v2375, %v2690
    %v2997 = vadd.f32 %v2376, %v2692
    %v2998 = vadd.f32 %v2377, %v2694
    %v2999 = vadd.f32 %v2378, %v2696
    %v3000 = vadd.f32 %v2379, %v2700
    %v3001 = vadd.f32 %v2380, %v2702
    %v3002 = vadd.f32 %v2381, %v2704
    %v3003 = vadd.f32 %v2382, %v2706
    %v3004 = vadd.f32 %v2383, %v2710
    %v3005 = vadd.f32 %v2384, %v2712
    %v3006 = vadd.f32 %v2385, %v2714
    %v3007 = vadd.f32 %v2386, %v2716
    %v3008 = vadd.f32 %v2387, %v2720
    %v3009 = vadd.f32 %v2388, %v2722
    %v3010 = vadd.f32 %v2389, %v2724
    %v3011 = vadd.f32 %v2390, %v2726
    %v3012 = vadd.f32 %v2391, %v2730
    %v3013 = vadd.f32 %v2392, %v2732
    %v3014 = vadd.f32 %v2393, %v2734
    %v3015 = vadd.f32 %v2394, %v2736
    %v3016 = vadd.f32 %v2395, %v2740
    %v3017 = vadd.f32 %v2396, %v2742
    %v3018 = vadd.f32 %v2397, %v2744
    %v3019 = vadd.f32 %v2398, %v2746
    %v3020 = vadd.f32 %v2399, %v2750
    %v3021 = vadd.f32 %v2400, %v2752
    %v3022 = vadd.f32 %v2401, %v2754
    %v3023 = vadd.f32 %v2402, %v2756
    %v3024 = vadd.f32 %v2403, %v2760
    %v3025 = vadd.f32 %v2404, %v2762
    %v3026 = vadd.f32 %v2405, %v2764
    %v3027 = vadd.f32 %v2406, %v2766
    %v3028 = vadd.f32 %v2407, %v2770
    %v3029 = vadd.f32 %v2408, %v2772
    %v3030 = vadd.f32 %v2409, %v2774
    %v3031 = vadd.f32 %v2410, %v2776
    %v3032 = vadd.f32 %v2411, %v2780
    %v3033 = vadd.f32 %v2412, %v2782
    %v3034 = vadd.f32 %v2413, %v2784
    %v3035 = vadd.f32 %v2414, %v2786
    %v3036 = vadd.f32 %v2415, %v2790
    %v3037 = vadd.f32 %v2416, %v2792
    %v3038 = vadd.f32 %v2417, %v2794
    %v3039 = vadd.f32 %v2418, %v2796
    %v3040 = vadd.f32 %v2419, %v2800
    %v3041 = vadd.f32 %v2420, %v2802
    %v3042 = vadd.f32 %v2421, %v2804
    %v3043 = vadd.f32 %v2422, %v2806
    %v3044 = vadd.f32 %v2423, %v2810
    %v3045 = vadd.f32 %v2424, %v2812
    %v3046 = vadd.f32 %v2425, %v2814
    %v3047 = vadd.f32 %v2426, %v2816
    %v3048 = vadd.f32 %v2427, %v2820
    %v3049 = vadd.f32 %v2428, %v2822
    %v3050 = vadd.f32 %v2429, %v2824
    %v3051 = vadd.f32 %v2430, %v2826
    %v3052 = vadd.f32 %v2431, %v2830
    %v3053 = vadd.f32 %v2432, %v2832
    %v3054 = vadd.f32 %v2433, %v2834
    %v3055 = vadd.f32 %v2434, %v2836
    %v3056 = vadd.f32 %v2435, %v2840
    %v3057 = vadd.f32 %v2436, %v2842
    %v3058 = vadd.f32 %v2437, %v2844
    %v3059 = vadd.f32 %v2438, %v2846
    %v3060 = vadd.f32 %v2439, %v2850
    %v3061 = vadd.f32 %v2440, %v2852
    %v3062 = vadd.f32 %v2441, %v2854
    %v3063 = vadd.f32 %v2442, %v2856
    %v3064 = vadd.f32 %v2443, %v2860
    %v3065 = vadd.f32 %v2444, %v2862
    %v3066 = vadd.f32 %v2445, %v2864
    %v3067 = vadd.f32 %v2446, %v2866
    %v3068 = vadd.f32 %v2447, %v2870
    %v3069 = vadd.f32 %v2448, %v2872
    %v3070 = vadd.f32 %v2449, %v2874
    %v3071 = vadd.f32 %v2450, %v2876
    %v3072 = vadd.f32 %v2451, %v2880
    %v3073 = vadd.f32 %v2452, %v2882
    %v3074 = vadd.f32 %v2453, %v2884
    %v3075 = vadd.f32 %v2454, %v2886
    %v3076 = vadd.f32 %v2455, %v2890
    %v3077 = vadd.f32 %v2456, %v2892
    %v3078 = vadd.f32 %v2457, %v2894
    %v3079 = vadd.f32 %v2458, %v2896
    %v3080 = vadd.f32 %v2459, %v2900
    %v3081 = vadd.f32 %v2460, %v2902
    %v3082 = vadd.f32 %v2461, %v2904
    %v3083 = vadd.f32 %v2462, %v2906
    %v3084 = vadd.f32 %v2463, %v2910
    %v3085 = vadd.f32 %v2464, %v2912
    %v3086 = vadd.f32 %v2465, %v2914
    %v3087 = vadd.f32 %v2466, %v2916
    %v3088 = vadd.f32 %v2467, %v2920
    %v3089 = vadd.f32 %v2468, %v2922
    %v3090 = vadd.f32 %v2469, %v2924
    %v3091 = vadd.f32 %v2470, %v2926
    %v3092 = vadd.f32 %v2471, %v2930
    %v3093 = vadd.f32 %v2472, %v2932
    %v3094 = vadd.f32 %v2473, %v2934
    %v3095 = vadd.f32 %v2474, %v2936
    %v3096 = vadd.f32 %v2475, %v2940
    %v3097 = vadd.f32 %v2476, %v2942
    %v3098 = vadd.f32 %v2477, %v2944
    %v3099 = vadd.f32 %v2478, %v2946
    %v3100 = vadd.f32 %v2479, %v2950
    %v3101 = vadd.f32 %v2480, %v2952
    %v3102 = vadd.f32 %v2481, %v2954
    %v3103 = vadd.f32 %v2482, %v2956
    %v3104 = vadd.f32 %v2483, %v2960
    %v3105 = vadd.f32 %v2484, %v2962
    %v3106 = vadd.f32 %v2485, %v2964
    %v3107 = vadd.f32 %v2486, %v2966
    %v3108 = vadd.f32 %v2487, %v2970
    %v3109 = vadd.f32 %v2488, %v2972
    %v3110 = vadd.f32 %v2489, %v2974
    %v3111 = vadd.f32 %v2490, %v2976
    %v3112 = vadd.f32 %v2491, %v2980
    %v3113 = vadd.f32 %v2492, %v2982
    %v3114 = vadd.f32 %v2493, %v2984
    %v3115 = vadd.f32 %v2494, %v2986
    %v3116 = vld [vmem:[%s11] sm:$0xff]
    %v3118 = vunpack.c.l.b16 %v3116
    %v3119 = vunpack.c.h.b16 %v3116
    %v3120 = vpack.c.b16 %v3118, %v3118
    %v3121 = vpack.c.b16 %v3119, %v3119
    %v3123 = vsel %vm754, %v313, 0
    %v3126 = vsel %vm754, %v314, 0
    %v3129 = vsel %vm754, %v315, 0
    %v3132 = vsel %vm754, %v316, 0
    %v3135 = vsel %vm754, %v317, 0
    %v3138 = vsel %vm754, %v318, 0
    %v3141 = vsel %vm754, %v319, 0
    %v3144 = vsel %vm754, %v320, 0
    %v3147 = vsel %vm754, %v321, 0
    %v3150 = vsel %vm754, %v322, 0
    %v3153 = vsel %vm754, %v323, 0
    %v3156 = vsel %vm754, %v324, 0
    %v3159 = vsel %vm754, %v325, 0
    %v3162 = vsel %vm754, %v326, 0
    %v3165 = vsel %vm754, %v327, 0
    %v3168 = vsel %vm754, %v328, 0
    %v3171 = vsel %vm754, %v329, 0
    %v3174 = vsel %vm754, %v330, 0
    %v3177 = vsel %vm754, %v331, 0
    %v3180 = vsel %vm754, %v332, 0
    %v3183 = vsel %vm754, %v333, 0
    %v3186 = vsel %vm754, %v334, 0
    %v3189 = vsel %vm754, %v335, 0
    %v3192 = vsel %vm754, %v336, 0
    %v3195 = vsel %vm754, %v337, 0
    %v3198 = vsel %vm754, %v338, 0
    %v3201 = vsel %vm754, %v339, 0
    %v3204 = vsel %vm754, %v340, 0
    %v3207 = vsel %vm754, %v341, 0
    %v3210 = vsel %vm754, %v342, 0
    %v3213 = vsel %vm754, %v343, 0
    %v3216 = vsel %vm754, %v344, 0
    %v3219 = vsel %vm851, %v3120, 0
    %v3222 = vsel %vm851, %v3121, 0
    %3224 = vmatprep.subr.bf16.mxu0 %v3222
    %3225 = vmatpush1.bf16.msra.mxu0 %v3219
    %3226 = vmatprep.subr.bf16.mxu0 0
    %3227 = vmatpush1.bf16.msra.mxu0 0
    %3228 = vmatprep.subr.bf16.mxu0 0
    %3229 = vmatpush1.bf16.msra.mxu0 0
    %3230 = vmatprep.subr.bf16.mxu0 0
    %3231 = vmatpush1.bf16.msra.mxu0 0
    %3232 = vmatprep.subr.bf16.mxu0 0
    %3233 = vmatpush1.bf16.msra.mxu0 0
    %3234 = vmatprep.subr.bf16.mxu0 0
    %3235 = vmatpush1.bf16.msra.mxu0 0
    %3236 = vmatprep.subr.bf16.mxu0 0
    %3237 = vmatpush1.bf16.msra.mxu0 0
    %3238 = vmatprep.subr.bf16.mxu0 0
    %3239 = vmatpush1.bf16.msra.mxu0 0
    %3240 = vmatprep.subr.bf16.mxu0 0
    %3241 = vmatpush1.bf16.msra.mxu0 0
    %3242 = vmatprep.subr.bf16.mxu0 0
    %3243 = vmatpush1.bf16.msra.mxu0 0
    %3244 = vmatprep.subr.bf16.mxu0 0
    %3245 = vmatpush1.bf16.msra.mxu0 0
    %3246 = vmatprep.subr.bf16.mxu0 0
    %3247 = vmatpush1.bf16.msra.mxu0 0
    %3248 = vmatprep.subr.bf16.mxu0 0
    %3249 = vmatpush1.bf16.msra.mxu0 0
    %3250 = vmatprep.subr.bf16.mxu0 0
    %3251 = vmatpush1.bf16.msra.mxu0 0
    %3252 = vmatprep.subr.bf16.mxu0 0
    %3253 = vmatpush1.bf16.msra.mxu0 0
    %3254 = vmatprep.subr.bf16.mxu0 0
    %3255 = vmatpush1.bf16.msra.mxu0 0
    %3256 = vmatprep.mubr.bf16.mxu0 0
    %3257 = vmatmul.mubr.bf16.gmra.mrb[0].mxu0 %v3123
    %v3258 = vpop.f32.mrb[0].mxu0
    %v3259 = vadd.f32 0.0, %v3258
    %v3260 = vpop.f32.mrb[0].mxu0
    %v3261 = vadd.f32 0.0, %v3260
    %v3262 = vpop.f32.mrb[0].mxu0
    %v3263 = vadd.f32 0.0, %v3262
    %v3264 = vpop.f32.mrb[0].mxu0
    %v3265 = vadd.f32 0.0, %v3264
    %3266 = vmatprep.mubr.bf16.mxu0 0
    %3267 = vmatmul.mubr.bf16.gmra.mrb[0].mxu0 %v3126
    %v3268 = vpop.f32.mrb[0].mxu0
    %v3269 = vadd.f32 0.0, %v3268
    %v3270 = vpop.f32.mrb[0].mxu0
    %v3271 = vadd.f32 0.0, %v3270
    %v3272 = vpop.f32.mrb[0].mxu0
    %v3273 = vadd.f32 0.0, %v3272
    %v3274 = vpop.f32.mrb[0].mxu0
    %v3275 = vadd.f32 0.0, %v3274
    %3276 = vmatprep.mubr.bf16.mxu0 0
    %3277 = vmatmul.mubr.bf16.gmra.mrb[0].mxu0 %v3129
    %v3278 = vpop.f32.mrb[0].mxu0
    %v3279 = vadd.f32 0.0, %v3278
    %v3280 = vpop.f32.mrb[0].mxu0
    %v3281 = vadd.f32 0.0, %v3280
    %v3282 = vpop.f32.mrb[0].mxu0
    %v3283 = vadd.f32 0.0, %v3282
    %v3284 = vpop.f32.mrb[0].mxu0
    %v3285 = vadd.f32 0.0, %v3284
    %3286 = vmatprep.mubr.bf16.mxu0 0
    %3287 = vmatmul.mubr.bf16.gmra.mrb[0].mxu0 %v3132
    %v3288 = vpop.f32.mrb[0].mxu0
    %v3289 = vadd.f32 0.0, %v3288
    %v3290 = vpop.f32.mrb[0].mxu0
    %v3291 = vadd.f32 0.0, %v3290
    %v3292 = vpop.f32.mrb[0].mxu0
    %v3293 = vadd.f32 0.0, %v3292
    %v3294 = vpop.f32.mrb[0].mxu0
    %v3295 = vadd.f32 0.0, %v3294
    %3296 = vmatprep.mubr.bf16.mxu0 0
    %3297 = vmatmul.mubr.bf16.gmra.mrb[0].mxu0 %v3135
    %v3298 = vpop.f32.mrb[0].mxu0
    %v3299 = vadd.f32 0.0, %v3298
    %v3300 = vpop.f32.mrb[0].mxu0
    %v3301 = vadd.f32 0.0, %v3300
    %v3302 = vpop.f32.mrb[0].mxu0
    %v3303 = vadd.f32 0.0, %v3302
    %v3304 = vpop.f32.mrb[0].mxu0
    %v3305 = vadd.f32 0.0, %v3304
    %3306 = vmatprep.mubr.bf16.mxu0 0
    %3307 = vmatmul.mubr.bf16.gmra.mrb[0].mxu0 %v3138
    %v3308 = vpop.f32.mrb[0].mxu0
    %v3309 = vadd.f32 0.0, %v3308
    %v3310 = vpop.f32.mrb[0].mxu0
    %v3311 = vadd.f32 0.0, %v3310
    %v3312 = vpop.f32.mrb[0].mxu0
    %v3313 = vadd.f32 0.0, %v3312
    %v3314 = vpop.f32.mrb[0].mxu0
    %v3315 = vadd.f32 0.0, %v3314
    %3316 = vmatprep.mubr.bf16.mxu0 0
    %3317 = vmatmul.mubr.bf16.gmra.mrb[0].mxu0 %v3141
    %v3318 = vpop.f32.mrb[0].mxu0
    %v3319 = vadd.f32 0.0, %v3318
    %v3320 = vpop.f32.mrb[0].mxu0
    %v3321 = vadd.f32 0.0, %v3320
    %v3322 = vpop.f32.mrb[0].mxu0
    %v3323 = vadd.f32 0.0, %v3322
    %v3324 = vpop.f32.mrb[0].mxu0
    %v3325 = vadd.f32 0.0, %v3324
    %3326 = vmatprep.mubr.bf16.mxu0 0
    %3327 = vmatmul.mubr.bf16.gmra.mrb[0].mxu0 %v3144
    %v3328 = vpop.f32.mrb[0].mxu0
    %v3329 = vadd.f32 0.0, %v3328
    %v3330 = vpop.f32.mrb[0].mxu0
    %v3331 = vadd.f32 0.0, %v3330
    %v3332 = vpop.f32.mrb[0].mxu0
    %v3333 = vadd.f32 0.0, %v3332
    %v3334 = vpop.f32.mrb[0].mxu0
    %v3335 = vadd.f32 0.0, %v3334
    %3336 = vmatprep.mubr.bf16.mxu0 0
    %3337 = vmatmul.mubr.bf16.gmra.mrb[0].mxu0 %v3147
    %v3338 = vpop.f32.mrb[0].mxu0
    %v3339 = vadd.f32 0.0, %v3338
    %v3340 = vpop.f32.mrb[0].mxu0
    %v3341 = vadd.f32 0.0, %v3340
    %v3342 = vpop.f32.mrb[0].mxu0
    %v3343 = vadd.f32 0.0, %v3342
    %v3344 = vpop.f32.mrb[0].mxu0
    %v3345 = vadd.f32 0.0, %v3344
    %3346 = vmatprep.mubr.bf16.mxu0 0
    %3347 = vmatmul.mubr.bf16.gmra.mrb[0].mxu0 %v3150
    %v3348 = vpop.f32.mrb[0].mxu0
    %v3349 = vadd.f32 0.0, %v3348
    %v3350 = vpop.f32.mrb[0].mxu0
    %v3351 = vadd.f32 0.0, %v3350
    %v3352 = vpop.f32.mrb[0].mxu0
    %v3353 = vadd.f32 0.0, %v3352
    %v3354 = vpop.f32.mrb[0].mxu0
    %v3355 = vadd.f32 0.0, %v3354
    %3356 = vmatprep.mubr.bf16.mxu0 0
    %3357 = vmatmul.mubr.bf16.gmra.mrb[0].mxu0 %v3153
    %v3358 = vpop.f32.mrb[0].mxu0
    %v3359 = vadd.f32 0.0, %v3358
    %v3360 = vpop.f32.mrb[0].mxu0
    %v3361 = vadd.f32 0.0, %v3360
    %v3362 = vpop.f32.mrb[0].mxu0
    %v3363 = vadd.f32 0.0, %v3362
    %v3364 = vpop.f32.mrb[0].mxu0
    %v3365 = vadd.f32 0.0, %v3364
    %3366 = vmatprep.mubr.bf16.mxu0 0
    %3367 = vmatmul.mubr.bf16.gmra.mrb[0].mxu0 %v3156
    %v3368 = vpop.f32.mrb[0].mxu0
    %v3369 = vadd.f32 0.0, %v3368
    %v3370 = vpop.f32.mrb[0].mxu0
    %v3371 = vadd.f32 0.0, %v3370
    %v3372 = vpop.f32.mrb[0].mxu0
    %v3373 = vadd.f32 0.0, %v3372
    %v3374 = vpop.f32.mrb[0].mxu0
    %v3375 = vadd.f32 0.0, %v3374
    %3376 = vmatprep.mubr.bf16.mxu0 0
    %3377 = vmatmul.mubr.bf16.gmra.mrb[0].mxu0 %v3159
    %v3378 = vpop.f32.mrb[0].mxu0
    %v3379 = vadd.f32 0.0, %v3378
    %v3380 = vpop.f32.mrb[0].mxu0
    %v3381 = vadd.f32 0.0, %v3380
    %v3382 = vpop.f32.mrb[0].mxu0
    %v3383 = vadd.f32 0.0, %v3382
    %v3384 = vpop.f32.mrb[0].mxu0
    %v3385 = vadd.f32 0.0, %v3384
    %3386 = vmatprep.mubr.bf16.mxu0 0
    %3387 = vmatmul.mubr.bf16.gmra.mrb[0].mxu0 %v3162
    %v3388 = vpop.f32.mrb[0].mxu0
    %v3389 = vadd.f32 0.0, %v3388
    %v3390 = vpop.f32.mrb[0].mxu0
    %v3391 = vadd.f32 0.0, %v3390
    %v3392 = vpop.f32.mrb[0].mxu0
    %v3393 = vadd.f32 0.0, %v3392
    %v3394 = vpop.f32.mrb[0].mxu0
    %v3395 = vadd.f32 0.0, %v3394
    %3396 = vmatprep.mubr.bf16.mxu0 0
    %3397 = vmatmul.mubr.bf16.gmra.mrb[0].mxu0 %v3165
    %v3398 = vpop.f32.mrb[0].mxu0
    %v3399 = vadd.f32 0.0, %v3398
    %v3400 = vpop.f32.mrb[0].mxu0
    %v3401 = vadd.f32 0.0, %v3400
    %v3402 = vpop.f32.mrb[0].mxu0
    %v3403 = vadd.f32 0.0, %v3402
    %v3404 = vpop.f32.mrb[0].mxu0
    %v3405 = vadd.f32 0.0, %v3404
    %3406 = vmatprep.mubr.bf16.mxu0 0
    %3407 = vmatmul.mubr.bf16.gmra.mrb[0].mxu0 %v3168
    %v3408 = vpop.f32.mrb[0].mxu0
    %v3409 = vadd.f32 0.0, %v3408
    %v3410 = vpop.f32.mrb[0].mxu0
    %v3411 = vadd.f32 0.0, %v3410
    %v3412 = vpop.f32.mrb[0].mxu0
    %v3413 = vadd.f32 0.0, %v3412
    %v3414 = vpop.f32.mrb[0].mxu0
    %v3415 = vadd.f32 0.0, %v3414
    %3416 = vmatprep.mubr.bf16.mxu0 0
    %3417 = vmatmul.mubr.bf16.gmra.mrb[0].mxu0 %v3171
    %v3418 = vpop.f32.mrb[0].mxu0
    %v3419 = vadd.f32 0.0, %v3418
    %v3420 = vpop.f32.mrb[0].mxu0
    %v3421 = vadd.f32 0.0, %v3420
    %v3422 = vpop.f32.mrb[0].mxu0
    %v3423 = vadd.f32 0.0, %v3422
    %v3424 = vpop.f32.mrb[0].mxu0
    %v3425 = vadd.f32 0.0, %v3424
    %3426 = vmatprep.mubr.bf16.mxu0 0
    %3427 = vmatmul.mubr.bf16.gmra.mrb[0].mxu0 %v3174
    %v3428 = vpop.f32.mrb[0].mxu0
    %v3429 = vadd.f32 0.0, %v3428
    %v3430 = vpop.f32.mrb[0].mxu0
    %v3431 = vadd.f32 0.0, %v3430
    %v3432 = vpop.f32.mrb[0].mxu0
    %v3433 = vadd.f32 0.0, %v3432
    %v3434 = vpop.f32.mrb[0].mxu0
    %v3435 = vadd.f32 0.0, %v3434
    %3436 = vmatprep.mubr.bf16.mxu0 0
    %3437 = vmatmul.mubr.bf16.gmra.mrb[0].mxu0 %v3177
    %v3438 = vpop.f32.mrb[0].mxu0
    %v3439 = vadd.f32 0.0, %v3438
    %v3440 = vpop.f32.mrb[0].mxu0
    %v3441 = vadd.f32 0.0, %v3440
    %v3442 = vpop.f32.mrb[0].mxu0
    %v3443 = vadd.f32 0.0, %v3442
    %v3444 = vpop.f32.mrb[0].mxu0
    %v3445 = vadd.f32 0.0, %v3444
    %3446 = vmatprep.mubr.bf16.mxu0 0
    %3447 = vmatmul.mubr.bf16.gmra.mrb[0].mxu0 %v3180
    %v3448 = vpop.f32.mrb[0].mxu0
    %v3449 = vadd.f32 0.0, %v3448
    %v3450 = vpop.f32.mrb[0].mxu0
    %v3451 = vadd.f32 0.0, %v3450
    %v3452 = vpop.f32.mrb[0].mxu0
    %v3453 = vadd.f32 0.0, %v3452
    %v3454 = vpop.f32.mrb[0].mxu0
    %v3455 = vadd.f32 0.0, %v3454
    %3456 = vmatprep.mubr.bf16.mxu0 0
    %3457 = vmatmul.mubr.bf16.gmra.mrb[0].mxu0 %v3183
    %v3458 = vpop.f32.mrb[0].mxu0
    %v3459 = vadd.f32 0.0, %v3458
    %v3460 = vpop.f32.mrb[0].mxu0
    %v3461 = vadd.f32 0.0, %v3460
    %v3462 = vpop.f32.mrb[0].mxu0
    %v3463 = vadd.f32 0.0, %v3462
    %v3464 = vpop.f32.mrb[0].mxu0
    %v3465 = vadd.f32 0.0, %v3464
    %3466 = vmatprep.mubr.bf16.mxu0 0
    %3467 = vmatmul.mubr.bf16.gmra.mrb[0].mxu0 %v3186
    %v3468 = vpop.f32.mrb[0].mxu0
    %v3469 = vadd.f32 0.0, %v3468
    %v3470 = vpop.f32.mrb[0].mxu0
    %v3471 = vadd.f32 0.0, %v3470
    %v3472 = vpop.f32.mrb[0].mxu0
    %v3473 = vadd.f32 0.0, %v3472
    %v3474 = vpop.f32.mrb[0].mxu0
    %v3475 = vadd.f32 0.0, %v3474
    %3476 = vmatprep.mubr.bf16.mxu0 0
    %3477 = vmatmul.mubr.bf16.gmra.mrb[0].mxu0 %v3189
    %v3478 = vpop.f32.mrb[0].mxu0
    %v3479 = vadd.f32 0.0, %v3478
    %v3480 = vpop.f32.mrb[0].mxu0
    %v3481 = vadd.f32 0.0, %v3480
    %v3482 = vpop.f32.mrb[0].mxu0
    %v3483 = vadd.f32 0.0, %v3482
    %v3484 = vpop.f32.mrb[0].mxu0
    %v3485 = vadd.f32 0.0, %v3484
    %3486 = vmatprep.mubr.bf16.mxu0 0
    %3487 = vmatmul.mubr.bf16.gmra.mrb[0].mxu0 %v3192
    %v3488 = vpop.f32.mrb[0].mxu0
    %v3489 = vadd.f32 0.0, %v3488
    %v3490 = vpop.f32.mrb[0].mxu0
    %v3491 = vadd.f32 0.0, %v3490
    %v3492 = vpop.f32.mrb[0].mxu0
    %v3493 = vadd.f32 0.0, %v3492
    %v3494 = vpop.f32.mrb[0].mxu0
    %v3495 = vadd.f32 0.0, %v3494
    %3496 = vmatprep.mubr.bf16.mxu0 0
    %3497 = vmatmul.mubr.bf16.gmra.mrb[0].mxu0 %v3195
    %v3498 = vpop.f32.mrb[0].mxu0
    %v3499 = vadd.f32 0.0, %v3498
    %v3500 = vpop.f32.mrb[0].mxu0
    %v3501 = vadd.f32 0.0, %v3500
    %v3502 = vpop.f32.mrb[0].mxu0
    %v3503 = vadd.f32 0.0, %v3502
    %v3504 = vpop.f32.mrb[0].mxu0
    %v3505 = vadd.f32 0.0, %v3504
    %3506 = vmatprep.mubr.bf16.mxu0 0
    %3507 = vmatmul.mubr.bf16.gmra.mrb[0].mxu0 %v3198
    %v3508 = vpop.f32.mrb[0].mxu0
    %v3509 = vadd.f32 0.0, %v3508
    %v3510 = vpop.f32.mrb[0].mxu0
    %v3511 = vadd.f32 0.0, %v3510
    %v3512 = vpop.f32.mrb[0].mxu0
    %v3513 = vadd.f32 0.0, %v3512
    %v3514 = vpop.f32.mrb[0].mxu0
    %v3515 = vadd.f32 0.0, %v3514
    %3516 = vmatprep.mubr.bf16.mxu0 0
    %3517 = vmatmul.mubr.bf16.gmra.mrb[0].mxu0 %v3201
    %v3518 = vpop.f32.mrb[0].mxu0
    %v3519 = vadd.f32 0.0, %v3518
    %v3520 = vpop.f32.mrb[0].mxu0
    %v3521 = vadd.f32 0.0, %v3520
    %v3522 = vpop.f32.mrb[0].mxu0
    %v3523 = vadd.f32 0.0, %v3522
    %v3524 = vpop.f32.mrb[0].mxu0
    %v3525 = vadd.f32 0.0, %v3524
    %3526 = vmatprep.mubr.bf16.mxu0 0
    %3527 = vmatmul.mubr.bf16.gmra.mrb[0].mxu0 %v3204
    %v3528 = vpop.f32.mrb[0].mxu0
    %v3529 = vadd.f32 0.0, %v3528
    %v3530 = vpop.f32.mrb[0].mxu0
    %v3531 = vadd.f32 0.0, %v3530
    %v3532 = vpop.f32.mrb[0].mxu0
    %v3533 = vadd.f32 0.0, %v3532
    %v3534 = vpop.f32.mrb[0].mxu0
    %v3535 = vadd.f32 0.0, %v3534
    %3536 = vmatprep.mubr.bf16.mxu0 0
    %3537 = vmatmul.mubr.bf16.gmra.mrb[0].mxu0 %v3207
    %v3538 = vpop.f32.mrb[0].mxu0
    %v3539 = vadd.f32 0.0, %v3538
    %v3540 = vpop.f32.mrb[0].mxu0
    %v3541 = vadd.f32 0.0, %v3540
    %v3542 = vpop.f32.mrb[0].mxu0
    %v3543 = vadd.f32 0.0, %v3542
    %v3544 = vpop.f32.mrb[0].mxu0
    %v3545 = vadd.f32 0.0, %v3544
    %3546 = vmatprep.mubr.bf16.mxu0 0
    %3547 = vmatmul.mubr.bf16.gmra.mrb[0].mxu0 %v3210
    %v3548 = vpop.f32.mrb[0].mxu0
    %v3549 = vadd.f32 0.0, %v3548
    %v3550 = vpop.f32.mrb[0].mxu0
    %v3551 = vadd.f32 0.0, %v3550
    %v3552 = vpop.f32.mrb[0].mxu0
    %v3553 = vadd.f32 0.0, %v3552
    %v3554 = vpop.f32.mrb[0].mxu0
    %v3555 = vadd.f32 0.0, %v3554
    %3556 = vmatprep.mubr.bf16.mxu0 0
    %3557 = vmatmul.mubr.bf16.gmra.mrb[0].mxu0 %v3213
    %v3558 = vpop.f32.mrb[0].mxu0
    %v3559 = vadd.f32 0.0, %v3558
    %v3560 = vpop.f32.mrb[0].mxu0
    %v3561 = vadd.f32 0.0, %v3560
    %v3562 = vpop.f32.mrb[0].mxu0
    %v3563 = vadd.f32 0.0, %v3562
    %v3564 = vpop.f32.mrb[0].mxu0
    %v3565 = vadd.f32 0.0, %v3564
    %3566 = vmatprep.mubr.bf16.mxu0 0
    %3567 = vmatmul.mubr.bf16.gmra.mrb[0].mxu0 %v3216
    %v3568 = vpop.f32.mrb[0].mxu0
    %v3569 = vadd.f32 0.0, %v3568
    %v3570 = vpop.f32.mrb[0].mxu0
    %v3571 = vadd.f32 0.0, %v3570
    %v3572 = vpop.f32.mrb[0].mxu0
    %v3573 = vadd.f32 0.0, %v3572
    %v3574 = vpop.f32.mrb[0].mxu0
    %v3575 = vadd.f32 0.0, %v3574
    %3576 = vdwg.mxu0
    %v3577 = vadd.f32 %v2988, %v3259
    %v3578 = vadd.f32 %v2989, %v3261
    %v3579 = vadd.f32 %v2990, %v3263
    %v3580 = vadd.f32 %v2991, %v3265
    %v3581 = vadd.f32 %v2992, %v3269
    %v3582 = vadd.f32 %v2993, %v3271
    %v3583 = vadd.f32 %v2994, %v3273
    %v3584 = vadd.f32 %v2995, %v3275
    %v3585 = vadd.f32 %v2996, %v3279
    %v3586 = vadd.f32 %v2997, %v3281
    %v3587 = vadd.f32 %v2998, %v3283
    %v3588 = vadd.f32 %v2999, %v3285
    %v3589 = vadd.f32 %v3000, %v3289
    %v3590 = vadd.f32 %v3001, %v3291
    %v3591 = vadd.f32 %v3002, %v3293
    %v3592 = vadd.f32 %v3003, %v3295
    %v3593 = vadd.f32 %v3004, %v3299
    %v3594 = vadd.f32 %v3005, %v3301
    %v3595 = vadd.f32 %v3006, %v3303
    %v3596 = vadd.f32 %v3007, %v3305
    %v3597 = vadd.f32 %v3008, %v3309
    %v3598 = vadd.f32 %v3009, %v3311
    %v3599 = vadd.f32 %v3010, %v3313
    %v3600 = vadd.f32 %v3011, %v3315
    %v3601 = vadd.f32 %v3012, %v3319
    %v3602 = vadd.f32 %v3013, %v3321
    %v3603 = vadd.f32 %v3014, %v3323
    %v3604 = vadd.f32 %v3015, %v3325
    %v3605 = vadd.f32 %v3016, %v3329
    %v3606 = vadd.f32 %v3017, %v3331
    %v3607 = vadd.f32 %v3018, %v3333
    %v3608 = vadd.f32 %v3019, %v3335
    %v3609 = vadd.f32 %v3020, %v3339
    %v3610 = vadd.f32 %v3021, %v3341
    %v3611 = vadd.f32 %v3022, %v3343
    %v3612 = vadd.f32 %v3023, %v3345
    %v3613 = vadd.f32 %v3024, %v3349
    %v3614 = vadd.f32 %v3025, %v3351
    %v3615 = vadd.f32 %v3026, %v3353
    %v3616 = vadd.f32 %v3027, %v3355
    %v3617 = vadd.f32 %v3028, %v3359
    %v3618 = vadd.f32 %v3029, %v3361
    %v3619 = vadd.f32 %v3030, %v3363
    %v3620 = vadd.f32 %v3031, %v3365
    %v3621 = vadd.f32 %v3032, %v3369
    %v3622 = vadd.f32 %v3033, %v3371
    %v3623 = vadd.f32 %v3034, %v3373
    %v3624 = vadd.f32 %v3035, %v3375
    %v3625 = vadd.f32 %v3036, %v3379
    %v3626 = vadd.f32 %v3037, %v3381
    %v3627 = vadd.f32 %v3038, %v3383
    %v3628 = vadd.f32 %v3039, %v3385
    %v3629 = vadd.f32 %v3040, %v3389
    %v3630 = vadd.f32 %v3041, %v3391
    %v3631 = vadd.f32 %v3042, %v3393
    %v3632 = vadd.f32 %v3043, %v3395
    %v3633 = vadd.f32 %v3044, %v3399
    %v3634 = vadd.f32 %v3045, %v3401
    %v3635 = vadd.f32 %v3046, %v3403
    %v3636 = vadd.f32 %v3047, %v3405
    %v3637 = vadd.f32 %v3048, %v3409
    %v3638 = vadd.f32 %v3049, %v3411
    %v3639 = vadd.f32 %v3050, %v3413
    %v3640 = vadd.f32 %v3051, %v3415
    %v3641 = vadd.f32 %v3052, %v3419
    %v3642 = vadd.f32 %v3053, %v3421
    %v3643 = vadd.f32 %v3054, %v3423
    %v3644 = vadd.f32 %v3055, %v3425
    %v3645 = vadd.f32 %v3056, %v3429
    %v3646 = vadd.f32 %v3057, %v3431
    %v3647 = vadd.f32 %v3058, %v3433
    %v3648 = vadd.f32 %v3059, %v3435
    %v3649 = vadd.f32 %v3060, %v3439
    %v3650 = vadd.f32 %v3061, %v3441
    %v3651 = vadd.f32 %v3062, %v3443
    %v3652 = vadd.f32 %v3063, %v3445
    %v3653 = vadd.f32 %v3064, %v3449
    %v3654 = vadd.f32 %v3065, %v3451
    %v3655 = vadd.f32 %v3066, %v3453
    %v3656 = vadd.f32 %v3067, %v3455
    %v3657 = vadd.f32 %v3068, %v3459
    %v3658 = vadd.f32 %v3069, %v3461
    %v3659 = vadd.f32 %v3070, %v3463
    %v3660 = vadd.f32 %v3071, %v3465
    %v3661 = vadd.f32 %v3072, %v3469
    %v3662 = vadd.f32 %v3073, %v3471
    %v3663 = vadd.f32 %v3074, %v3473
    %v3664 = vadd.f32 %v3075, %v3475
    %v3665 = vadd.f32 %v3076, %v3479
    %v3666 = vadd.f32 %v3077, %v3481
    %v3667 = vadd.f32 %v3078, %v3483
    %v3668 = vadd.f32 %v3079, %v3485
    %v3669 = vadd.f32 %v3080, %v3489
    %v3670 = vadd.f32 %v3081, %v3491
    %v3671 = vadd.f32 %v3082, %v3493
    %v3672 = vadd.f32 %v3083, %v3495
    %v3673 = vadd.f32 %v3084, %v3499
    %v3674 = vadd.f32 %v3085, %v3501
    %v3675 = vadd.f32 %v3086, %v3503
    %v3676 = vadd.f32 %v3087, %v3505
    %v3677 = vadd.f32 %v3088, %v3509
    %v3678 = vadd.f32 %v3089, %v3511
    %v3679 = vadd.f32 %v3090, %v3513
    %v3680 = vadd.f32 %v3091, %v3515
    %v3681 = vadd.f32 %v3092, %v3519
    %v3682 = vadd.f32 %v3093, %v3521
    %v3683 = vadd.f32 %v3094, %v3523
    %v3684 = vadd.f32 %v3095, %v3525
    %v3685 = vadd.f32 %v3096, %v3529
    %v3686 = vadd.f32 %v3097, %v3531
    %v3687 = vadd.f32 %v3098, %v3533
    %v3688 = vadd.f32 %v3099, %v3535
    %v3689 = vadd.f32 %v3100, %v3539
    %v3690 = vadd.f32 %v3101, %v3541
    %v3691 = vadd.f32 %v3102, %v3543
    %v3692 = vadd.f32 %v3103, %v3545
    %v3693 = vadd.f32 %v3104, %v3549
    %v3694 = vadd.f32 %v3105, %v3551
    %v3695 = vadd.f32 %v3106, %v3553
    %v3696 = vadd.f32 %v3107, %v3555
    %v3697 = vadd.f32 %v3108, %v3559
    %v3698 = vadd.f32 %v3109, %v3561
    %v3699 = vadd.f32 %v3110, %v3563
    %v3700 = vadd.f32 %v3111, %v3565
    %v3701 = vadd.f32 %v3112, %v3569
    %v3702 = vadd.f32 %v3113, %v3571
    %v3703 = vadd.f32 %v3114, %v3573
    %v3704 = vadd.f32 %v3115, %v3575
    %v3705 = vld [vmem:[%s12] sm:$0x3]
    %v3707 = vlaneseq
    %v3708 = vshrl.u32 %v3707, 7
    %v3709 = vsub.s32 0, %v3708
    %v3710 = vrot.slane %v3705, %v3709
    %v3711 = vlaneseq
    %v3712 = vshrl.u32 %v3711, 7
    %v3713 = vsub.s32 1, %v3712
    %v3714 = vrot.slane %v3705, %v3713
    %v3717 = vadd.f32 %v3577, %v3710
    %v3718 = vadd.f32 %v3578, %v3714
    %v3719 = vadd.f32 %v3579, %v3710
    %v3720 = vadd.f32 %v3580, %v3714
    %v3721 = vadd.f32 %v3581, %v3710
    %v3722 = vadd.f32 %v3582, %v3714
    %v3723 = vadd.f32 %v3583, %v3710
    %v3724 = vadd.f32 %v3584, %v3714
    %v3725 = vadd.f32 %v3585, %v3710
    %v3726 = vadd.f32 %v3586, %v3714
    %v3727 = vadd.f32 %v3587, %v3710
    %v3728 = vadd.f32 %v3588, %v3714
    %v3729 = vadd.f32 %v3589, %v3710
    %v3730 = vadd.f32 %v3590, %v3714
    %v3731 = vadd.f32 %v3591, %v3710
    %v3732 = vadd.f32 %v3592, %v3714
    %v3733 = vadd.f32 %v3593, %v3710
    %v3734 = vadd.f32 %v3594, %v3714
    %v3735 = vadd.f32 %v3595, %v3710
    %v3736 = vadd.f32 %v3596, %v3714
    %v3737 = vadd.f32 %v3597, %v3710
    %v3738 = vadd.f32 %v3598, %v3714
    %v3739 = vadd.f32 %v3599, %v3710
    %v3740 = vadd.f32 %v3600, %v3714
    %v3741 = vadd.f32 %v3601, %v3710
    %v3742 = vadd.f32 %v3602, %v3714
    %v3743 = vadd.f32 %v3603, %v3710
    %v3744 = vadd.f32 %v3604, %v3714
    %v3745 = vadd.f32 %v3605, %v3710
    %v3746 = vadd.f32 %v3606, %v3714
    %v3747 = vadd.f32 %v3607, %v3710
    %v3748 = vadd.f32 %v3608, %v3714
    %v3749 = vadd.f32 %v3609, %v3710
    %v3750 = vadd.f32 %v3610, %v3714
    %v3751 = vadd.f32 %v3611, %v3710
    %v3752 = vadd.f32 %v3612, %v3714
    %v3753 = vadd.f32 %v3613, %v3710
    %v3754 = vadd.f32 %v3614, %v3714
    %v3755 = vadd.f32 %v3615, %v3710
    %v3756 = vadd.f32 %v3616, %v3714
    %v3757 = vadd.f32 %v3617, %v3710
    %v3758 = vadd.f32 %v3618, %v3714
    %v3759 = vadd.f32 %v3619, %v3710
    %v3760 = vadd.f32 %v3620, %v3714
    %v3761 = vadd.f32 %v3621, %v3710
    %v3762 = vadd.f32 %v3622, %v3714
    %v3763 = vadd.f32 %v3623, %v3710
    %v3764 = vadd.f32 %v3624, %v3714
    %v3765 = vadd.f32 %v3625, %v3710
    %v3766 = vadd.f32 %v3626, %v3714
    %v3767 = vadd.f32 %v3627, %v3710
    %v3768 = vadd.f32 %v3628, %v3714
    %v3769 = vadd.f32 %v3629, %v3710
    %v3770 = vadd.f32 %v3630, %v3714
    %v3771 = vadd.f32 %v3631, %v3710
    %v3772 = vadd.f32 %v3632, %v3714
    %v3773 = vadd.f32 %v3633, %v3710
    %v3774 = vadd.f32 %v3634, %v3714
    %v3775 = vadd.f32 %v3635, %v3710
    %v3776 = vadd.f32 %v3636, %v3714
    %v3777 = vadd.f32 %v3637, %v3710
    %v3778 = vadd.f32 %v3638, %v3714
    %v3779 = vadd.f32 %v3639, %v3710
    %v3780 = vadd.f32 %v3640, %v3714
    %v3781 = vadd.f32 %v3641, %v3710
    %v3782 = vadd.f32 %v3642, %v3714
    %v3783 = vadd.f32 %v3643, %v3710
    %v3784 = vadd.f32 %v3644, %v3714
    %v3785 = vadd.f32 %v3645, %v3710
    %v3786 = vadd.f32 %v3646, %v3714
    %v3787 = vadd.f32 %v3647, %v3710
    %v3788 = vadd.f32 %v3648, %v3714
    %v3789 = vadd.f32 %v3649, %v3710
    %v3790 = vadd.f32 %v3650, %v3714
    %v3791 = vadd.f32 %v3651, %v3710
    %v3792 = vadd.f32 %v3652, %v3714
    %v3793 = vadd.f32 %v3653, %v3710
    %v3794 = vadd.f32 %v3654, %v3714
    %v3795 = vadd.f32 %v3655, %v3710
    %v3796 = vadd.f32 %v3656, %v3714
    %v3797 = vadd.f32 %v3657, %v3710
    %v3798 = vadd.f32 %v3658, %v3714
    %v3799 = vadd.f32 %v3659, %v3710
    %v3800 = vadd.f32 %v3660, %v3714
    %v3801 = vadd.f32 %v3661, %v3710
    %v3802 = vadd.f32 %v3662, %v3714
    %v3803 = vadd.f32 %v3663, %v3710
    %v3804 = vadd.f32 %v3664, %v3714
    %v3805 = vadd.f32 %v3665, %v3710
    %v3806 = vadd.f32 %v3666, %v3714
    %v3807 = vadd.f32 %v3667, %v3710
    %v3808 = vadd.f32 %v3668, %v3714
    %v3809 = vadd.f32 %v3669, %v3710
    %v3810 = vadd.f32 %v3670, %v3714
    %v3811 = vadd.f32 %v3671, %v3710
    %v3812 = vadd.f32 %v3672, %v3714
    %v3813 = vadd.f32 %v3673, %v3710
    %v3814 = vadd.f32 %v3674, %v3714
    %v3815 = vadd.f32 %v3675, %v3710
    %v3816 = vadd.f32 %v3676, %v3714
    %v3817 = vadd.f32 %v3677, %v3710
    %v3818 = vadd.f32 %v3678, %v3714
    %v3819 = vadd.f32 %v3679, %v3710
    %v3820 = vadd.f32 %v3680, %v3714
    %v3821 = vadd.f32 %v3681, %v3710
    %v3822 = vadd.f32 %v3682, %v3714
    %v3823 = vadd.f32 %v3683, %v3710
    %v3824 = vadd.f32 %v3684, %v3714
    %v3825 = vadd.f32 %v3685, %v3710
    %v3826 = vadd.f32 %v3686, %v3714
    %v3827 = vadd.f32 %v3687, %v3710
    %v3828 = vadd.f32 %v3688, %v3714
    %v3829 = vadd.f32 %v3689, %v3710
    %v3830 = vadd.f32 %v3690, %v3714
    %v3831 = vadd.f32 %v3691, %v3710
    %v3832 = vadd.f32 %v3692, %v3714
    %v3833 = vadd.f32 %v3693, %v3710
    %v3834 = vadd.f32 %v3694, %v3714
    %v3835 = vadd.f32 %v3695, %v3710
    %v3836 = vadd.f32 %v3696, %v3714
    %v3837 = vadd.f32 %v3697, %v3710
    %v3838 = vadd.f32 %v3698, %v3714
    %v3839 = vadd.f32 %v3699, %v3710
    %v3840 = vadd.f32 %v3700, %v3714
    %v3841 = vadd.f32 %v3701, %v3710
    %v3842 = vadd.f32 %v3702, %v3714
    %v3843 = vadd.f32 %v3703, %v3710
    %v3844 = vadd.f32 %v3704, %v3714
    %3845 = vst [vmem:[%s13] sm:$0xff] %v3717
    %vm3846 = vcmask 261120
    %3847 = vst.msk [vmem:[%s13 + $0x8] sm:$0xff] %vm3846, %v3718
    %3848 = vst [vmem:[%s13 + $0x10] sm:$0xff] %v3719
    %3849 = vst.msk [vmem:[%s13 + $0x18] sm:$0xff] %vm3846, %v3720
    %3850 = vst [vmem:[%s13 + $0x20] sm:$0xff] %v3721
    %3851 = vst.msk [vmem:[%s13 + $0x28] sm:$0xff] %vm3846, %v3722
    %3852 = vst [vmem:[%s13 + $0x30] sm:$0xff] %v3723
    %3853 = vst.msk [vmem:[%s13 + $0x38] sm:$0xff] %vm3846, %v3724
    %3854 = vst [vmem:[%s13 + $0x40] sm:$0xff] %v3725
    %3855 = vst.msk [vmem:[%s13 + $0x48] sm:$0xff] %vm3846, %v3726
    %3856 = vst [vmem:[%s13 + $0x50] sm:$0xff] %v3727
    %3857 = vst.msk [vmem:[%s13 + $0x58] sm:$0xff] %vm3846, %v3728
    %3858 = vst [vmem:[%s13 + $0x60] sm:$0xff] %v3729
    %3859 = vst.msk [vmem:[%s13 + $0x68] sm:$0xff] %vm3846, %v3730
    %3860 = vst [vmem:[%s13 + $0x70] sm:$0xff] %v3731
    %3861 = vst.msk [vmem:[%s13 + $0x78] sm:$0xff] %vm3846, %v3732
    %3862 = vst [vmem:[%s13 + $0x80] sm:$0xff] %v3733
    %3863 = vst.msk [vmem:[%s13 + $0x88] sm:$0xff] %vm3846, %v3734
    %3864 = vst [vmem:[%s13 + $0x90] sm:$0xff] %v3735
    %3865 = vst.msk [vmem:[%s13 + $0x98] sm:$0xff] %vm3846, %v3736
    %3866 = vst [vmem:[%s13 + $0xa0] sm:$0xff] %v3737
    %3867 = vst.msk [vmem:[%s13 + $0xa8] sm:$0xff] %vm3846, %v3738
    %3868 = vst [vmem:[%s13 + $0xb0] sm:$0xff] %v3739
    %3869 = vst.msk [vmem:[%s13 + $0xb8] sm:$0xff] %vm3846, %v3740
    %3870 = vst [vmem:[%s13 + $0xc0] sm:$0xff] %v3741
    %3871 = vst.msk [vmem:[%s13 + $0xc8] sm:$0xff] %vm3846, %v3742
    %3872 = vst [vmem:[%s13 + $0xd0] sm:$0xff] %v3743
    %3873 = vst.msk [vmem:[%s13 + $0xd8] sm:$0xff] %vm3846, %v3744
    %3874 = vst [vmem:[%s13 + $0xe0] sm:$0xff] %v3745
    %3875 = vst.msk [vmem:[%s13 + $0xe8] sm:$0xff] %vm3846, %v3746
    %3876 = vst [vmem:[%s13 + $0xf0] sm:$0xff] %v3747
    %3877 = vst.msk [vmem:[%s13 + $0xf8] sm:$0xff] %vm3846, %v3748
    %3878 = vst [vmem:[%s13 + $0x100] sm:$0xff] %v3749
    %3879 = vst.msk [vmem:[%s13 + $0x108] sm:$0xff] %vm3846, %v3750
    %3880 = vst [vmem:[%s13 + $0x110] sm:$0xff] %v3751
    %3881 = vst.msk [vmem:[%s13 + $0x118] sm:$0xff] %vm3846, %v3752
    %3882 = vst [vmem:[%s13 + $0x120] sm:$0xff] %v3753
    %3883 = vst.msk [vmem:[%s13 + $0x128] sm:$0xff] %vm3846, %v3754
    %3884 = vst [vmem:[%s13 + $0x130] sm:$0xff] %v3755
    %3885 = vst.msk [vmem:[%s13 + $0x138] sm:$0xff] %vm3846, %v3756
    %3886 = vst [vmem:[%s13 + $0x140] sm:$0xff] %v3757
    %3887 = vst.msk [vmem:[%s13 + $0x148] sm:$0xff] %vm3846, %v3758
    %3888 = vst [vmem:[%s13 + $0x150] sm:$0xff] %v3759
    %3889 = vst.msk [vmem:[%s13 + $0x158] sm:$0xff] %vm3846, %v3760
    %3890 = vst [vmem:[%s13 + $0x160] sm:$0xff] %v3761
    %3891 = vst.msk [vmem:[%s13 + $0x168] sm:$0xff] %vm3846, %v3762
    %3892 = vst [vmem:[%s13 + $0x170] sm:$0xff] %v3763
    %3893 = vst.msk [vmem:[%s13 + $0x178] sm:$0xff] %vm3846, %v3764
    %3894 = vst [vmem:[%s13 + $0x180] sm:$0xff] %v3765
    %3895 = vst.msk [vmem:[%s13 + $0x188] sm:$0xff] %vm3846, %v3766
    %3896 = vst [vmem:[%s13 + $0x190] sm:$0xff] %v3767
    %3897 = vst.msk [vmem:[%s13 + $0x198] sm:$0xff] %vm3846, %v3768
    %3898 = vst [vmem:[%s13 + $0x1a0] sm:$0xff] %v3769
    %3899 = vst.msk [vmem:[%s13 + $0x1a8] sm:$0xff] %vm3846, %v3770
    %3900 = vst [vmem:[%s13 + $0x1b0] sm:$0xff] %v3771
    %3901 = vst.msk [vmem:[%s13 + $0x1b8] sm:$0xff] %vm3846, %v3772
    %3902 = vst [vmem:[%s13 + $0x1c0] sm:$0xff] %v3773
    %3903 = vst.msk [vmem:[%s13 + $0x1c8] sm:$0xff] %vm3846, %v3774
    %3904 = vst [vmem:[%s13 + $0x1d0] sm:$0xff] %v3775
    %3905 = vst.msk [vmem:[%s13 + $0x1d8] sm:$0xff] %vm3846, %v3776
    %3906 = vst [vmem:[%s13 + $0x1e0] sm:$0xff] %v3777
    %3907 = vst.msk [vmem:[%s13 + $0x1e8] sm:$0xff] %vm3846, %v3778
    %3908 = vst [vmem:[%s13 + $0x1f0] sm:$0xff] %v3779
    %3909 = vst.msk [vmem:[%s13 + $0x1f8] sm:$0xff] %vm3846, %v3780
    %3910 = vst [vmem:[%s13 + $0x200] sm:$0xff] %v3781
    %3911 = vst.msk [vmem:[%s13 + $0x208] sm:$0xff] %vm3846, %v3782
    %3912 = vst [vmem:[%s13 + $0x210] sm:$0xff] %v3783
    %3913 = vst.msk [vmem:[%s13 + $0x218] sm:$0xff] %vm3846, %v3784
    %3914 = vst [vmem:[%s13 + $0x220] sm:$0xff] %v3785
    %3915 = vst.msk [vmem:[%s13 + $0x228] sm:$0xff] %vm3846, %v3786
    %3916 = vst [vmem:[%s13 + $0x230] sm:$0xff] %v3787
    %3917 = vst.msk [vmem:[%s13 + $0x238] sm:$0xff] %vm3846, %v3788
    %3918 = vst [vmem:[%s13 + $0x240] sm:$0xff] %v3789
    %3919 = vst.msk [vmem:[%s13 + $0x248] sm:$0xff] %vm3846, %v3790
    %3920 = vst [vmem:[%s13 + $0x250] sm:$0xff] %v3791
    %3921 = vst.msk [vmem:[%s13 + $0x258] sm:$0xff] %vm3846, %v3792
    %3922 = vst [vmem:[%s13 + $0x260] sm:$0xff] %v3793
    %3923 = vst.msk [vmem:[%s13 + $0x268] sm:$0xff] %vm3846, %v3794
    %3924 = vst [vmem:[%s13 + $0x270] sm:$0xff] %v3795
    %3925 = vst.msk [vmem:[%s13 + $0x278] sm:$0xff] %vm3846, %v3796
    %3926 = vst [vmem:[%s13 + $0x280] sm:$0xff] %v3797
    %3927 = vst.msk [vmem:[%s13 + $0x288] sm:$0xff] %vm3846, %v3798
    %3928 = vst [vmem:[%s13 + $0x290] sm:$0xff] %v3799
    %3929 = vst.msk [vmem:[%s13 + $0x298] sm:$0xff] %vm3846, %v3800
    %3930 = vst [vmem:[%s13 + $0x2a0] sm:$0xff] %v3801
    %3931 = vst.msk [vmem:[%s13 + $0x2a8] sm:$0xff] %vm3846, %v3802
    %3932 = vst [vmem:[%s13 + $0x2b0] sm:$0xff] %v3803
    %3933 = vst.msk [vmem:[%s13 + $0x2b8] sm:$0xff] %vm3846, %v3804
    %3934 = vst [vmem:[%s13 + $0x2c0] sm:$0xff] %v3805
    %3935 = vst.msk [vmem:[%s13 + $0x2c8] sm:$0xff] %vm3846, %v3806
    %3936 = vst [vmem:[%s13 + $0x2d0] sm:$0xff] %v3807
    %3937 = vst.msk [vmem:[%s13 + $0x2d8] sm:$0xff] %vm3846, %v3808
    %3938 = vst [vmem:[%s13 + $0x2e0] sm:$0xff] %v3809
    %3939 = vst.msk [vmem:[%s13 + $0x2e8] sm:$0xff] %vm3846, %v3810
    %3940 = vst [vmem:[%s13 + $0x2f0] sm:$0xff] %v3811
    %3941 = vst.msk [vmem:[%s13 + $0x2f8] sm:$0xff] %vm3846, %v3812
    %3942 = vst [vmem:[%s13 + $0x300] sm:$0xff] %v3813
    %3943 = vst.msk [vmem:[%s13 + $0x308] sm:$0xff] %vm3846, %v3814
    %3944 = vst [vmem:[%s13 + $0x310] sm:$0xff] %v3815
    %3945 = vst.msk [vmem:[%s13 + $0x318] sm:$0xff] %vm3846, %v3816
    %3946 = vst [vmem:[%s13 + $0x320] sm:$0xff] %v3817
    %3947 = vst.msk [vmem:[%s13 + $0x328] sm:$0xff] %vm3846, %v3818
    %3948 = vst [vmem:[%s13 + $0x330] sm:$0xff] %v3819
    %3949 = vst.msk [vmem:[%s13 + $0x338] sm:$0xff] %vm3846, %v3820
    %3950 = vst [vmem:[%s13 + $0x340] sm:$0xff] %v3821
    %3951 = vst.msk [vmem:[%s13 + $0x348] sm:$0xff] %vm3846, %v3822
    %3952 = vst [vmem:[%s13 + $0x350] sm:$0xff] %v3823
    %3953 = vst.msk [vmem:[%s13 + $0x358] sm:$0xff] %vm3846, %v3824
    %3954 = vst [vmem:[%s13 + $0x360] sm:$0xff] %v3825
    %3955 = vst.msk [vmem:[%s13 + $0x368] sm:$0xff] %vm3846, %v3826
    %3956 = vst [vmem:[%s13 + $0x370] sm:$0xff] %v3827
    %3957 = vst.msk [vmem:[%s13 + $0x378] sm:$0xff] %vm3846, %v3828
    %3958 = vst [vmem:[%s13 + $0x380] sm:$0xff] %v3829
    %3959 = vst.msk [vmem:[%s13 + $0x388] sm:$0xff] %vm3846, %v3830
    %3960 = vst [vmem:[%s13 + $0x390] sm:$0xff] %v3831
    %3961 = vst.msk [vmem:[%s13 + $0x398] sm:$0xff] %vm3846, %v3832
    %3962 = vst [vmem:[%s13 + $0x3a0] sm:$0xff] %v3833
    %3963 = vst.msk [vmem:[%s13 + $0x3a8] sm:$0xff] %vm3846, %v3834
    %3964 = vst [vmem:[%s13 + $0x3b0] sm:$0xff] %v3835
    %3965 = vst.msk [vmem:[%s13 + $0x3b8] sm:$0xff] %vm3846, %v3836
    %3966 = vst [vmem:[%s13 + $0x3c0] sm:$0xff] %v3837
    %3967 = vst.msk [vmem:[%s13 + $0x3c8] sm:$0xff] %vm3846, %v3838
    %3968 = vst [vmem:[%s13 + $0x3d0] sm:$0xff] %v3839
    %3969 = vst.msk [vmem:[%s13 + $0x3d8] sm:$0xff] %vm3846, %v3840
    %3970 = vst [vmem:[%s13 + $0x3e0] sm:$0xff] %v3841
    %3971 = vst.msk [vmem:[%s13 + $0x3e8] sm:$0xff] %vm3846, %v3842
    %3972 = vst [vmem:[%s13 + $0x3f0] sm:$0xff] %v3843
    %3973 = vst.msk [vmem:[%s13 + $0x3f8] sm:$0xff] %vm3846, %v3844
    %s3974 = smul.u32 0, 512
    %v3975 = vlaneseq
    %v3976 = vshrl.u32 %v3975, 7
    %v3977 = vadd.s32 %v3976, 8
    %v3978 = vadd.s32 %v3976, 16
    %v3979 = vadd.s32 %v3976, 24
    %v3980 = vadd.s32 %v3976, 32
    %v3981 = vadd.s32 %v3976, 40
    %v3982 = vadd.s32 %v3976, 48
    %v3983 = vadd.s32 %v3976, 56
    %v3984 = vadd.s32 %v3976, 64
    %v3985 = vadd.s32 %v3976, 72
    %v3986 = vadd.s32 %v3976, 80
    %v3987 = vadd.s32 %v3976, 88
    %v3988 = vadd.s32 %v3976, 96
    %v3989 = vadd.s32 %v3976, 104
    %v3990 = vadd.s32 %v3976, 112
    %v3991 = vadd.s32 %v3976, 120
    %v3992 = vadd.s32 %v3976, 128
    %v3993 = vadd.s32 %v3976, 136
    %v3994 = vadd.s32 %v3976, 144
    %v3995 = vadd.s32 %v3976, 152
    %v3996 = vadd.s32 %v3976, 160
    %v3997 = vadd.s32 %v3976, 168
    %v3998 = vadd.s32 %v3976, 176
    %v3999 = vadd.s32 %v3976, 184
    %v4000 = vadd.s32 %v3976, 192
    %v4001 = vadd.s32 %v3976, 200
    %v4002 = vadd.s32 %v3976, 208
    %v4003 = vadd.s32 %v3976, 216
    %v4004 = vadd.s32 %v3976, 224
    %v4005 = vadd.s32 %v3976, 232
    %v4006 = vadd.s32 %v3976, 240
    %v4007 = vadd.s32 %v3976, 248
    %v4008 = vadd.s32 %v3976, 256
    %v4009 = vadd.s32 %v3976, 264
    %v4010 = vadd.s32 %v3976, 272
    %v4011 = vadd.s32 %v3976, 280
    %v4012 = vadd.s32 %v3976, 288
    %v4013 = vadd.s32 %v3976, 296
    %v4014 = vadd.s32 %v3976, 304
    %v4015 = vadd.s32 %v3976, 312
    %v4016 = vadd.s32 %v3976, 320
    %v4017 = vadd.s32 %v3976, 328
    %v4018 = vadd.s32 %v3976, 336
    %v4019 = vadd.s32 %v3976, 344
    %v4020 = vadd.s32 %v3976, 352
    %v4021 = vadd.s32 %v3976, 360
    %v4022 = vadd.s32 %v3976, 368
    %v4023 = vadd.s32 %v3976, 376
    %v4024 = vadd.s32 %v3976, 384
    %v4025 = vadd.s32 %v3976, 392
    %v4026 = vadd.s32 %v3976, 400
    %v4027 = vadd.s32 %v3976, 408
    %v4028 = vadd.s32 %v3976, 416
    %v4029 = vadd.s32 %v3976, 424
    %v4030 = vadd.s32 %v3976, 432
    %v4031 = vadd.s32 %v3976, 440
    %v4032 = vadd.s32 %v3976, 448
    %v4033 = vadd.s32 %v3976, 456
    %v4034 = vadd.s32 %v3976, 464
    %v4035 = vadd.s32 %v3976, 472
    %v4036 = vadd.s32 %v3976, 480
    %v4037 = vadd.s32 %v3976, 488
    %v4038 = vadd.s32 %v3976, 496
    %v4039 = vadd.s32 %v3976, 504
    %v4040 = vstv %s3974
    %v4041 = vadd.s32 %v4040, %v3976
    %v4042 = vadd.s32 %v4040, %v3977
    %v4043 = vadd.s32 %v4040, %v3978
    %v4044 = vadd.s32 %v4040, %v3979
    %v4045 = vadd.s32 %v4040, %v3980
    %v4046 = vadd.s32 %v4040, %v3981
    %v4047 = vadd.s32 %v4040, %v3982
    %v4048 = vadd.s32 %v4040, %v3983
    %v4049 = vadd.s32 %v4040, %v3984
    %v4050 = vadd.s32 %v4040, %v3985
    %v4051 = vadd.s32 %v4040, %v3986
    %v4052 = vadd.s32 %v4040, %v3987
    %v4053 = vadd.s32 %v4040, %v3988
    %v4054 = vadd.s32 %v4040, %v3989
    %v4055 = vadd.s32 %v4040, %v3990
    %v4056 = vadd.s32 %v4040, %v3991
    %v4057 = vadd.s32 %v4040, %v3992
    %v4058 = vadd.s32 %v4040, %v3993
    %v4059 = vadd.s32 %v4040, %v3994
    %v4060 = vadd.s32 %v4040, %v3995
    %v4061 = vadd.s32 %v4040, %v3996
    %v4062 = vadd.s32 %v4040, %v3997
    %v4063 = vadd.s32 %v4040, %v3998
    %v4064 = vadd.s32 %v4040, %v3999
    %v4065 = vadd.s32 %v4040, %v4000
    %v4066 = vadd.s32 %v4040, %v4001
    %v4067 = vadd.s32 %v4040, %v4002
    %v4068 = vadd.s32 %v4040, %v4003
    %v4069 = vadd.s32 %v4040, %v4004
    %v4070 = vadd.s32 %v4040, %v4005
    %v4071 = vadd.s32 %v4040, %v4006
    %v4072 = vadd.s32 %v4040, %v4007
    %v4073 = vadd.s32 %v4040, %v4008
    %v4074 = vadd.s32 %v4040, %v4009
    %v4075 = vadd.s32 %v4040, %v4010
    %v4076 = vadd.s32 %v4040, %v4011
    %v4077 = vadd.s32 %v4040, %v4012
    %v4078 = vadd.s32 %v4040, %v4013
    %v4079 = vadd.s32 %v4040, %v4014
    %v4080 = vadd.s32 %v4040, %v4015
    %v4081 = vadd.s32 %v4040, %v4016
    %v4082 = vadd.s32 %v4040, %v4017
    %v4083 = vadd.s32 %v4040, %v4018
    %v4084 = vadd.s32 %v4040, %v4019
    %v4085 = vadd.s32 %v4040, %v4020
    %v4086 = vadd.s32 %v4040, %v4021
    %v4087 = vadd.s32 %v4040, %v4022
    %v4088 = vadd.s32 %v4040, %v4023
    %v4089 = vadd.s32 %v4040, %v4024
    %v4090 = vadd.s32 %v4040, %v4025
    %v4091 = vadd.s32 %v4040, %v4026
    %v4092 = vadd.s32 %v4040, %v4027
    %v4093 = vadd.s32 %v4040, %v4028
    %v4094 = vadd.s32 %v4040, %v4029
    %v4095 = vadd.s32 %v4040, %v4030
    %v4096 = vadd.s32 %v4040, %v4031
    %v4097 = vadd.s32 %v4040, %v4032
    %v4098 = vadd.s32 %v4040, %v4033
    %v4099 = vadd.s32 %v4040, %v4034
    %v4100 = vadd.s32 %v4040, %v4035
    %v4101 = vadd.s32 %v4040, %v4036
    %v4102 = vadd.s32 %v4040, %v4037
    %v4103 = vadd.s32 %v4040, %v4038
    %v4104 = vadd.s32 %v4040, %v4039
    %vm4105 = vcmp.lt.s32.totalorder %v4041, 512
    %vm4106 = vcmp.lt.s32.totalorder %v4042, 512
    %vm4107 = vcmp.lt.s32.totalorder %v4043, 512
    %vm4108 = vcmp.lt.s32.totalorder %v4044, 512
    %vm4109 = vcmp.lt.s32.totalorder %v4045, 512
    %vm4110 = vcmp.lt.s32.totalorder %v4046, 512
    %vm4111 = vcmp.lt.s32.totalorder %v4047, 512
    %vm4112 = vcmp.lt.s32.totalorder %v4048, 512
    %vm4113 = vcmp.lt.s32.totalorder %v4049, 512
    %vm4114 = vcmp.lt.s32.totalorder %v4050, 512
    %vm4115 = vcmp.lt.s32.totalorder %v4051, 512
    %vm4116 = vcmp.lt.s32.totalorder %v4052, 512
    %vm4117 = vcmp.lt.s32.totalorder %v4053, 512
    %vm4118 = vcmp.lt.s32.totalorder %v4054, 512
    %vm4119 = vcmp.lt.s32.totalorder %v4055, 512
    %vm4120 = vcmp.lt.s32.totalorder %v4056, 512
    %vm4121 = vcmp.lt.s32.totalorder %v4057, 512
    %vm4122 = vcmp.lt.s32.totalorder %v4058, 512
    %vm4123 = vcmp.lt.s32.totalorder %v4059, 512
    %vm4124 = vcmp.lt.s32.totalorder %v4060, 512
    %vm4125 = vcmp.lt.s32.totalorder %v4061, 512
    %vm4126 = vcmp.lt.s32.totalorder %v4062, 512
    %vm4127 = vcmp.lt.s32.totalorder %v4063, 512
    %vm4128 = vcmp.lt.s32.totalorder %v4064, 512
    %vm4129 = vcmp.lt.s32.totalorder %v4065, 512
    %vm4130 = vcmp.lt.s32.totalorder %v4066, 512
    %vm4131 = vcmp.lt.s32.totalorder %v4067, 512
    %vm4132 = vcmp.lt.s32.totalorder %v4068, 512
    %vm4133 = vcmp.lt.s32.totalorder %v4069, 512
    %vm4134 = vcmp.lt.s32.totalorder %v4070, 512
    %vm4135 = vcmp.lt.s32.totalorder %v4071, 512
    %vm4136 = vcmp.lt.s32.totalorder %v4072, 512
    %vm4137 = vcmp.lt.s32.totalorder %v4073, 512
    %vm4138 = vcmp.lt.s32.totalorder %v4074, 512
    %vm4139 = vcmp.lt.s32.totalorder %v4075, 512
    %vm4140 = vcmp.lt.s32.totalorder %v4076, 512
    %vm4141 = vcmp.lt.s32.totalorder %v4077, 512
    %vm4142 = vcmp.lt.s32.totalorder %v4078, 512
    %vm4143 = vcmp.lt.s32.totalorder %v4079, 512
    %vm4144 = vcmp.lt.s32.totalorder %v4080, 512
    %vm4145 = vcmp.lt.s32.totalorder %v4081, 512
    %vm4146 = vcmp.lt.s32.totalorder %v4082, 512
    %vm4147 = vcmp.lt.s32.totalorder %v4083, 512
    %vm4148 = vcmp.lt.s32.totalorder %v4084, 512
    %vm4149 = vcmp.lt.s32.totalorder %v4085, 512
    %vm4150 = vcmp.lt.s32.totalorder %v4086, 512
    %vm4151 = vcmp.lt.s32.totalorder %v4087, 512
    %vm4152 = vcmp.lt.s32.totalorder %v4088, 512
    %vm4153 = vcmp.lt.s32.totalorder %v4089, 512
    %vm4154 = vcmp.lt.s32.totalorder %v4090, 512
    %vm4155 = vcmp.lt.s32.totalorder %v4091, 512
    %vm4156 = vcmp.lt.s32.totalorder %v4092, 512
    %vm4157 = vcmp.lt.s32.totalorder %v4093, 512
    %vm4158 = vcmp.lt.s32.totalorder %v4094, 512
    %vm4159 = vcmp.lt.s32.totalorder %v4095, 512
    %vm4160 = vcmp.lt.s32.totalorder %v4096, 512
    %vm4161 = vcmp.lt.s32.totalorder %v4097, 512
    %vm4162 = vcmp.lt.s32.totalorder %v4098, 512
    %vm4163 = vcmp.lt.s32.totalorder %v4099, 512
    %vm4164 = vcmp.lt.s32.totalorder %v4100, 512
    %vm4165 = vcmp.lt.s32.totalorder %v4101, 512
    %vm4166 = vcmp.lt.s32.totalorder %v4102, 512
    %vm4167 = vcmp.lt.s32.totalorder %v4103, 512
    %vm4168 = vcmp.lt.s32.totalorder %v4104, 512
    %v4169 = vld [vmem:[#allocation2] sm:$0x1]
    %v4170 = vand.u32 2147483647, %v492
    %v4171 = vand.u32 2147483647, %v495
    %v4172 = vand.u32 2147483647, %v500
    %v4173 = vand.u32 2147483647, %v503
    %v4174 = vand.u32 2147483647, %v508
    %v4175 = vand.u32 2147483647, %v511
    %v4176 = vand.u32 2147483647, %v516
    %v4177 = vand.u32 2147483647, %v519
    %v4178 = vand.u32 2147483647, %v524
    %v4179 = vand.u32 2147483647, %v527
    %v4180 = vand.u32 2147483647, %v532
    %v4181 = vand.u32 2147483647, %v535
    %v4182 = vand.u32 2147483647, %v540
    %v4183 = vand.u32 2147483647, %v543
    %v4184 = vand.u32 2147483647, %v548
    %v4185 = vand.u32 2147483647, %v551
    %v4186 = vand.u32 2147483647, %v556
    %v4187 = vand.u32 2147483647, %v559
    %v4188 = vand.u32 2147483647, %v564
    %v4189 = vand.u32 2147483647, %v567
    %v4190 = vand.u32 2147483647, %v572
    %v4191 = vand.u32 2147483647, %v575
    %v4192 = vand.u32 2147483647, %v580
    %v4193 = vand.u32 2147483647, %v583
    %v4194 = vand.u32 2147483647, %v588
    %v4195 = vand.u32 2147483647, %v591
    %v4196 = vand.u32 2147483647, %v596
    %v4197 = vand.u32 2147483647, %v599
    %v4198 = vand.u32 2147483647, %v604
    %v4199 = vand.u32 2147483647, %v607
    %v4200 = vand.u32 2147483647, %v612
    %v4201 = vand.u32 2147483647, %v615
    %v4202 = vand.u32 2147483647, %v620
    %v4203 = vand.u32 2147483647, %v623
    %v4204 = vand.u32 2147483647, %v628
    %v4205 = vand.u32 2147483647, %v631
    %v4206 = vand.u32 2147483647, %v636
    %v4207 = vand.u32 2147483647, %v639
    %v4208 = vand.u32 2147483647, %v644
    %v4209 = vand.u32 2147483647, %v647
    %v4210 = vand.u32 2147483647, %v652
    %v4211 = vand.u32 2147483647, %v655
    %v4212 = vand.u32 2147483647, %v660
    %v4213 = vand.u32 2147483647, %v663
    %v4214 = vand.u32 2147483647, %v668
    %v4215 = vand.u32 2147483647, %v671
    %v4216 = vand.u32 2147483647, %v676
    %v4217 = vand.u32 2147483647, %v679
    %v4218 = vand.u32 2147483647, %v684
    %v4219 = vand.u32 2147483647, %v687
    %v4220 = vand.u32 2147483647, %v692
    %v4221 = vand.u32 2147483647, %v695
    %v4222 = vand.u32 2147483647, %v700
    %v4223 = vand.u32 2147483647, %v703
    %v4224 = vand.u32 2147483647, %v708
    %v4225 = vand.u32 2147483647, %v711
    %v4226 = vand.u32 2147483647, %v716
    %v4227 = vand.u32 2147483647, %v719
    %v4228 = vand.u32 2147483647, %v724
    %v4229 = vand.u32 2147483647, %v727
    %v4230 = vand.u32 2147483647, %v732
    %v4231 = vand.u32 2147483647, %v735
    %v4232 = vand.u32 2147483647, %v740
    %v4233 = vand.u32 2147483647, %v743
    %v4234 = vsel %vm360, %v4170, 0.0
    %4235 = vadd.xlane.f32.xlu0 %v4234
    %v4236 = vpop.xlane.xlu0 %4235
    %v4237 = vsel %vm360, %v4171, 0.0
    %4238 = vadd.xlane.f32.xlu0 %v4237
    %v4239 = vpop.xlane.xlu0 %4238
    %v4240 = vsel %vm360, %v4172, 0.0
    %4241 = vadd.xlane.f32.xlu0 %v4240
    %v4242 = vpop.xlane.xlu0 %4241
    %v4243 = vsel %vm360, %v4173, 0.0
    %4244 = vadd.xlane.f32.xlu0 %v4243
    %v4245 = vpop.xlane.xlu0 %4244
    %v4246 = vsel %vm360, %v4174, 0.0
    %4247 = vadd.xlane.f32.xlu0 %v4246
    %v4248 = vpop.xlane.xlu0 %4247
    %v4249 = vsel %vm360, %v4175, 0.0
    %4250 = vadd.xlane.f32.xlu0 %v4249
    %v4251 = vpop.xlane.xlu0 %4250
    %v4252 = vsel %vm360, %v4176, 0.0
    %4253 = vadd.xlane.f32.xlu0 %v4252
    %v4254 = vpop.xlane.xlu0 %4253
    %v4255 = vsel %vm360, %v4177, 0.0
    %4256 = vadd.xlane.f32.xlu0 %v4255
    %v4257 = vpop.xlane.xlu0 %4256
    %v4258 = vsel %vm360, %v4178, 0.0
    %4259 = vadd.xlane.f32.xlu0 %v4258
    %v4260 = vpop.xlane.xlu0 %4259
    %v4261 = vsel %vm360, %v4179, 0.0
    %4262 = vadd.xlane.f32.xlu0 %v4261
    %v4263 = vpop.xlane.xlu0 %4262
    %v4264 = vsel %vm360, %v4180, 0.0
    %4265 = vadd.xlane.f32.xlu0 %v4264
    %v4266 = vpop.xlane.xlu0 %4265
    %v4267 = vsel %vm360, %v4181, 0.0
    %4268 = vadd.xlane.f32.xlu0 %v4267
    %v4269 = vpop.xlane.xlu0 %4268
    %v4270 = vsel %vm360, %v4182, 0.0
    %4271 = vadd.xlane.f32.xlu0 %v4270
    %v4272 = vpop.xlane.xlu0 %4271
    %v4273 = vsel %vm360, %v4183, 0.0
    %4274 = vadd.xlane.f32.xlu0 %v4273
    %v4275 = vpop.xlane.xlu0 %4274
    %v4276 = vsel %vm360, %v4184, 0.0
    %4277 = vadd.xlane.f32.xlu0 %v4276
    %v4278 = vpop.xlane.xlu0 %4277
    %v4279 = vsel %vm360, %v4185, 0.0
    %4280 = vadd.xlane.f32.xlu0 %v4279
    %v4281 = vpop.xlane.xlu0 %4280
    %v4282 = vsel %vm360, %v4186, 0.0
    %4283 = vadd.xlane.f32.xlu0 %v4282
    %v4284 = vpop.xlane.xlu0 %4283
    %v4285 = vsel %vm360, %v4187, 0.0
    %4286 = vadd.xlane.f32.xlu0 %v4285
    %v4287 = vpop.xlane.xlu0 %4286
    %v4288 = vsel %vm360, %v4188, 0.0
    %4289 = vadd.xlane.f32.xlu0 %v4288
    %v4290 = vpop.xlane.xlu0 %4289
    %v4291 = vsel %vm360, %v4189, 0.0
    %4292 = vadd.xlane.f32.xlu0 %v4291
    %v4293 = vpop.xlane.xlu0 %4292
    %v4294 = vsel %vm360, %v4190, 0.0
    %4295 = vadd.xlane.f32.xlu0 %v4294
    %v4296 = vpop.xlane.xlu0 %4295
    %v4297 = vsel %vm360, %v4191, 0.0
    %4298 = vadd.xlane.f32.xlu0 %v4297
    %v4299 = vpop.xlane.xlu0 %4298
    %v4300 = vsel %vm360, %v4192, 0.0
    %4301 = vadd.xlane.f32.xlu0 %v4300
    %v4302 = vpop.xlane.xlu0 %4301
    %v4303 = vsel %vm360, %v4193, 0.0
    %4304 = vadd.xlane.f32.xlu0 %v4303
    %v4305 = vpop.xlane.xlu0 %4304
    %v4306 = vsel %vm360, %v4194, 0.0
    %4307 = vadd.xlane.f32.xlu0 %v4306
    %v4308 = vpop.xlane.xlu0 %4307
    %v4309 = vsel %vm360, %v4195, 0.0
    %4310 = vadd.xlane.f32.xlu0 %v4309
    %v4311 = vpop.xlane.xlu0 %4310
    %v4312 = vsel %vm360, %v4196, 0.0
    %4313 = vadd.xlane.f32.xlu0 %v4312
    %v4314 = vpop.xlane.xlu0 %4313
    %v4315 = vsel %vm360, %v4197, 0.0
    %4316 = vadd.xlane.f32.xlu0 %v4315
    %v4317 = vpop.xlane.xlu0 %4316
    %v4318 = vsel %vm360, %v4198, 0.0
    %4319 = vadd.xlane.f32.xlu0 %v4318
    %v4320 = vpop.xlane.xlu0 %4319
    %v4321 = vsel %vm360, %v4199, 0.0
    %4322 = vadd.xlane.f32.xlu0 %v4321
    %v4323 = vpop.xlane.xlu0 %4322
    %v4324 = vsel %vm360, %v4200, 0.0
    %4325 = vadd.xlane.f32.xlu0 %v4324
    %v4326 = vpop.xlane.xlu0 %4325
    %v4327 = vsel %vm360, %v4201, 0.0
    %4328 = vadd.xlane.f32.xlu0 %v4327
    %v4329 = vpop.xlane.xlu0 %4328
    %v4330 = vsel %vm360, %v4202, 0.0
    %4331 = vadd.xlane.f32.xlu0 %v4330
    %v4332 = vpop.xlane.xlu0 %4331
    %v4333 = vsel %vm360, %v4203, 0.0
    %4334 = vadd.xlane.f32.xlu0 %v4333
    %v4335 = vpop.xlane.xlu0 %4334
    %v4336 = vsel %vm360, %v4204, 0.0
    %4337 = vadd.xlane.f32.xlu0 %v4336
    %v4338 = vpop.xlane.xlu0 %4337
    %v4339 = vsel %vm360, %v4205, 0.0
    %4340 = vadd.xlane.f32.xlu0 %v4339
    %v4341 = vpop.xlane.xlu0 %4340
    %v4342 = vsel %vm360, %v4206, 0.0
    %4343 = vadd.xlane.f32.xlu0 %v4342
    %v4344 = vpop.xlane.xlu0 %4343
    %v4345 = vsel %vm360, %v4207, 0.0
    %4346 = vadd.xlane.f32.xlu0 %v4345
    %v4347 = vpop.xlane.xlu0 %4346
    %v4348 = vsel %vm360, %v4208, 0.0
    %4349 = vadd.xlane.f32.xlu0 %v4348
    %v4350 = vpop.xlane.xlu0 %4349
    %v4351 = vsel %vm360, %v4209, 0.0
    %4352 = vadd.xlane.f32.xlu0 %v4351
    %v4353 = vpop.xlane.xlu0 %4352
    %v4354 = vsel %vm360, %v4210, 0.0
    %4355 = vadd.xlane.f32.xlu0 %v4354
    %v4356 = vpop.xlane.xlu0 %4355
    %v4357 = vsel %vm360, %v4211, 0.0
    %4358 = vadd.xlane.f32.xlu0 %v4357
    %v4359 = vpop.xlane.xlu0 %4358
    %v4360 = vsel %vm360, %v4212, 0.0
    %4361 = vadd.xlane.f32.xlu0 %v4360
    %v4362 = vpop.xlane.xlu0 %4361
    %v4363 = vsel %vm360, %v4213, 0.0
    %4364 = vadd.xlane.f32.xlu0 %v4363
    %v4365 = vpop.xlane.xlu0 %4364
    %v4366 = vsel %vm360, %v4214, 0.0
    %4367 = vadd.xlane.f32.xlu0 %v4366
    %v4368 = vpop.xlane.xlu0 %4367
    %v4369 = vsel %vm360, %v4215, 0.0
    %4370 = vadd.xlane.f32.xlu0 %v4369
    %v4371 = vpop.xlane.xlu0 %4370
    %v4372 = vsel %vm360, %v4216, 0.0
    %4373 = vadd.xlane.f32.xlu0 %v4372
    %v4374 = vpop.xlane.xlu0 %4373
    %v4375 = vsel %vm360, %v4217, 0.0
    %4376 = vadd.xlane.f32.xlu0 %v4375
    %v4377 = vpop.xlane.xlu0 %4376
    %v4378 = vsel %vm360, %v4218, 0.0
    %4379 = vadd.xlane.f32.xlu0 %v4378
    %v4380 = vpop.xlane.xlu0 %4379
    %v4381 = vsel %vm360, %v4219, 0.0
    %4382 = vadd.xlane.f32.xlu0 %v4381
    %v4383 = vpop.xlane.xlu0 %4382
    %v4384 = vsel %vm360, %v4220, 0.0
    %4385 = vadd.xlane.f32.xlu0 %v4384
    %v4386 = vpop.xlane.xlu0 %4385
    %v4387 = vsel %vm360, %v4221, 0.0
    %4388 = vadd.xlane.f32.xlu0 %v4387
    %v4389 = vpop.xlane.xlu0 %4388
    %v4390 = vsel %vm360, %v4222, 0.0
    %4391 = vadd.xlane.f32.xlu0 %v4390
    %v4392 = vpop.xlane.xlu0 %4391
    %v4393 = vsel %vm360, %v4223, 0.0
    %4394 = vadd.xlane.f32.xlu0 %v4393
    %v4395 = vpop.xlane.xlu0 %4394
    %v4396 = vsel %vm360, %v4224, 0.0
    %4397 = vadd.xlane.f32.xlu0 %v4396
    %v4398 = vpop.xlane.xlu0 %4397
    %v4399 = vsel %vm360, %v4225, 0.0
    %4400 = vadd.xlane.f32.xlu0 %v4399
    %v4401 = vpop.xlane.xlu0 %4400
    %v4402 = vsel %vm360, %v4226, 0.0
    %4403 = vadd.xlane.f32.xlu0 %v4402
    %v4404 = vpop.xlane.xlu0 %4403
    %v4405 = vsel %vm360, %v4227, 0.0
    %4406 = vadd.xlane.f32.xlu0 %v4405
    %v4407 = vpop.xlane.xlu0 %4406
    %v4408 = vsel %vm360, %v4228, 0.0
    %4409 = vadd.xlane.f32.xlu0 %v4408
    %v4410 = vpop.xlane.xlu0 %4409
    %v4411 = vsel %vm360, %v4229, 0.0
    %4412 = vadd.xlane.f32.xlu0 %v4411
    %v4413 = vpop.xlane.xlu0 %4412
    %v4414 = vsel %vm360, %v4230, 0.0
    %4415 = vadd.xlane.f32.xlu0 %v4414
    %v4416 = vpop.xlane.xlu0 %4415
    %v4417 = vsel %vm360, %v4231, 0.0
    %4418 = vadd.xlane.f32.xlu0 %v4417
    %v4419 = vpop.xlane.xlu0 %4418
    %v4420 = vsel %vm360, %v4232, 0.0
    %4421 = vadd.xlane.f32.xlu0 %v4420
    %v4422 = vpop.xlane.xlu0 %4421
    %v4423 = vsel %vm360, %v4233, 0.0
    %4424 = vadd.xlane.f32.xlu0 %v4423
    %v4425 = vpop.xlane.xlu0 %4424
    %v4426 = vsel %vm4105, %v4236, 0.0
    %v4427 = vsel %vm4106, %v4239, 0.0
    %v4428 = vsel %vm4107, %v4242, 0.0
    %v4429 = vsel %vm4108, %v4245, 0.0
    %v4430 = vsel %vm4109, %v4248, 0.0
    %v4431 = vsel %vm4110, %v4251, 0.0
    %v4432 = vsel %vm4111, %v4254, 0.0
    %v4433 = vsel %vm4112, %v4257, 0.0
    %v4434 = vsel %vm4113, %v4260, 0.0
    %v4435 = vsel %vm4114, %v4263, 0.0
    %v4436 = vsel %vm4115, %v4266, 0.0
    %v4437 = vsel %vm4116, %v4269, 0.0
    %v4438 = vsel %vm4117, %v4272, 0.0
    %v4439 = vsel %vm4118, %v4275, 0.0
    %v4440 = vsel %vm4119, %v4278, 0.0
    %v4441 = vsel %vm4120, %v4281, 0.0
    %v4442 = vsel %vm4121, %v4284, 0.0
    %v4443 = vsel %vm4122, %v4287, 0.0
    %v4444 = vsel %vm4123, %v4290, 0.0
    %v4445 = vsel %vm4124, %v4293, 0.0
    %v4446 = vsel %vm4125, %v4296, 0.0
    %v4447 = vsel %vm4126, %v4299, 0.0
    %v4448 = vsel %vm4127, %v4302, 0.0
    %v4449 = vsel %vm4128, %v4305, 0.0
    %v4450 = vsel %vm4129, %v4308, 0.0
    %v4451 = vsel %vm4130, %v4311, 0.0
    %v4452 = vsel %vm4131, %v4314, 0.0
    %v4453 = vsel %vm4132, %v4317, 0.0
    %v4454 = vsel %vm4133, %v4320, 0.0
    %v4455 = vsel %vm4134, %v4323, 0.0
    %v4456 = vsel %vm4135, %v4326, 0.0
    %v4457 = vsel %vm4136, %v4329, 0.0
    %v4458 = vsel %vm4137, %v4332, 0.0
    %v4459 = vsel %vm4138, %v4335, 0.0
    %v4460 = vsel %vm4139, %v4338, 0.0
    %v4461 = vsel %vm4140, %v4341, 0.0
    %v4462 = vsel %vm4141, %v4344, 0.0
    %v4463 = vsel %vm4142, %v4347, 0.0
    %v4464 = vsel %vm4143, %v4350, 0.0
    %v4465 = vsel %vm4144, %v4353, 0.0
    %v4466 = vsel %vm4145, %v4356, 0.0
    %v4467 = vsel %vm4146, %v4359, 0.0
    %v4468 = vsel %vm4147, %v4362, 0.0
    %v4469 = vsel %vm4148, %v4365, 0.0
    %v4470 = vsel %vm4149, %v4368, 0.0
    %v4471 = vsel %vm4150, %v4371, 0.0
    %v4472 = vsel %vm4151, %v4374, 0.0
    %v4473 = vsel %vm4152, %v4377, 0.0
    %v4474 = vsel %vm4153, %v4380, 0.0
    %v4475 = vsel %vm4154, %v4383, 0.0
    %v4476 = vsel %vm4155, %v4386, 0.0
    %v4477 = vsel %vm4156, %v4389, 0.0
    %v4478 = vsel %vm4157, %v4392, 0.0
    %v4479 = vsel %vm4158, %v4395, 0.0
    %v4480 = vsel %vm4159, %v4398, 0.0
    %v4481 = vsel %vm4160, %v4401, 0.0
    %v4482 = vsel %vm4161, %v4404, 0.0
    %v4483 = vsel %vm4162, %v4407, 0.0
    %v4484 = vsel %vm4163, %v4410, 0.0
    %v4485 = vsel %vm4164, %v4413, 0.0
    %v4486 = vsel %vm4165, %v4416, 0.0
    %v4487 = vsel %vm4166, %v4419, 0.0
    %v4488 = vsel %vm4167, %v4422, 0.0
    %v4489 = vsel %vm4168, %v4425, 0.0
    %vm4490 = vcmask 7168
    %v4491 = vsel %vm4490, %v4426, 0.0
    %v4492 = vsel %vm4490, %v4427, 0.0
    %v4493 = vadd.f32 %v4491, %v4492
    %v4494 = vsel %vm4490, %v4428, 0.0
    %v4495 = vadd.f32 %v4493, %v4494
    %v4496 = vsel %vm4490, %v4429, 0.0
    %v4497 = vadd.f32 %v4495, %v4496
    %v4498 = vsel %vm4490, %v4430, 0.0
    %v4499 = vadd.f32 %v4497, %v4498
    %v4500 = vsel %vm4490, %v4431, 0.0
    %v4501 = vadd.f32 %v4499, %v4500
    %v4502 = vsel %vm4490, %v4432, 0.0
    %v4503 = vadd.f32 %v4501, %v4502
    %v4504 = vsel %vm4490, %v4433, 0.0
    %v4505 = vadd.f32 %v4503, %v4504
    %v4506 = vsel %vm4490, %v4434, 0.0
    %v4507 = vadd.f32 %v4505, %v4506
    %v4508 = vsel %vm4490, %v4435, 0.0
    %v4509 = vadd.f32 %v4507, %v4508
    %v4510 = vsel %vm4490, %v4436, 0.0
    %v4511 = vadd.f32 %v4509, %v4510
    %v4512 = vsel %vm4490, %v4437, 0.0
    %v4513 = vadd.f32 %v4511, %v4512
    %v4514 = vsel %vm4490, %v4438, 0.0
    %v4515 = vadd.f32 %v4513, %v4514
    %v4516 = vsel %vm4490, %v4439, 0.0
    %v4517 = vadd.f32 %v4515, %v4516
    %v4518 = vsel %vm4490, %v4440, 0.0
    %v4519 = vadd.f32 %v4517, %v4518
    %v4520 = vsel %vm4490, %v4441, 0.0
    %v4521 = vadd.f32 %v4519, %v4520
    %v4522 = vsel %vm4490, %v4442, 0.0
    %v4523 = vadd.f32 %v4521, %v4522
    %v4524 = vsel %vm4490, %v4443, 0.0
    %v4525 = vadd.f32 %v4523, %v4524
    %v4526 = vsel %vm4490, %v4444, 0.0
    %v4527 = vadd.f32 %v4525, %v4526
    %v4528 = vsel %vm4490, %v4445, 0.0
    %v4529 = vadd.f32 %v4527, %v4528
    %v4530 = vsel %vm4490, %v4446, 0.0
    %v4531 = vadd.f32 %v4529, %v4530
    %v4532 = vsel %vm4490, %v4447, 0.0
    %v4533 = vadd.f32 %v4531, %v4532
    %v4534 = vsel %vm4490, %v4448, 0.0
    %v4535 = vadd.f32 %v4533, %v4534
    %v4536 = vsel %vm4490, %v4449, 0.0
    %v4537 = vadd.f32 %v4535, %v4536
    %v4538 = vsel %vm4490, %v4450, 0.0
    %v4539 = vadd.f32 %v4537, %v4538
    %v4540 = vsel %vm4490, %v4451, 0.0
    %v4541 = vadd.f32 %v4539, %v4540
    %v4542 = vsel %vm4490, %v4452, 0.0
    %v4543 = vadd.f32 %v4541, %v4542
    %v4544 = vsel %vm4490, %v4453, 0.0
    %v4545 = vadd.f32 %v4543, %v4544
    %v4546 = vsel %vm4490, %v4454, 0.0
    %v4547 = vadd.f32 %v4545, %v4546
    %v4548 = vsel %vm4490, %v4455, 0.0
    %v4549 = vadd.f32 %v4547, %v4548
    %v4550 = vsel %vm4490, %v4456, 0.0
    %v4551 = vadd.f32 %v4549, %v4550
    %v4552 = vsel %vm4490, %v4457, 0.0
    %v4553 = vadd.f32 %v4551, %v4552
    %v4554 = vsel %vm4490, %v4458, 0.0
    %v4555 = vadd.f32 %v4553, %v4554
    %v4556 = vsel %vm4490, %v4459, 0.0
    %v4557 = vadd.f32 %v4555, %v4556
    %v4558 = vsel %vm4490, %v4460, 0.0
    %v4559 = vadd.f32 %v4557, %v4558
    %v4560 = vsel %vm4490, %v4461, 0.0
    %v4561 = vadd.f32 %v4559, %v4560
    %v4562 = vsel %vm4490, %v4462, 0.0
    %v4563 = vadd.f32 %v4561, %v4562
    %v4564 = vsel %vm4490, %v4463, 0.0
    %v4565 = vadd.f32 %v4563, %v4564
    %v4566 = vsel %vm4490, %v4464, 0.0
    %v4567 = vadd.f32 %v4565, %v4566
    %v4568 = vsel %vm4490, %v4465, 0.0
    %v4569 = vadd.f32 %v4567, %v4568
    %v4570 = vsel %vm4490, %v4466, 0.0
    %v4571 = vadd.f32 %v4569, %v4570
    %v4572 = vsel %vm4490, %v4467, 0.0
    %v4573 = vadd.f32 %v4571, %v4572
    %v4574 = vsel %vm4490, %v4468, 0.0
    %v4575 = vadd.f32 %v4573, %v4574
    %v4576 = vsel %vm4490, %v4469, 0.0
    %v4577 = vadd.f32 %v4575, %v4576
    %v4578 = vsel %vm4490, %v4470, 0.0
    %v4579 = vadd.f32 %v4577, %v4578
    %v4580 = vsel %vm4490, %v4471, 0.0
    %v4581 = vadd.f32 %v4579, %v4580
    %v4582 = vsel %vm4490, %v4472, 0.0
    %v4583 = vadd.f32 %v4581, %v4582
    %v4584 = vsel %vm4490, %v4473, 0.0
    %v4585 = vadd.f32 %v4583, %v4584
    %v4586 = vsel %vm4490, %v4474, 0.0
    %v4587 = vadd.f32 %v4585, %v4586
    %v4588 = vsel %vm4490, %v4475, 0.0
    %v4589 = vadd.f32 %v4587, %v4588
    %v4590 = vsel %vm4490, %v4476, 0.0
    %v4591 = vadd.f32 %v4589, %v4590
    %v4592 = vsel %vm4490, %v4477, 0.0
    %v4593 = vadd.f32 %v4591, %v4592
    %v4594 = vsel %vm4490, %v4478, 0.0
    %v4595 = vadd.f32 %v4593, %v4594
    %v4596 = vsel %vm4490, %v4479, 0.0
    %v4597 = vadd.f32 %v4595, %v4596
    %v4598 = vsel %vm4490, %v4480, 0.0
    %v4599 = vadd.f32 %v4597, %v4598
    %v4600 = vsel %vm4490, %v4481, 0.0
    %v4601 = vadd.f32 %v4599, %v4600
    %v4602 = vsel %vm4490, %v4482, 0.0
    %v4603 = vadd.f32 %v4601, %v4602
    %v4604 = vsel %vm4490, %v4483, 0.0
    %v4605 = vadd.f32 %v4603, %v4604
    %v4606 = vsel %vm4490, %v4484, 0.0
    %v4607 = vadd.f32 %v4605, %v4606
    %v4608 = vsel %vm4490, %v4485, 0.0
    %v4609 = vadd.f32 %v4607, %v4608
    %v4610 = vsel %vm4490, %v4486, 0.0
    %v4611 = vadd.f32 %v4609, %v4610
    %v4612 = vsel %vm4490, %v4487, 0.0
    %v4613 = vadd.f32 %v4611, %v4612
    %v4614 = vsel %vm4490, %v4488, 0.0
    %v4615 = vadd.f32 %v4613, %v4614
    %v4616 = vsel %vm4490, %v4489, 0.0
    %v4617 = vadd.f32 %v4615, %v4616
    %4618 = vadd.xlane.f32.xlu0 %v4617
    %v4619 = vpop.xlane.xlu0 %4618
    %v4620 = vrot.slane %v4619, 4
    %v4621 = vadd.f32 %v4619, %v4620
    %v4622 = vrot.slane %v4621, 2
    %v4623 = vadd.f32 %v4621, %v4622
    %v4624 = vrot.slane %v4623, 1
    %v4625 = vadd.f32 %v4623, %v4624
    %s4626 = vtos %v4625
    %v4627 = vstv %s4626
    %v4628 = vadd.f32 %v4169, %v4627
    %vm4629 = vcmask 0
    %4630 = vst.msk [vmem:[#allocation2] sm:$0x1] %vm4629, %v4628
    %v4631 = vld [vmem:[#allocation4] sm:$0x1]
    %v4632 = vand.u32 2147483647, %v890
    %v4633 = vand.u32 2147483647, %v893
    %v4634 = vand.u32 2147483647, %v898
    %v4635 = vand.u32 2147483647, %v901
    %v4636 = vand.u32 2147483647, %v906
    %v4637 = vand.u32 2147483647, %v909
    %v4638 = vand.u32 2147483647, %v914
    %v4639 = vand.u32 2147483647, %v917
    %v4640 = vand.u32 2147483647, %v922
    %v4641 = vand.u32 2147483647, %v925
    %v4642 = vand.u32 2147483647, %v930
    %v4643 = vand.u32 2147483647, %v933
    %v4644 = vand.u32 2147483647, %v938
    %v4645 = vand.u32 2147483647, %v941
    %v4646 = vand.u32 2147483647, %v946
    %v4647 = vand.u32 2147483647, %v949
    %v4648 = vand.u32 2147483647, %v954
    %v4649 = vand.u32 2147483647, %v957
    %v4650 = vand.u32 2147483647, %v962
    %v4651 = vand.u32 2147483647, %v965
    %v4652 = vand.u32 2147483647, %v970
    %v4653 = vand.u32 2147483647, %v973
    %v4654 = vand.u32 2147483647, %v978
    %v4655 = vand.u32 2147483647, %v981
    %v4656 = vand.u32 2147483647, %v986
    %v4657 = vand.u32 2147483647, %v989
    %v4658 = vand.u32 2147483647, %v994
    %v4659 = vand.u32 2147483647, %v997
    %v4660 = vand.u32 2147483647, %v1002
    %v4661 = vand.u32 2147483647, %v1005
    %v4662 = vand.u32 2147483647, %v1010
    %v4663 = vand.u32 2147483647, %v1013
    %v4664 = vand.u32 2147483647, %v1018
    %v4665 = vand.u32 2147483647, %v1021
    %v4666 = vand.u32 2147483647, %v1026
    %v4667 = vand.u32 2147483647, %v1029
    %v4668 = vand.u32 2147483647, %v1034
    %v4669 = vand.u32 2147483647, %v1037
    %v4670 = vand.u32 2147483647, %v1042
    %v4671 = vand.u32 2147483647, %v1045
    %v4672 = vand.u32 2147483647, %v1050
    %v4673 = vand.u32 2147483647, %v1053
    %v4674 = vand.u32 2147483647, %v1058
    %v4675 = vand.u32 2147483647, %v1061
    %v4676 = vand.u32 2147483647, %v1066
    %v4677 = vand.u32 2147483647, %v1069
    %v4678 = vand.u32 2147483647, %v1074
    %v4679 = vand.u32 2147483647, %v1077
    %v4680 = vand.u32 2147483647, %v1082
    %v4681 = vand.u32 2147483647, %v1085
    %v4682 = vand.u32 2147483647, %v1090
    %v4683 = vand.u32 2147483647, %v1093
    %v4684 = vand.u32 2147483647, %v1098
    %v4685 = vand.u32 2147483647, %v1101
    %v4686 = vand.u32 2147483647, %v1106
    %v4687 = vand.u32 2147483647, %v1109
    %v4688 = vand.u32 2147483647, %v1114
    %v4689 = vand.u32 2147483647, %v1117
    %v4690 = vand.u32 2147483647, %v1122
    %v4691 = vand.u32 2147483647, %v1125
    %v4692 = vand.u32 2147483647, %v1130
    %v4693 = vand.u32 2147483647, %v1133
    %v4694 = vand.u32 2147483647, %v1138
    %v4695 = vand.u32 2147483647, %v1141
    %v4696 = vsel %vm360, %v4632, 0.0
    %4697 = vadd.xlane.f32.xlu0 %v4696
    %v4698 = vpop.xlane.xlu0 %4697
    %v4699 = vsel %vm360, %v4633, 0.0
    %4700 = vadd.xlane.f32.xlu0 %v4699
    %v4701 = vpop.xlane.xlu0 %4700
    %v4702 = vsel %vm360, %v4634, 0.0
    %4703 = vadd.xlane.f32.xlu0 %v4702
    %v4704 = vpop.xlane.xlu0 %4703
    %v4705 = vsel %vm360, %v4635, 0.0
    %4706 = vadd.xlane.f32.xlu0 %v4705
    %v4707 = vpop.xlane.xlu0 %4706
    %v4708 = vsel %vm360, %v4636, 0.0
    %4709 = vadd.xlane.f32.xlu0 %v4708
    %v4710 = vpop.xlane.xlu0 %4709
    %v4711 = vsel %vm360, %v4637, 0.0
    %4712 = vadd.xlane.f32.xlu0 %v4711
    %v4713 = vpop.xlane.xlu0 %4712
    %v4714 = vsel %vm360, %v4638, 0.0
    %4715 = vadd.xlane.f32.xlu0 %v4714
    %v4716 = vpop.xlane.xlu0 %4715
    %v4717 = vsel %vm360, %v4639, 0.0
    %4718 = vadd.xlane.f32.xlu0 %v4717
    %v4719 = vpop.xlane.xlu0 %4718
    %v4720 = vsel %vm360, %v4640, 0.0
    %4721 = vadd.xlane.f32.xlu0 %v4720
    %v4722 = vpop.xlane.xlu0 %4721
    %v4723 = vsel %vm360, %v4641, 0.0
    %4724 = vadd.xlane.f32.xlu0 %v4723
    %v4725 = vpop.xlane.xlu0 %4724
    %v4726 = vsel %vm360, %v4642, 0.0
    %4727 = vadd.xlane.f32.xlu0 %v4726
    %v4728 = vpop.xlane.xlu0 %4727
    %v4729 = vsel %vm360, %v4643, 0.0
    %4730 = vadd.xlane.f32.xlu0 %v4729
    %v4731 = vpop.xlane.xlu0 %4730
    %v4732 = vsel %vm360, %v4644, 0.0
    %4733 = vadd.xlane.f32.xlu0 %v4732
    %v4734 = vpop.xlane.xlu0 %4733
    %v4735 = vsel %vm360, %v4645, 0.0
    %4736 = vadd.xlane.f32.xlu0 %v4735
    %v4737 = vpop.xlane.xlu0 %4736
    %v4738 = vsel %vm360, %v4646, 0.0
    %4739 = vadd.xlane.f32.xlu0 %v4738
    %v4740 = vpop.xlane.xlu0 %4739
    %v4741 = vsel %vm360, %v4647, 0.0
    %4742 = vadd.xlane.f32.xlu0 %v4741
    %v4743 = vpop.xlane.xlu0 %4742
    %v4744 = vsel %vm360, %v4648, 0.0
    %4745 = vadd.xlane.f32.xlu0 %v4744
    %v4746 = vpop.xlane.xlu0 %4745
    %v4747 = vsel %vm360, %v4649, 0.0
    %4748 = vadd.xlane.f32.xlu0 %v4747
    %v4749 = vpop.xlane.xlu0 %4748
    %v4750 = vsel %vm360, %v4650, 0.0
    %4751 = vadd.xlane.f32.xlu0 %v4750
    %v4752 = vpop.xlane.xlu0 %4751
    %v4753 = vsel %vm360, %v4651, 0.0
    %4754 = vadd.xlane.f32.xlu0 %v4753
    %v4755 = vpop.xlane.xlu0 %4754
    %v4756 = vsel %vm360, %v4652, 0.0
    %4757 = vadd.xlane.f32.xlu0 %v4756
    %v4758 = vpop.xlane.xlu0 %4757
    %v4759 = vsel %vm360, %v4653, 0.0
    %4760 = vadd.xlane.f32.xlu0 %v4759
    %v4761 = vpop.xlane.xlu0 %4760
    %v4762 = vsel %vm360, %v4654, 0.0
    %4763 = vadd.xlane.f32.xlu0 %v4762
    %v4764 = vpop.xlane.xlu0 %4763
    %v4765 = vsel %vm360, %v4655, 0.0
    %4766 = vadd.xlane.f32.xlu0 %v4765
    %v4767 = vpop.xlane.xlu0 %4766
    %v4768 = vsel %vm360, %v4656, 0.0
    %4769 = vadd.xlane.f32.xlu0 %v4768
    %v4770 = vpop.xlane.xlu0 %4769
    %v4771 = vsel %vm360, %v4657, 0.0
    %4772 = vadd.xlane.f32.xlu0 %v4771
    %v4773 = vpop.xlane.xlu0 %4772
    %v4774 = vsel %vm360, %v4658, 0.0
    %4775 = vadd.xlane.f32.xlu0 %v4774
    %v4776 = vpop.xlane.xlu0 %4775
    %v4777 = vsel %vm360, %v4659, 0.0
    %4778 = vadd.xlane.f32.xlu0 %v4777
    %v4779 = vpop.xlane.xlu0 %4778
    %v4780 = vsel %vm360, %v4660, 0.0
    %4781 = vadd.xlane.f32.xlu0 %v4780
    %v4782 = vpop.xlane.xlu0 %4781
    %v4783 = vsel %vm360, %v4661, 0.0
    %4784 = vadd.xlane.f32.xlu0 %v4783
    %v4785 = vpop.xlane.xlu0 %4784
    %v4786 = vsel %vm360, %v4662, 0.0
    %4787 = vadd.xlane.f32.xlu0 %v4786
    %v4788 = vpop.xlane.xlu0 %4787
    %v4789 = vsel %vm360, %v4663, 0.0
    %4790 = vadd.xlane.f32.xlu0 %v4789
    %v4791 = vpop.xlane.xlu0 %4790
    %v4792 = vsel %vm360, %v4664, 0.0
    %4793 = vadd.xlane.f32.xlu0 %v4792
    %v4794 = vpop.xlane.xlu0 %4793
    %v4795 = vsel %vm360, %v4665, 0.0
    %4796 = vadd.xlane.f32.xlu0 %v4795
    %v4797 = vpop.xlane.xlu0 %4796
    %v4798 = vsel %vm360, %v4666, 0.0
    %4799 = vadd.xlane.f32.xlu0 %v4798
    %v4800 = vpop.xlane.xlu0 %4799
    %v4801 = vsel %vm360, %v4667, 0.0
    %4802 = vadd.xlane.f32.xlu0 %v4801
    %v4803 = vpop.xlane.xlu0 %4802
    %v4804 = vsel %vm360, %v4668, 0.0
    %4805 = vadd.xlane.f32.xlu0 %v4804
    %v4806 = vpop.xlane.xlu0 %4805
    %v4807 = vsel %vm360, %v4669, 0.0
    %4808 = vadd.xlane.f32.xlu0 %v4807
    %v4809 = vpop.xlane.xlu0 %4808
    %v4810 = vsel %vm360, %v4670, 0.0
    %4811 = vadd.xlane.f32.xlu0 %v4810
    %v4812 = vpop.xlane.xlu0 %4811
    %v4813 = vsel %vm360, %v4671, 0.0
    %4814 = vadd.xlane.f32.xlu0 %v4813
    %v4815 = vpop.xlane.xlu0 %4814
    %v4816 = vsel %vm360, %v4672, 0.0
    %4817 = vadd.xlane.f32.xlu0 %v4816
    %v4818 = vpop.xlane.xlu0 %4817
    %v4819 = vsel %vm360, %v4673, 0.0
    %4820 = vadd.xlane.f32.xlu0 %v4819
    %v4821 = vpop.xlane.xlu0 %4820
    %v4822 = vsel %vm360, %v4674, 0.0
    %4823 = vadd.xlane.f32.xlu0 %v4822
    %v4824 = vpop.xlane.xlu0 %4823
    %v4825 = vsel %vm360, %v4675, 0.0
    %4826 = vadd.xlane.f32.xlu0 %v4825
    %v4827 = vpop.xlane.xlu0 %4826
    %v4828 = vsel %vm360, %v4676, 0.0
    %4829 = vadd.xlane.f32.xlu0 %v4828
    %v4830 = vpop.xlane.xlu0 %4829
    %v4831 = vsel %vm360, %v4677, 0.0
    %4832 = vadd.xlane.f32.xlu0 %v4831
    %v4833 = vpop.xlane.xlu0 %4832
    %v4834 = vsel %vm360, %v4678, 0.0
    %4835 = vadd.xlane.f32.xlu0 %v4834
    %v4836 = vpop.xlane.xlu0 %4835
    %v4837 = vsel %vm360, %v4679, 0.0
    %4838 = vadd.xlane.f32.xlu0 %v4837
    %v4839 = vpop.xlane.xlu0 %4838
    %v4840 = vsel %vm360, %v4680, 0.0
    %4841 = vadd.xlane.f32.xlu0 %v4840
    %v4842 = vpop.xlane.xlu0 %4841
    %v4843 = vsel %vm360, %v4681, 0.0
    %4844 = vadd.xlane.f32.xlu0 %v4843
    %v4845 = vpop.xlane.xlu0 %4844
    %v4846 = vsel %vm360, %v4682, 0.0
    %4847 = vadd.xlane.f32.xlu0 %v4846
    %v4848 = vpop.xlane.xlu0 %4847
    %v4849 = vsel %vm360, %v4683, 0.0
    %4850 = vadd.xlane.f32.xlu0 %v4849
    %v4851 = vpop.xlane.xlu0 %4850
    %v4852 = vsel %vm360, %v4684, 0.0
    %4853 = vadd.xlane.f32.xlu0 %v4852
    %v4854 = vpop.xlane.xlu0 %4853
    %v4855 = vsel %vm360, %v4685, 0.0
    %4856 = vadd.xlane.f32.xlu0 %v4855
    %v4857 = vpop.xlane.xlu0 %4856
    %v4858 = vsel %vm360, %v4686, 0.0
    %4859 = vadd.xlane.f32.xlu0 %v4858
    %v4860 = vpop.xlane.xlu0 %4859
    %v4861 = vsel %vm360, %v4687, 0.0
    %4862 = vadd.xlane.f32.xlu0 %v4861
    %v4863 = vpop.xlane.xlu0 %4862
    %v4864 = vsel %vm360, %v4688, 0.0
    %4865 = vadd.xlane.f32.xlu0 %v4864
    %v4866 = vpop.xlane.xlu0 %4865
    %v4867 = vsel %vm360, %v4689, 0.0
    %4868 = vadd.xlane.f32.xlu0 %v4867
    %v4869 = vpop.xlane.xlu0 %4868
    %v4870 = vsel %vm360, %v4690, 0.0
    %4871 = vadd.xlane.f32.xlu0 %v4870
    %v4872 = vpop.xlane.xlu0 %4871
    %v4873 = vsel %vm360, %v4691, 0.0
    %4874 = vadd.xlane.f32.xlu0 %v4873
    %v4875 = vpop.xlane.xlu0 %4874
    %v4876 = vsel %vm360, %v4692, 0.0
    %4877 = vadd.xlane.f32.xlu0 %v4876
    %v4878 = vpop.xlane.xlu0 %4877
    %v4879 = vsel %vm360, %v4693, 0.0
    %4880 = vadd.xlane.f32.xlu0 %v4879
    %v4881 = vpop.xlane.xlu0 %4880
    %v4882 = vsel %vm360, %v4694, 0.0
    %4883 = vadd.xlane.f32.xlu0 %v4882
    %v4884 = vpop.xlane.xlu0 %4883
    %v4885 = vsel %vm360, %v4695, 0.0
    %4886 = vadd.xlane.f32.xlu0 %v4885
    %v4887 = vpop.xlane.xlu0 %4886
    %v4888 = vsel %vm4105, %v4698, 0.0
    %v4889 = vsel %vm4106, %v4701, 0.0
    %v4890 = vsel %vm4107, %v4704, 0.0
    %v4891 = vsel %vm4108, %v4707, 0.0
    %v4892 = vsel %vm4109, %v4710, 0.0
    %v4893 = vsel %vm4110, %v4713, 0.0
    %v4894 = vsel %vm4111, %v4716, 0.0
    %v4895 = vsel %vm4112, %v4719, 0.0
    %v4896 = vsel %vm4113, %v4722, 0.0
    %v4897 = vsel %vm4114, %v4725, 0.0
    %v4898 = vsel %vm4115, %v4728, 0.0
    %v4899 = vsel %vm4116, %v4731, 0.0
    %v4900 = vsel %vm4117, %v4734, 0.0
    %v4901 = vsel %vm4118, %v4737, 0.0
    %v4902 = vsel %vm4119, %v4740, 0.0
    %v4903 = vsel %vm4120, %v4743, 0.0
    %v4904 = vsel %vm4121, %v4746, 0.0
    %v4905 = vsel %vm4122, %v4749, 0.0
    %v4906 = vsel %vm4123, %v4752, 0.0
    %v4907 = vsel %vm4124, %v4755, 0.0
    %v4908 = vsel %vm4125, %v4758, 0.0
    %v4909 = vsel %vm4126, %v4761, 0.0
    %v4910 = vsel %vm4127, %v4764, 0.0
    %v4911 = vsel %vm4128, %v4767, 0.0
    %v4912 = vsel %vm4129, %v4770, 0.0
    %v4913 = vsel %vm4130, %v4773, 0.0
    %v4914 = vsel %vm4131, %v4776, 0.0
    %v4915 = vsel %vm4132, %v4779, 0.0
    %v4916 = vsel %vm4133, %v4782, 0.0
    %v4917 = vsel %vm4134, %v4785, 0.0
    %v4918 = vsel %vm4135, %v4788, 0.0
    %v4919 = vsel %vm4136, %v4791, 0.0
    %v4920 = vsel %vm4137, %v4794, 0.0
    %v4921 = vsel %vm4138, %v4797, 0.0
    %v4922 = vsel %vm4139, %v4800, 0.0
    %v4923 = vsel %vm4140, %v4803, 0.0
    %v4924 = vsel %vm4141, %v4806, 0.0
    %v4925 = vsel %vm4142, %v4809, 0.0
    %v4926 = vsel %vm4143, %v4812, 0.0
    %v4927 = vsel %vm4144, %v4815, 0.0
    %v4928 = vsel %vm4145, %v4818, 0.0
    %v4929 = vsel %vm4146, %v4821, 0.0
    %v4930 = vsel %vm4147, %v4824, 0.0
    %v4931 = vsel %vm4148, %v4827, 0.0
    %v4932 = vsel %vm4149, %v4830, 0.0
    %v4933 = vsel %vm4150, %v4833, 0.0
    %v4934 = vsel %vm4151, %v4836, 0.0
    %v4935 = vsel %vm4152, %v4839, 0.0
    %v4936 = vsel %vm4153, %v4842, 0.0
    %v4937 = vsel %vm4154, %v4845, 0.0
    %v4938 = vsel %vm4155, %v4848, 0.0
    %v4939 = vsel %vm4156, %v4851, 0.0
    %v4940 = vsel %vm4157, %v4854, 0.0
    %v4941 = vsel %vm4158, %v4857, 0.0
    %v4942 = vsel %vm4159, %v4860, 0.0
    %v4943 = vsel %vm4160, %v4863, 0.0
    %v4944 = vsel %vm4161, %v4866, 0.0
    %v4945 = vsel %vm4162, %v4869, 0.0
    %v4946 = vsel %vm4163, %v4872, 0.0
    %v4947 = vsel %vm4164, %v4875, 0.0
    %v4948 = vsel %vm4165, %v4878, 0.0
    %v4949 = vsel %vm4166, %v4881, 0.0
    %v4950 = vsel %vm4167, %v4884, 0.0
    %v4951 = vsel %vm4168, %v4887, 0.0
    %v4952 = vsel %vm4490, %v4888, 0.0
    %v4953 = vsel %vm4490, %v4889, 0.0
    %v4954 = vadd.f32 %v4952, %v4953
    %v4955 = vsel %vm4490, %v4890, 0.0
    %v4956 = vadd.f32 %v4954, %v4955
    %v4957 = vsel %vm4490, %v4891, 0.0
    %v4958 = vadd.f32 %v4956, %v4957
    %v4959 = vsel %vm4490, %v4892, 0.0
    %v4960 = vadd.f32 %v4958, %v4959
    %v4961 = vsel %vm4490, %v4893, 0.0
    %v4962 = vadd.f32 %v4960, %v4961
    %v4963 = vsel %vm4490, %v4894, 0.0
    %v4964 = vadd.f32 %v4962, %v4963
    %v4965 = vsel %vm4490, %v4895, 0.0
    %v4966 = vadd.f32 %v4964, %v4965
    %v4967 = vsel %vm4490, %v4896, 0.0
    %v4968 = vadd.f32 %v4966, %v4967
    %v4969 = vsel %vm4490, %v4897, 0.0
    %v4970 = vadd.f32 %v4968, %v4969
    %v4971 = vsel %vm4490, %v4898, 0.0
    %v4972 = vadd.f32 %v4970, %v4971
    %v4973 = vsel %vm4490, %v4899, 0.0
    %v4974 = vadd.f32 %v4972, %v4973
    %v4975 = vsel %vm4490, %v4900, 0.0
    %v4976 = vadd.f32 %v4974, %v4975
    %v4977 = vsel %vm4490, %v4901, 0.0
    %v4978 = vadd.f32 %v4976, %v4977
    %v4979 = vsel %vm4490, %v4902, 0.0
    %v4980 = vadd.f32 %v4978, %v4979
    %v4981 = vsel %vm4490, %v4903, 0.0
    %v4982 = vadd.f32 %v4980, %v4981
    %v4983 = vsel %vm4490, %v4904, 0.0
    %v4984 = vadd.f32 %v4982, %v4983
    %v4985 = vsel %vm4490, %v4905, 0.0
    %v4986 = vadd.f32 %v4984, %v4985
    %v4987 = vsel %vm4490, %v4906, 0.0
    %v4988 = vadd.f32 %v4986, %v4987
    %v4989 = vsel %vm4490, %v4907, 0.0
    %v4990 = vadd.f32 %v4988, %v4989
    %v4991 = vsel %vm4490, %v4908, 0.0
    %v4992 = vadd.f32 %v4990, %v4991
    %v4993 = vsel %vm4490, %v4909, 0.0
    %v4994 = vadd.f32 %v4992, %v4993
    %v4995 = vsel %vm4490, %v4910, 0.0
    %v4996 = vadd.f32 %v4994, %v4995
    %v4997 = vsel %vm4490, %v4911, 0.0
    %v4998 = vadd.f32 %v4996, %v4997
    %v4999 = vsel %vm4490, %v4912, 0.0
    %v5000 = vadd.f32 %v4998, %v4999
    %v5001 = vsel %vm4490, %v4913, 0.0
    %v5002 = vadd.f32 %v5000, %v5001
    %v5003 = vsel %vm4490, %v4914, 0.0
    %v5004 = vadd.f32 %v5002, %v5003
    %v5005 = vsel %vm4490, %v4915, 0.0
    %v5006 = vadd.f32 %v5004, %v5005
    %v5007 = vsel %vm4490, %v4916, 0.0
    %v5008 = vadd.f32 %v5006, %v5007
    %v5009 = vsel %vm4490, %v4917, 0.0
    %v5010 = vadd.f32 %v5008, %v5009
    %v5011 = vsel %vm4490, %v4918, 0.0
    %v5012 = vadd.f32 %v5010, %v5011
    %v5013 = vsel %vm4490, %v4919, 0.0
    %v5014 = vadd.f32 %v5012, %v5013
    %v5015 = vsel %vm4490, %v4920, 0.0
    %v5016 = vadd.f32 %v5014, %v5015
    %v5017 = vsel %vm4490, %v4921, 0.0
    %v5018 = vadd.f32 %v5016, %v5017
    %v5019 = vsel %vm4490, %v4922, 0.0
    %v5020 = vadd.f32 %v5018, %v5019
    %v5021 = vsel %vm4490, %v4923, 0.0
    %v5022 = vadd.f32 %v5020, %v5021
    %v5023 = vsel %vm4490, %v4924, 0.0
    %v5024 = vadd.f32 %v5022, %v5023
    %v5025 = vsel %vm4490, %v4925, 0.0
    %v5026 = vadd.f32 %v5024, %v5025
    %v5027 = vsel %vm4490, %v4926, 0.0
    %v5028 = vadd.f32 %v5026, %v5027
    %v5029 = vsel %vm4490, %v4927, 0.0
    %v5030 = vadd.f32 %v5028, %v5029
    %v5031 = vsel %vm4490, %v4928, 0.0
    %v5032 = vadd.f32 %v5030, %v5031
    %v5033 = vsel %vm4490, %v4929, 0.0
    %v5034 = vadd.f32 %v5032, %v5033
    %v5035 = vsel %vm4490, %v4930, 0.0
    %v5036 = vadd.f32 %v5034, %v5035
    %v5037 = vsel %vm4490, %v4931, 0.0
    %v5038 = vadd.f32 %v5036, %v5037
    %v5039 = vsel %vm4490, %v4932, 0.0
    %v5040 = vadd.f32 %v5038, %v5039
    %v5041 = vsel %vm4490, %v4933, 0.0
    %v5042 = vadd.f32 %v5040, %v5041
    %v5043 = vsel %vm4490, %v4934, 0.0
    %v5044 = vadd.f32 %v5042, %v5043
    %v5045 = vsel %vm4490, %v4935, 0.0
    %v5046 = vadd.f32 %v5044, %v5045
    %v5047 = vsel %vm4490, %v4936, 0.0
    %v5048 = vadd.f32 %v5046, %v5047
    %v5049 = vsel %vm4490, %v4937, 0.0
    %v5050 = vadd.f32 %v5048, %v5049
    %v5051 = vsel %vm4490, %v4938, 0.0
    %v5052 = vadd.f32 %v5050, %v5051
    %v5053 = vsel %vm4490, %v4939, 0.0
    %v5054 = vadd.f32 %v5052, %v5053
    %v5055 = vsel %vm4490, %v4940, 0.0
    %v5056 = vadd.f32 %v5054, %v5055
    %v5057 = vsel %vm4490, %v4941, 0.0
    %v5058 = vadd.f32 %v5056, %v5057
    %v5059 = vsel %vm4490, %v4942, 0.0
    %v5060 = vadd.f32 %v5058, %v5059
    %v5061 = vsel %vm4490, %v4943, 0.0
    %v5062 = vadd.f32 %v5060, %v5061
    %v5063 = vsel %vm4490, %v4944, 0.0
    %v5064 = vadd.f32 %v5062, %v5063
    %v5065 = vsel %vm4490, %v4945, 0.0
    %v5066 = vadd.f32 %v5064, %v5065
    %v5067 = vsel %vm4490, %v4946, 0.0
    %v5068 = vadd.f32 %v5066, %v5067
    %v5069 = vsel %vm4490, %v4947, 0.0
    %v5070 = vadd.f32 %v5068, %v5069
    %v5071 = vsel %vm4490, %v4948, 0.0
    %v5072 = vadd.f32 %v5070, %v5071
    %v5073 = vsel %vm4490, %v4949, 0.0
    %v5074 = vadd.f32 %v5072, %v5073
    %v5075 = vsel %vm4490, %v4950, 0.0
    %v5076 = vadd.f32 %v5074, %v5075
    %v5077 = vsel %vm4490, %v4951, 0.0
    %v5078 = vadd.f32 %v5076, %v5077
    %5079 = vadd.xlane.f32.xlu0 %v5078
    %v5080 = vpop.xlane.xlu0 %5079
    %v5081 = vrot.slane %v5080, 4
    %v5082 = vadd.f32 %v5080, %v5081
    %v5083 = vrot.slane %v5082, 2
    %v5084 = vadd.f32 %v5082, %v5083
    %v5085 = vrot.slane %v5084, 1
    %v5086 = vadd.f32 %v5084, %v5085
    %s5087 = vtos %v5086
    %v5088 = vstv %s5087
    %v5089 = vadd.f32 %v4631, %v5088
    %5090 = vst.msk [vmem:[#allocation4] sm:$0x1] %vm4629, %v5089
    // Predicated region
    $region58: #{tpu_custom_call.1} parent=1 // pred_check
      _
    $region59: #{tpu_custom_call.1} parent=1 // pred_check_branch
      %5092 = sbr.rel (0) target = $region61
    $region60: #{tpu_custom_call.1} parent=1 // pred_region
      _
    $region61: #{tpu_custom_call.1} parent=1 // pred_fallthru
      _
    // Predicated region
    $region62: #{tpu_custom_call.1} parent=1 // pred_check
      _
    $region63: #{tpu_custom_call.1} parent=1 // pred_check_branch
      %5094 = sbr.rel (0) target = $region65
    $region64: #{tpu_custom_call.1} parent=1 // pred_region
      %s5096 = ssub.s32 16, 16
      %5097 = vsyncadd [#allocation3], %s5096
      %s5099 = sshll.u32 [#allocation2], 4
      %s5100 = int_to_ptr.vmem [resolvable:$true] %s5099
      %5102 = dma.vmem_to_hbm [thread:$0]  %s5100, 16, %s14, [#allocation3]
    $region65: #{tpu_custom_call.1} parent=1 // pred_fallthru
      _
    // Predicated region
    $region66: #{tpu_custom_call.1} parent=1 // pred_check
      _
    $region67: #{tpu_custom_call.1} parent=1 // pred_check_branch
      %5104 = sbr.rel (0) target = $region69
    $region68: #{tpu_custom_call.1} parent=1 // pred_region
      %s5106 = ssub.s32 16, 16
      %5107 = vsyncadd [#allocation5], %s5106
      %s5109 = sshll.u32 [#allocation4], 4
      %s5110 = int_to_ptr.vmem [resolvable:$true] %s5109
      %5112 = dma.vmem_to_hbm [thread:$0]  %s5110, 16, %s15, [#allocation5]
    $region69: #{tpu_custom_call.1} parent=1 // pred_fallthru
      _
    // Predicated region
    $region70: #{tpu_custom_call.1} parent=1 // pred_check
      _
    $region71: #{tpu_custom_call.1} parent=1 // pred_check_branch
      %5114 = sbr.rel (0) target = $region73
    $region72: #{tpu_custom_call.1} parent=1 // pred_region
      _
    $region73: #{tpu_custom_call.1} parent=1 // pred_fallthru
      _
    // Predicated region
    $region74: #{tpu_custom_call.1} parent=1 // pred_check
      _
    $region75: #{tpu_custom_call.1} parent=1 // pred_check_branch
      %5116 = sbr.rel (0) target = $region77
    $region76: #{tpu_custom_call.1} parent=1 // pred_region
      %5117 = dma.done [#allocation3], 16
    $region77: #{tpu_custom_call.1} parent=1 // pred_fallthru
      _
    // Predicated region
    $region78: #{tpu_custom_call.1} parent=1 // pred_check
      _
    $region79: #{tpu_custom_call.1} parent=1 // pred_check_branch
      %5119 = sbr.rel (0) target = $region81
    $region80: #{tpu_custom_call.1} parent=1 // pred_region
      %5120 = dma.done [#allocation5], 16
    $region81: #{tpu_custom_call.1} parent=1 // pred_fallthru
      _
    %5121 = vsyncpa [#allocation3], 1
    %5122 = vsyncpa [#allocation5], 1

</llo_original>
